<compile_context>
chip_gen: v7x
topology: tpu7x:2x2x1
jax: 0.10.0
libtpu: 0.0.40
codegen_flags: <defaults>
</compile_context>

<pallas_src>
import numpy as np
import jax
import jax.numpy as jnp
from jax import lax
from jax.experimental import pallas as pl
from jax.experimental.pallas import tpu as pltpu

HIGHEST = lax.Precision.HIGHEST


# ----------------------------------------------------------------------------
# Fused 2-layer LSTM kernel.
# Grid = (batch tiles [parallel], time chunks [arbitrary/sequential]).
# ----------------------------------------------------------------------------
def _fused_lstm2_kernel(lens_ref, x_ref, wih1_ref, whh1_ref, b1_ref, w2_ref,
                        b2_ref, y_ref, hN_ref, cN_ref,
                        gx1_sc, h1_sc, c1_sc, h2_sc, c2_sc):
    chunk = pl.program_id(1)
    n_chunks = pl.num_programs(1)
    t_chunk, b_tile, E = x_ref.shape
    H = h1_sc.shape[1]
    four_h = 4 * H
    w_dtype = whh1_ref.dtype      # MXU operand dtype (bf16 prod / f32 test)

    @pl.when(chunk == 0)          # re-init state per batch tile (chunk resets)
    def _init():
        h1_sc[...] = jnp.zeros_like(h1_sc)
        c1_sc[...] = jnp.zeros_like(c1_sc)
        h2_sc[...] = jnp.zeros_like(h2_sc)
        c2_sc[...] = jnp.zeros_like(c2_sc)

    lens = lens_ref[...]          # (b_tile, 1) int32, resident
    whh1 = whh1_ref[...]          # (H, 4H)  w_dtype
    w2 = w2_ref[...]              # (2H, 4H) w_dtype == [W_ih2^T ; W_hh2^T]
    t0 = chunk * t_chunk

    # Loop-invariant constants hoisted out of the recurrence (JAX does not CSE
    # broadcast_in_dim inside the unrolled loop body).
    b2b = jnp.broadcast_to(b2_ref[...], (b_tile, four_h)).astype(jnp.float32)
    lane = lax.broadcasted_iota(jnp.int32, (b_tile, four_h), 1)
    is_g = (lane >= 2 * H) & (lane < 3 * H)       # PyTorch gate order i,f,g,o
    gate_mul = jnp.where(is_g, 1.0, 0.5).astype(jnp.float32)
    gate_add = jnp.where(is_g, 0.0, 0.5).astype(jnp.float32)

    # ---- layer-1 input projection for the whole chunk: one batched GEMM
    # (t_chunk*b_tile, E) @ (E, 4H) + b1, kept in VMEM scratch (no HBM trip).
    xm = x_ref[...].reshape(t_chunk * b_tile, E).astype(w_dtype)
    gx = jnp.dot(xm, wih1_ref[...], preferred_element_type=jnp.float32)
    gx1_sc[...] = gx + b1_ref[...]

    def lstm_cell(gates, c_prev):
        # sigmoid(x) = 0.5*tanh(0.5*x)+0.5  ->  ONE full-tile tanh covers the
        # i/f/o sigmoids and the g tanh (lane mask picks the scaling).
        act = jnp.tanh(gates * gate_mul) * gate_mul + gate_add
        i_g = act[:, 0 * H:1 * H]
        f_g = act[:, 1 * H:2 * H]
        g_g = act[:, 2 * H:3 * H]
        o_g = act[:, 3 * H:4 * H]
        c_new = f_g * c_prev + i_g * g_g
        h_new = o_g * jnp.tanh(c_new)
        return h_new, c_new

    def step(s, carry):
        h1, c1, h2, c2 = carry
        # packed-sequence validity from lengths (bool mask, where-based blends)
        valid = (t0 + s) < lens                               # (b_tile, 1)
        validb = jnp.broadcast_to(valid, (b_tile, H))         # one bcast/step

        # ---- layer 1: x-projection precomputed; only h @ W_hh1^T in the chain
        base = pl.multiple_of(s * b_tile, b_tile)
        g1 = gx1_sc[pl.ds(base, b_tile), :] + jnp.dot(
            h1.astype(w_dtype), whh1, preferred_element_type=jnp.float32)
        h1n, c1n = lstm_cell(g1, c1)
        h1 = jnp.where(validb, h1n, h1)
        c1 = jnp.where(validb, c1n, c1)
        x2 = jnp.where(validb, h1n, 0.0)                      # packed l1 output

        # ---- layer 2: single fused matmul over concat([x2, h2])  (2H contract)
        x2h2 = jnp.concatenate([x2, h2], axis=1).astype(w_dtype)   # (b_tile, 2H)
        g2 = jnp.dot(x2h2, w2, preferred_element_type=jnp.float32) + b2b
        h2n, c2n = lstm_cell(g2, c2)
        h2 = jnp.where(validb, h2n, h2)
        c2 = jnp.where(validb, c2n, c2)

        # pad_packed_sequence zero-fills beyond each sequence's length
        y_ref[s] = jnp.where(validb, h2n, 0.0)
        return h1, c1, h2, c2

    carry0 = (h1_sc[...], c1_sc[...], h2_sc[...], c2_sc[...])
    h1, c1, h2, c2 = lax.fori_loop(0, t_chunk, step, carry0,
                                   unroll=min(t_chunk, 8))   # capped unroll

    h1_sc[...] = h1
    c1_sc[...] = c1
    h2_sc[...] = h2
    c2_sc[...] = c2

    # final (h_n, c_n): written once per batch tile, on its last time chunk
    @pl.when(chunk == n_chunks - 1)
    def _finalize():
        hN_ref[0] = h1
        hN_ref[1] = h2
        cN_ref[0] = c1
        cN_ref[1] = c2


def fused_lstm2_pallas(x_tbe, lens, layer1, layer2, *, t_chunk=32, b_tile=None,
                       mxu_dtype=jnp.bfloat16):
    """x_tbe: (T, B, E) f32, T % t_chunk == 0, B % 8 == 0. lens: (B,) int32.
    Returns y (T, B, H) f32, h_n (2, B, H) f32, c_n (2, B, H) f32."""
    T, B, E = x_tbe.shape
    H = layer1["w_hh"].shape[1]
    assert T % t_chunk == 0 and B % 8 == 0
    if b_tile is None:
        b_tile = B
    assert B % b_tile == 0 and b_tile % 8 == 0

    # Weights pre-transposed; MXU operands in mxu_dtype, biases stay f32.
    wih1_T = layer1["w_ih"].T.astype(mxu_dtype)                      # (E, 4H)
    whh1_T = layer1["w_hh"].T.astype(mxu_dtype)                      # (H, 4H)
    b1 = (layer1["b_ih"] + layer1["b_hh"]).reshape(1, 4 * H).astype(jnp.float32)
    w2 = jnp.concatenate([layer2["w_ih"].T, layer2["w_hh"].T],
                         axis=0).astype(mxu_dtype)                   # (2H, 4H)
    b2 = (layer2["b_ih"] + layer2["b_hh"]).reshape(1, 4 * H).astype(jnp.float32)
    lens2d = lens.reshape(B, 1).astype(jnp.int32)
    x = x_tbe.astype(jnp.float32)

    n_chunks = T // t_chunk
    n_btiles = B // b_tile

    y, hN, cN = pl.pallas_call(
        _fused_lstm2_kernel,
        out_shape=(
            jax.ShapeDtypeStruct((T, B, H), jnp.float32),
            jax.ShapeDtypeStruct((2, B, H), jnp.float32),
            jax.ShapeDtypeStruct((2, B, H), jnp.float32),
        ),
        grid_spec=pltpu.PrefetchScalarGridSpec(
            num_scalar_prefetch=0,
            grid=(n_btiles, n_chunks),
            in_specs=[
                pl.BlockSpec((b_tile, 1), lambda b, c: (b, 0)),            # lens
                pl.BlockSpec((t_chunk, b_tile, E), lambda b, c: (c, b, 0)),# x chunk
                pl.BlockSpec((E, 4 * H), lambda b, c: (0, 0)),             # W_ih1^T
                pl.BlockSpec((H, 4 * H), lambda b, c: (0, 0)),             # W_hh1^T
                pl.BlockSpec((1, 4 * H), lambda b, c: (0, 0)),             # b1
                pl.BlockSpec((2 * H, 4 * H), lambda b, c: (0, 0)),         # w2 fused
                pl.BlockSpec((1, 4 * H), lambda b, c: (0, 0)),             # b2
            ],
            out_specs=[
                pl.BlockSpec((t_chunk, b_tile, H), lambda b, c: (c, b, 0)),# y chunk
                pl.BlockSpec((2, b_tile, H), lambda b, c: (0, b, 0)),      # h_n
                pl.BlockSpec((2, b_tile, H), lambda b, c: (0, b, 0)),      # c_n
            ],
            scratch_shapes=[
                pltpu.VMEM((t_chunk * b_tile, 4 * H), jnp.float32),  # gx1 chunk
                pltpu.VMEM((b_tile, H), jnp.float32),                # h1
                pltpu.VMEM((b_tile, H), jnp.float32),                # c1
                pltpu.VMEM((b_tile, H), jnp.float32),                # h2
                pltpu.VMEM((b_tile, H), jnp.float32),                # c2
            ],
        ),
        compiler_params=pltpu.CompilerParams(
            # batch tiles can split across TensorCores (v7x); time is serial
            dimension_semantics=("parallel", "arbitrary"),
            # raise above the default scoped limit; fits v7x's 64 MiB physical,
            # can be raised further on v5e/v6e (128 MiB) for larger t_chunk/H.
            vmem_limit_bytes=64 * 1024 * 1024,
        ),
    )(lens2d, x, wih1_T, whh1_T, b1, w2, b2)
    return y, hN, cN


# ----------------------------------------------------------------------------
# Encoder forward (embedding / padding glue in XLA, recurrence in Pallas)
# ----------------------------------------------------------------------------
def encoder_forward(params, xs, input_lens, *, t_chunk=32,
                    mxu_dtype=jnp.bfloat16):
    """
    xs:         (B, T) int32 token ids (padding_idx = 0)
    input_lens: (B,)   lengths, sorted descending (pack_padded_sequence default)
    Returns (encoder_output (B, T_max, H), (h_n (2, B, H), c_n (2, B, H))).
    """
    assert len(params["layers"]) == 2, "fused kernel implements num_layers=2"
    B, T = xs.shape

    emb = params["emb"][xs].astype(jnp.float32)        # (B, T, E) gather (XLA)
    # TODO(synk): nn.Dropout(p=0.1) is stochastic in train mode; eval-mode
    # identity is used here (incl. the inter-layer LSTM dropout).
    x = jnp.transpose(emb, (1, 0, 2))                  # (T, B, E)

    # Pad batch to a sublane multiple (8) and time to the chunk size.
    # Padded rows get len = 0 so they never update state and stay zero.
    B_pad = -(-B // 8) * 8
    T_pad = -(-T // t_chunk) * t_chunk
    x = jnp.pad(x, ((0, T_pad - T), (0, B_pad - B), (0, 0)))
    lens_pad = jnp.pad(jnp.asarray(input_lens, jnp.int32), (0, B_pad - B))

    y, hN, cN = fused_lstm2_pallas(x, lens_pad, params["layers"][0],
                                   params["layers"][1], t_chunk=t_chunk,
                                   mxu_dtype=mxu_dtype)

    y = y[:, :B, :]                                    # (T_pad, B, H)
    h_n = hN[:, :B, :]
    c_n = cN[:, :B, :]

    # pad_packed_sequence(batch_first=True) pads to max(input_lens). Like the
    # PyTorch API, lengths are host-visible here (not valid under jit tracing).
    t_max = int(np.max(np.asarray(input_lens)))
    encoder_output = jnp.transpose(y, (1, 0, 2))[:, :t_max, :]
    return encoder_output, (h_n, c_n)


# ----------------------------------------------------------------------------
# Pure-JAX reference (same math, no Pallas) for the sanity check. The
# `mxu_dtype` argument rounds matmul operands the same way the kernel does
# (f32 accumulation in both), so the bf16 path can also be checked tightly.
# ----------------------------------------------------------------------------
def encoder_forward_ref(params, xs, input_lens, mxu_dtype=jnp.float32):
    B, T = xs.shape
    emb = params["emb"][xs].astype(jnp.float32)
    x = jnp.transpose(emb, (1, 0, 2))
    mask = (jnp.arange(T)[:, None] < jnp.asarray(input_lens)[None, :]
            ).astype(jnp.float32)[:, :, None]

    def mdot(a, b):
        return jnp.dot(a.astype(mxu_dtype), b.astype(mxu_dtype),
                       preferred_element_type=jnp.float32, precision=HIGHEST)

    h_list, c_list = [], []
    layer_in = x
    for lp in params["layers"]:
        H = lp["w_hh"].shape[1]
        wih_T, whh_T = lp["w_ih"].T, lp["w_hh"].T
        bias = (lp["b_ih"] + lp["b_hh"]).astype(jnp.float32)
        h = jnp.zeros((B, H), jnp.float32)
        c = jnp.zeros((B, H), jnp.float32)
        ys = []
        for t in range(T):
            g = mdot(layer_in[t], wih_T) + mdot(h, whh_T) + bias
            i_g = 1.0 / (1.0 + jnp.exp(-g[:, 0 * H:1 * H]))
            f_g = 1.0 / (1.0 + jnp.exp(-g[:, 1 * H:2 * H]))
            g_g = jnp.tanh(g[:, 2 * H:3 * H])
            o_g = 1.0 / (1.0 + jnp.exp(-g[:, 3 * H:4 * H]))
            c_new = f_g * c + i_g * g_g
            h_new = o_g * jnp.tanh(c_new)
            m = mask[t]
            h = m * h_new + (1.0 - m) * h
            c = m * c_new + (1.0 - m) * c
            ys.append(m * h_new)
        h_list.append(h)
        c_list.append(c)
        layer_in = jnp.stack(ys, axis=0)
    t_max = int(np.max(np.asarray(input_lens)))
    out = jnp.transpose(layer_in, (1, 0, 2))[:, :t_max, :]
    return out, (jnp.stack(h_list), jnp.stack(c_list))


# ----------------------------------------------------------------------------
# Deterministic parameter init (shapes follow Encoder.__init__)
# ----------------------------------------------------------------------------
def init_params(key, num_features, emb_size, hidden_size, num_layers,
                padding_idx=0):
    keys = jax.random.split(key, 1 + 4 * num_layers)
    emb = jax.random.normal(keys[0], (num_features, emb_size), jnp.float32)
    emb = emb.at[padding_idx].set(0.0)                 # padding_idx row zeroed

    stdv = 1.0 / np.sqrt(hidden_size)
    layers = []
    for l in range(num_layers):
        in_size = emb_size if l == 0 else hidden_size
        k0, k1, k2, k3 = keys[1 + 4 * l: 1 + 4 * (l + 1)]
        layers.append({
            "w_ih": jax.random.uniform(k0, (4 * hidden_size, in_size),
                                       jnp.float32, -stdv, stdv),
            "w_hh": jax.random.uniform(k1, (4 * hidden_size, hidden_size),
                                       jnp.float32, -stdv, stdv),
            "b_ih": jax.random.uniform(k2, (4 * hidden_size,),
                                       jnp.float32, -stdv, stdv),
            "b_hh": jax.random.uniform(k3, (4 * hidden_size,),
                                       jnp.float32, -stdv, stdv),
        })
    return {"emb": emb, "layers": layers}


if __name__ == "__main__":
    # Module defaults: emb_size=128, hidden_size=128, num_layers=2 (lane-aligned)
    num_features = 50
    emb_size = 128
    hidden_size = 128
    num_layers = 2
    B, T = 2, 16
    t_chunk = 8                    # 2 time chunks -> exercises the state carry

    key = jax.random.PRNGKey(0)
    pkey, xkey = jax.random.split(key)
    params = init_params(pkey, num_features, emb_size, hidden_size, num_layers)

    # Token ids (>=1 at valid positions, padding_idx=0 elsewhere); lengths
    # sorted descending as pack_padded_sequence expects.
    input_lens = jnp.array([16, 11], dtype=jnp.int32)
    ids = jax.random.randint(xkey, (B, T), 1, num_features, dtype=jnp.int32)
    xs = jnp.where(jnp.arange(T)[None, :] < input_lens[:, None], ids, 0)

    # --- f32 MXU-operand path: tight check against the f32 reference ---------
    out32, (h32, c32) = encoder_forward(params, xs, input_lens,
                                        t_chunk=t_chunk,
                                        mxu_dtype=jnp.float32)
    jax.block_until_ready((out32, h32, c32))
    ref32, (rh32, rc32) = encoder_forward_ref(params, xs, input_lens,
                                              mxu_dtype=jnp.float32)
    np.testing.assert_allclose(np.asarray(out32), np.asarray(ref32),
                               atol=1e-3, rtol=1e-3)
    np.testing.assert_allclose(np.asarray(h32), np.asarray(rh32),
                               atol=1e-3, rtol=1e-3)
    np.testing.assert_allclose(np.asarray(c32), np.asarray(rc32),
                               atol=1e-3, rtol=1e-3)

    # --- bf16 MXU-operand path (production default): check against a
    #     reference that rounds matmul operands identically ---------------------
    outbf, (hbf, cbf) = encoder_forward(params, xs, input_lens,
                                        t_chunk=t_chunk,
                                        mxu_dtype=jnp.bfloat16)
    jax.block_until_ready((outbf, hbf, cbf))
    refbf, (rhbf, rcbf) = encoder_forward_ref(params, xs, input_lens,
                                              mxu_dtype=jnp.bfloat16)
    np.testing.assert_allclose(np.asarray(outbf), np.asarray(refbf),
                               atol=5e-3, rtol=5e-3)
    np.testing.assert_allclose(np.asarray(hbf), np.asarray(rhbf),
                               atol=5e-3, rtol=5e-3)
    np.testing.assert_allclose(np.asarray(cbf), np.asarray(rcbf),
                               atol=5e-3, rtol=5e-3)

    print("KERNEL_OK")
</pallas_src>

<mosaic_0001>
module attributes {stable_mosaic.version = 11 : i64} {
  func.func @_fused_lstm2_kernel(%arg0: i32, %arg1: i32, %arg2: memref<8x1xi32, #tpu.memory_space<vmem>>, %arg3: memref<8x8x128xf32, #tpu.memory_space<vmem>>, %arg4: memref<128x512xf32, #tpu.memory_space<vmem>>, %arg5: memref<128x512xf32, #tpu.memory_space<vmem>>, %arg6: memref<1x512xf32, #tpu.memory_space<vmem>>, %arg7: memref<256x512xf32, #tpu.memory_space<vmem>>, %arg8: memref<1x512xf32, #tpu.memory_space<vmem>>, %arg9: memref<8x8x128xf32, #tpu.memory_space<vmem>>, %arg10: memref<2x8x128xf32, #tpu.memory_space<vmem>>, %arg11: memref<2x8x128xf32, #tpu.memory_space<vmem>>, %arg12: memref<64x512xf32, #tpu.memory_space<vmem>>, %arg13: memref<8x128xf32, #tpu.memory_space<vmem>>, %arg14: memref<8x128xf32, #tpu.memory_space<vmem>>, %arg15: memref<8x128xf32, #tpu.memory_space<vmem>>, %arg16: memref<8x128xf32, #tpu.memory_space<vmem>>) attributes {dimension_semantics = [#tpu.dimension_semantics<parallel>, #tpu.dimension_semantics<arbitrary>], iteration_bounds = array<i64: 1, 2>, scalar_prefetch = 0 : i64, scratch_operands = 5 : i64, tpu.core_type = #tpu.core_type<tc>, window_params = [{transform_indices = @transform_0, window_bounds = array<i64: 8, 1>}, {transform_indices = @transform_1, window_bounds = array<i64: 8, 8, 128>}, {pipeline_mode = #tpu.pipeline_mode<synchronous>, transform_indices = @transform_2, window_bounds = array<i64: 128, 512>}, {pipeline_mode = #tpu.pipeline_mode<synchronous>, transform_indices = @transform_3, window_bounds = array<i64: 128, 512>}, {pipeline_mode = #tpu.pipeline_mode<synchronous>, transform_indices = @transform_4, window_bounds = array<i64: 1, 512>}, {pipeline_mode = #tpu.pipeline_mode<synchronous>, transform_indices = @transform_5, window_bounds = array<i64: 256, 512>}, {pipeline_mode = #tpu.pipeline_mode<synchronous>, transform_indices = @transform_6, window_bounds = array<i64: 1, 512>}, {transform_indices = @transform_7, window_bounds = array<i64: 8, 8, 128>}, {transform_indices = @transform_8, window_bounds = array<i64: 2, 8, 128>}, {transform_indices = @transform_9, window_bounds = array<i64: 2, 8, 128>}]} {
    %c0_i32 = arith.constant 0 : i32
    %0 = arith.cmpi eq, %arg1, %c0_i32 : i32
    %1 = arith.extui %0 : i1 to i32
    %c0_i32_0 = arith.constant 0 : i32
    %2 = arith.cmpi ne, %1, %c0_i32_0 : i32
    scf.if %2 {
      %cst_105 = arith.constant 0.000000e+00 : f32
      %457 = vector.broadcast %cst_105 : f32 to vector<8x128xf32>
      %c0_106 = arith.constant 0 : index
      %c0_107 = arith.constant 0 : index
      %458 = vector.load %arg13[%c0_106, %c0_107] : memref<8x128xf32, #tpu.memory_space<vmem>>, vector<8x128xf32>
      tpu.vector_store %arg13[%c0_106, %c0_107], %457 {strides = array<i32>} : memref<8x128xf32, #tpu.memory_space<vmem>>, vector<8x128xf32>,
      %cst_108 = arith.constant 0.000000e+00 : f32
      %459 = vector.broadcast %cst_108 : f32 to vector<8x128xf32>
      %c0_109 = arith.constant 0 : index
      %c0_110 = arith.constant 0 : index
      %460 = vector.load %arg14[%c0_109, %c0_110] : memref<8x128xf32, #tpu.memory_space<vmem>>, vector<8x128xf32>
      tpu.vector_store %arg14[%c0_109, %c0_110], %459 {strides = array<i32>} : memref<8x128xf32, #tpu.memory_space<vmem>>, vector<8x128xf32>,
      %cst_111 = arith.constant 0.000000e+00 : f32
      %461 = vector.broadcast %cst_111 : f32 to vector<8x128xf32>
      %c0_112 = arith.constant 0 : index
      %c0_113 = arith.constant 0 : index
      %462 = vector.load %arg15[%c0_112, %c0_113] : memref<8x128xf32, #tpu.memory_space<vmem>>, vector<8x128xf32>
      tpu.vector_store %arg15[%c0_112, %c0_113], %461 {strides = array<i32>} : memref<8x128xf32, #tpu.memory_space<vmem>>, vector<8x128xf32>,
      %cst_114 = arith.constant 0.000000e+00 : f32
      %463 = vector.broadcast %cst_114 : f32 to vector<8x128xf32>
      %c0_115 = arith.constant 0 : index
      %c0_116 = arith.constant 0 : index
      %464 = vector.load %arg16[%c0_115, %c0_116] : memref<8x128xf32, #tpu.memory_space<vmem>>, vector<8x128xf32>
      tpu.vector_store %arg16[%c0_115, %c0_116], %463 {strides = array<i32>} : memref<8x128xf32, #tpu.memory_space<vmem>>, vector<8x128xf32>,
    } else {
    }
    %c0 = arith.constant 0 : index
    %c0_1 = arith.constant 0 : index
    %3 = vector.load %arg2[%c0, %c0_1] : memref<8x1xi32, #tpu.memory_space<vmem>>, vector<8x1xi32>
    %c0_2 = arith.constant 0 : index
    %c0_3 = arith.constant 0 : index
    %4 = vector.load %arg5[%c0_2, %c0_3] : memref<128x512xf32, #tpu.memory_space<vmem>>, vector<128x512xf32>
    %c0_4 = arith.constant 0 : index
    %c0_5 = arith.constant 0 : index
    %5 = vector.load %arg7[%c0_4, %c0_5] : memref<256x512xf32, #tpu.memory_space<vmem>>, vector<256x512xf32>
    %c8_i32 = arith.constant 8 : i32
    %6 = arith.muli %arg1, %c8_i32 : i32
    %c0_6 = arith.constant 0 : index
    %c0_7 = arith.constant 0 : index
    %7 = vector.load %arg8[%c0_6, %c0_7] : memref<1x512xf32, #tpu.memory_space<vmem>>, vector<1x512xf32>
    %8 = vector.shape_cast %7 : vector<1x512xf32> to vector<1x512xf32>
    %9 = vector.broadcast %8 : vector<1x512xf32> to vector<8x512xf32>
    %10 = tpu.iota {dimensions = array<i32: 1>} : vector<8x512xi32>
    %c256_i32 = arith.constant 256 : i32
    %11 = vector.broadcast %c256_i32 : i32 to vector<8x512xi32>
    %12 = arith.cmpi sge, %10, %11 : vector<8x512xi32>
    %c384_i32 = arith.constant 384 : i32
    %13 = vector.broadcast %c384_i32 : i32 to vector<8x512xi32>
    %14 = arith.cmpi slt, %10, %13 : vector<8x512xi32>
    %15 = arith.andi %12, %14 : vector<8x512xi1>
    %cst = arith.constant 1.000000e+00 : f32
    %cst_8 = arith.constant 5.000000e-01 : f32
    %16 = vector.broadcast %cst : f32 to vector<8x512xf32>
    %17 = vector.broadcast %cst_8 : f32 to vector<8x512xf32>
    %18 = arith.select %15, %16, %17 : vector<8x512xi1>, vector<8x512xf32>
    %cst_9 = arith.constant 0.000000e+00 : f32
    %cst_10 = arith.constant 5.000000e-01 : f32
    %19 = vector.broadcast %cst_9 : f32 to vector<8x512xf32>
    %20 = vector.broadcast %cst_10 : f32 to vector<8x512xf32>
    %21 = arith.select %15, %19, %20 : vector<8x512xi1>, vector<8x512xf32>
    %c0_11 = arith.constant 0 : index
    %c0_12 = arith.constant 0 : index
    %c0_13 = arith.constant 0 : index
    %22 = vector.load %arg3[%c0_11, %c0_12, %c0_13] : memref<8x8x128xf32, #tpu.memory_space<vmem>>, vector<8x8x128xf32>
    %23 = vector.shape_cast %22 : vector<8x8x128xf32> to vector<64x128xf32>
    %c0_14 = arith.constant 0 : index
    %c0_15 = arith.constant 0 : index
    %24 = vector.load %arg4[%c0_14, %c0_15] : memref<128x512xf32, #tpu.memory_space<vmem>>, vector<128x512xf32>
    %cst_16 = arith.constant dense<0.000000e+00> : vector<64x512xf32>
    %25 = tpu.matmul %23, %24, %cst_16 {dimension_numbers = #tpu.dot_dimension_numbers<[1], [0], [0], [1], [0, 0, 1, 1], [], []>} : vector<64x128xf32>, vector<128x512xf32>, vector<64x512xf32> -> vector<64x512xf32>
    %c0_17 = arith.constant 0 : index
    %c0_18 = arith.constant 0 : index
    %26 = vector.load %arg6[%c0_17, %c0_18] : memref<1x512xf32, #tpu.memory_space<vmem>>, vector<1x512xf32>
    %27 = vector.broadcast %26 : vector<1x512xf32> to vector<64x512xf32>
    %28 = arith.addf %25, %27 : vector<64x512xf32>
    %c0_19 = arith.constant 0 : index
    %c0_20 = arith.constant 0 : index
    %29 = vector.load %arg12[%c0_19, %c0_20] : memref<64x512xf32, #tpu.memory_space<vmem>>, vector<64x512xf32>
    tpu.vector_store %arg12[%c0_19, %c0_20], %28 {strides = array<i32>} : memref<64x512xf32, #tpu.memory_space<vmem>>, vector<64x512xf32>,
    %c0_21 = arith.constant 0 : index
    %c0_22 = arith.constant 0 : index
    %30 = vector.load %arg13[%c0_21, %c0_22] : memref<8x128xf32, #tpu.memory_space<vmem>>, vector<8x128xf32>
    %c0_23 = arith.constant 0 : index
    %c0_24 = arith.constant 0 : index
    %31 = vector.load %arg14[%c0_23, %c0_24] : memref<8x128xf32, #tpu.memory_space<vmem>>, vector<8x128xf32>
    %c0_25 = arith.constant 0 : index
    %c0_26 = arith.constant 0 : index
    %32 = vector.load %arg15[%c0_25, %c0_26] : memref<8x128xf32, #tpu.memory_space<vmem>>, vector<8x128xf32>
    %c0_27 = arith.constant 0 : index
    %c0_28 = arith.constant 0 : index
    %33 = vector.load %arg16[%c0_27, %c0_28] : memref<8x128xf32, #tpu.memory_space<vmem>>, vector<8x128xf32>
    %c0_i32_29 = arith.constant 0 : i32
    %34 = arith.addi %6, %c0_i32_29 : i32
    %35 = vector.broadcast %34 : i32 to vector<8x1xi32>
    %36 = arith.cmpi slt, %35, %3 : vector<8x1xi32>
    %37 = vector.shape_cast %36 : vector<8x1xi1> to vector<8x1xi1>
    %38 = vector.broadcast %37 : vector<8x1xi1> to vector<8x128xi1>
    %c8_i32_30 = arith.constant 8 : i32
    %39 = arith.muli %c0_i32_29, %c8_i32_30 : i32
    %40 = tpu.assume_multiple %39, 8 : i32
    %41 = arith.index_cast %40 : i32 to index
    %c0_31 = arith.constant 0 : index
    %42 = vector.load %arg12[%41, %c0_31] : memref<64x512xf32, #tpu.memory_space<vmem>>, vector<8x512xf32>
    %cst_32 = arith.constant dense<0.000000e+00> : vector<8x512xf32>
    %43 = tpu.matmul %30, %4, %cst_32 {dimension_numbers = #tpu.dot_dimension_numbers<[1], [0], [0], [1], [0, 0, 1, 1], [], []>} : vector<8x128xf32>, vector<128x512xf32>, vector<8x512xf32> -> vector<8x512xf32>
    %44 = arith.addf %42, %43 : vector<8x512xf32>
    %45 = arith.mulf %44, %18 : vector<8x512xf32>
    %46 = math.tanh %45 : vector<8x512xf32>
    %47 = arith.mulf %46, %18 : vector<8x512xf32>
    %48 = arith.addf %47, %21 : vector<8x512xf32>
    %49 = vector.extract_strided_slice %48 {offsets = [0, 0], sizes = [8, 128], strides = [1, 1]} : vector<8x512xf32> to vector<8x128xf32>
    %50 = vector.extract_strided_slice %48 {offsets = [0, 128], sizes = [8, 128], strides = [1, 1]} : vector<8x512xf32> to vector<8x128xf32>
    %51 = vector.extract_strided_slice %48 {offsets = [0, 256], sizes = [8, 128], strides = [1, 1]} : vector<8x512xf32> to vector<8x128xf32>
    %52 = vector.extract_strided_slice %48 {offsets = [0, 384], sizes = [8, 128], strides = [1, 1]} : vector<8x512xf32> to vector<8x128xf32>
    %53 = arith.mulf %50, %31 : vector<8x128xf32>
    %54 = arith.mulf %49, %51 : vector<8x128xf32>
    %55 = arith.addf %53, %54 : vector<8x128xf32>
    %56 = math.tanh %55 : vector<8x128xf32>
    %57 = arith.mulf %52, %56 : vector<8x128xf32>
    %58 = arith.select %38, %57, %30 : vector<8x128xi1>, vector<8x128xf32>
    %59 = arith.select %38, %55, %31 : vector<8x128xi1>, vector<8x128xf32>
    %cst_33 = arith.constant 0.000000e+00 : f32
    %60 = vector.broadcast %cst_33 : f32 to vector<8x128xf32>
    %61 = arith.select %38, %57, %60 : vector<8x128xi1>, vector<8x128xf32>
    %62 = tpu.concatenate %61, %32 in 1 : vector<8x128xf32>, vector<8x128xf32> -> vector<8x256xf32>
    %cst_34 = arith.constant dense<0.000000e+00> : vector<8x512xf32>
    %63 = tpu.matmul %62, %5, %cst_34 {dimension_numbers = #tpu.dot_dimension_numbers<[1], [0], [0], [1], [0, 0, 1, 1], [], []>} : vector<8x256xf32>, vector<256x512xf32>, vector<8x512xf32> -> vector<8x512xf32>
    %64 = arith.addf %63, %9 : vector<8x512xf32>
    %65 = arith.mulf %64, %18 : vector<8x512xf32>
    %66 = math.tanh %65 : vector<8x512xf32>
    %67 = arith.mulf %66, %18 : vector<8x512xf32>
    %68 = arith.addf %67, %21 : vector<8x512xf32>
    %69 = vector.extract_strided_slice %68 {offsets = [0, 0], sizes = [8, 128], strides = [1, 1]} : vector<8x512xf32> to vector<8x128xf32>
    %70 = vector.extract_strided_slice %68 {offsets = [0, 128], sizes = [8, 128], strides = [1, 1]} : vector<8x512xf32> to vector<8x128xf32>
    %71 = vector.extract_strided_slice %68 {offsets = [0, 256], sizes = [8, 128], strides = [1, 1]} : vector<8x512xf32> to vector<8x128xf32>
    %72 = vector.extract_strided_slice %68 {offsets = [0, 384], sizes = [8, 128], strides = [1, 1]} : vector<8x512xf32> to vector<8x128xf32>
    %73 = arith.mulf %70, %33 : vector<8x128xf32>
    %74 = arith.mulf %69, %71 : vector<8x128xf32>
    %75 = arith.addf %73, %74 : vector<8x128xf32>
    %76 = math.tanh %75 : vector<8x128xf32>
    %77 = arith.mulf %72, %76 : vector<8x128xf32>
    %78 = arith.select %38, %77, %32 : vector<8x128xi1>, vector<8x128xf32>
    %79 = arith.select %38, %75, %33 : vector<8x128xi1>, vector<8x128xf32>
    %cst_35 = arith.constant 0.000000e+00 : f32
    %80 = vector.broadcast %cst_35 : f32 to vector<8x128xf32>
    %81 = arith.select %38, %77, %80 : vector<8x128xi1>, vector<8x128xf32>
    %82 = arith.index_cast %c0_i32_29 : i32 to index
    %c0_36 = arith.constant 0 : index
    %c0_37 = arith.constant 0 : index
    %83 = vector.load %arg9[%82, %c0_36, %c0_37] : memref<8x8x128xf32, #tpu.memory_space<vmem>>, vector<1x8x128xf32>
    %84 = vector.shape_cast %83 : vector<1x8x128xf32> to vector<8x128xf32>
    %85 = vector.shape_cast %81 : vector<8x128xf32> to vector<1x8x128xf32>
    tpu.vector_store %arg9[%82, %c0_36, %c0_37], %85 {strides = array<i32>} : memref<8x8x128xf32, #tpu.memory_space<vmem>>, vector<1x8x128xf32>,
    %c1_i32 = arith.constant 1 : i32
    %86 = arith.addi %6, %c1_i32 : i32
    %87 = vector.broadcast %86 : i32 to vector<8x1xi32>
    %88 = arith.cmpi slt, %87, %3 : vector<8x1xi32>
    %89 = vector.shape_cast %88 : vector<8x1xi1> to vector<8x1xi1>
    %90 = vector.broadcast %89 : vector<8x1xi1> to vector<8x128xi1>
    %c8_i32_38 = arith.constant 8 : i32
    %91 = arith.muli %c1_i32, %c8_i32_38 : i32
    %92 = tpu.assume_multiple %91, 8 : i32
    %93 = arith.index_cast %92 : i32 to index
    %c0_39 = arith.constant 0 : index
    %94 = vector.load %arg12[%93, %c0_39] : memref<64x512xf32, #tpu.memory_space<vmem>>, vector<8x512xf32>
    %cst_40 = arith.constant dense<0.000000e+00> : vector<8x512xf32>
    %95 = tpu.matmul %58, %4, %cst_40 {dimension_numbers = #tpu.dot_dimension_numbers<[1], [0], [0], [1], [0, 0, 1, 1], [], []>} : vector<8x128xf32>, vector<128x512xf32>, vector<8x512xf32> -> vector<8x512xf32>
    %96 = arith.addf %94, %95 : vector<8x512xf32>
    %97 = arith.mulf %96, %18 : vector<8x512xf32>
    %98 = math.tanh %97 : vector<8x512xf32>
    %99 = arith.mulf %98, %18 : vector<8x512xf32>
    %100 = arith.addf %99, %21 : vector<8x512xf32>
    %101 = vector.extract_strided_slice %100 {offsets = [0, 0], sizes = [8, 128], strides = [1, 1]} : vector<8x512xf32> to vector<8x128xf32>
    %102 = vector.extract_strided_slice %100 {offsets = [0, 128], sizes = [8, 128], strides = [1, 1]} : vector<8x512xf32> to vector<8x128xf32>
    %103 = vector.extract_strided_slice %100 {offsets = [0, 256], sizes = [8, 128], strides = [1, 1]} : vector<8x512xf32> to vector<8x128xf32>
    %104 = vector.extract_strided_slice %100 {offsets = [0, 384], sizes = [8, 128], strides = [1, 1]} : vector<8x512xf32> to vector<8x128xf32>
    %105 = arith.mulf %102, %59 : vector<8x128xf32>
    %106 = arith.mulf %101, %103 : vector<8x128xf32>
    %107 = arith.addf %105, %106 : vector<8x128xf32>
    %108 = math.tanh %107 : vector<8x128xf32>
    %109 = arith.mulf %104, %108 : vector<8x128xf32>
    %110 = arith.select %90, %109, %58 : vector<8x128xi1>, vector<8x128xf32>
    %111 = arith.select %90, %107, %59 : vector<8x128xi1>, vector<8x128xf32>
    %cst_41 = arith.constant 0.000000e+00 : f32
    %112 = vector.broadcast %cst_41 : f32 to vector<8x128xf32>
    %113 = arith.select %90, %109, %112 : vector<8x128xi1>, vector<8x128xf32>
    %114 = tpu.concatenate %113, %78 in 1 : vector<8x128xf32>, vector<8x128xf32> -> vector<8x256xf32>
    %cst_42 = arith.constant dense<0.000000e+00> : vector<8x512xf32>
    %115 = tpu.matmul %114, %5, %cst_42 {dimension_numbers = #tpu.dot_dimension_numbers<[1], [0], [0], [1], [0, 0, 1, 1], [], []>} : vector<8x256xf32>, vector<256x512xf32>, vector<8x512xf32> -> vector<8x512xf32>
    %116 = arith.addf %115, %9 : vector<8x512xf32>
    %117 = arith.mulf %116, %18 : vector<8x512xf32>
    %118 = math.tanh %117 : vector<8x512xf32>
    %119 = arith.mulf %118, %18 : vector<8x512xf32>
    %120 = arith.addf %119, %21 : vector<8x512xf32>
    %121 = vector.extract_strided_slice %120 {offsets = [0, 0], sizes = [8, 128], strides = [1, 1]} : vector<8x512xf32> to vector<8x128xf32>
    %122 = vector.extract_strided_slice %120 {offsets = [0, 128], sizes = [8, 128], strides = [1, 1]} : vector<8x512xf32> to vector<8x128xf32>
    %123 = vector.extract_strided_slice %120 {offsets = [0, 256], sizes = [8, 128], strides = [1, 1]} : vector<8x512xf32> to vector<8x128xf32>
    %124 = vector.extract_strided_slice %120 {offsets = [0, 384], sizes = [8, 128], strides = [1, 1]} : vector<8x512xf32> to vector<8x128xf32>
    %125 = arith.mulf %122, %79 : vector<8x128xf32>
    %126 = arith.mulf %121, %123 : vector<8x128xf32>
    %127 = arith.addf %125, %126 : vector<8x128xf32>
    %128 = math.tanh %127 : vector<8x128xf32>
    %129 = arith.mulf %124, %128 : vector<8x128xf32>
    %130 = arith.select %90, %129, %78 : vector<8x128xi1>, vector<8x128xf32>
    %131 = arith.select %90, %127, %79 : vector<8x128xi1>, vector<8x128xf32>
    %cst_43 = arith.constant 0.000000e+00 : f32
    %132 = vector.broadcast %cst_43 : f32 to vector<8x128xf32>
    %133 = arith.select %90, %129, %132 : vector<8x128xi1>, vector<8x128xf32>
    %134 = arith.index_cast %c1_i32 : i32 to index
    %c0_44 = arith.constant 0 : index
    %c0_45 = arith.constant 0 : index
    %135 = vector.load %arg9[%134, %c0_44, %c0_45] : memref<8x8x128xf32, #tpu.memory_space<vmem>>, vector<1x8x128xf32>
    %136 = vector.shape_cast %135 : vector<1x8x128xf32> to vector<8x128xf32>
    %137 = vector.shape_cast %133 : vector<8x128xf32> to vector<1x8x128xf32>
    tpu.vector_store %arg9[%134, %c0_44, %c0_45], %137 {strides = array<i32>} : memref<8x8x128xf32, #tpu.memory_space<vmem>>, vector<1x8x128xf32>,
    %c2_i32 = arith.constant 2 : i32
    %138 = arith.addi %6, %c2_i32 : i32
    %139 = vector.broadcast %138 : i32 to vector<8x1xi32>
    %140 = arith.cmpi slt, %139, %3 : vector<8x1xi32>
    %141 = vector.shape_cast %140 : vector<8x1xi1> to vector<8x1xi1>
    %142 = vector.broadcast %141 : vector<8x1xi1> to vector<8x128xi1>
    %c8_i32_46 = arith.constant 8 : i32
    %143 = arith.muli %c2_i32, %c8_i32_46 : i32
    %144 = tpu.assume_multiple %143, 8 : i32
    %145 = arith.index_cast %144 : i32 to index
    %c0_47 = arith.constant 0 : index
    %146 = vector.load %arg12[%145, %c0_47] : memref<64x512xf32, #tpu.memory_space<vmem>>, vector<8x512xf32>
    %cst_48 = arith.constant dense<0.000000e+00> : vector<8x512xf32>
    %147 = tpu.matmul %110, %4, %cst_48 {dimension_numbers = #tpu.dot_dimension_numbers<[1], [0], [0], [1], [0, 0, 1, 1], [], []>} : vector<8x128xf32>, vector<128x512xf32>, vector<8x512xf32> -> vector<8x512xf32>
    %148 = arith.addf %146, %147 : vector<8x512xf32>
    %149 = arith.mulf %148, %18 : vector<8x512xf32>
    %150 = math.tanh %149 : vector<8x512xf32>
    %151 = arith.mulf %150, %18 : vector<8x512xf32>
    %152 = arith.addf %151, %21 : vector<8x512xf32>
    %153 = vector.extract_strided_slice %152 {offsets = [0, 0], sizes = [8, 128], strides = [1, 1]} : vector<8x512xf32> to vector<8x128xf32>
    %154 = vector.extract_strided_slice %152 {offsets = [0, 128], sizes = [8, 128], strides = [1, 1]} : vector<8x512xf32> to vector<8x128xf32>
    %155 = vector.extract_strided_slice %152 {offsets = [0, 256], sizes = [8, 128], strides = [1, 1]} : vector<8x512xf32> to vector<8x128xf32>
    %156 = vector.extract_strided_slice %152 {offsets = [0, 384], sizes = [8, 128], strides = [1, 1]} : vector<8x512xf32> to vector<8x128xf32>
    %157 = arith.mulf %154, %111 : vector<8x128xf32>
    %158 = arith.mulf %153, %155 : vector<8x128xf32>
    %159 = arith.addf %157, %158 : vector<8x128xf32>
    %160 = math.tanh %159 : vector<8x128xf32>
    %161 = arith.mulf %156, %160 : vector<8x128xf32>
    %162 = arith.select %142, %161, %110 : vector<8x128xi1>, vector<8x128xf32>
    %163 = arith.select %142, %159, %111 : vector<8x128xi1>, vector<8x128xf32>
    %cst_49 = arith.constant 0.000000e+00 : f32
    %164 = vector.broadcast %cst_49 : f32 to vector<8x128xf32>
    %165 = arith.select %142, %161, %164 : vector<8x128xi1>, vector<8x128xf32>
    %166 = tpu.concatenate %165, %130 in 1 : vector<8x128xf32>, vector<8x128xf32> -> vector<8x256xf32>
    %cst_50 = arith.constant dense<0.000000e+00> : vector<8x512xf32>
    %167 = tpu.matmul %166, %5, %cst_50 {dimension_numbers = #tpu.dot_dimension_numbers<[1], [0], [0], [1], [0, 0, 1, 1], [], []>} : vector<8x256xf32>, vector<256x512xf32>, vector<8x512xf32> -> vector<8x512xf32>
    %168 = arith.addf %167, %9 : vector<8x512xf32>
    %169 = arith.mulf %168, %18 : vector<8x512xf32>
    %170 = math.tanh %169 : vector<8x512xf32>
    %171 = arith.mulf %170, %18 : vector<8x512xf32>
    %172 = arith.addf %171, %21 : vector<8x512xf32>
    %173 = vector.extract_strided_slice %172 {offsets = [0, 0], sizes = [8, 128], strides = [1, 1]} : vector<8x512xf32> to vector<8x128xf32>
    %174 = vector.extract_strided_slice %172 {offsets = [0, 128], sizes = [8, 128], strides = [1, 1]} : vector<8x512xf32> to vector<8x128xf32>
    %175 = vector.extract_strided_slice %172 {offsets = [0, 256], sizes = [8, 128], strides = [1, 1]} : vector<8x512xf32> to vector<8x128xf32>
    %176 = vector.extract_strided_slice %172 {offsets = [0, 384], sizes = [8, 128], strides = [1, 1]} : vector<8x512xf32> to vector<8x128xf32>
    %177 = arith.mulf %174, %131 : vector<8x128xf32>
    %178 = arith.mulf %173, %175 : vector<8x128xf32>
    %179 = arith.addf %177, %178 : vector<8x128xf32>
    %180 = math.tanh %179 : vector<8x128xf32>
    %181 = arith.mulf %176, %180 : vector<8x128xf32>
    %182 = arith.select %142, %181, %130 : vector<8x128xi1>, vector<8x128xf32>
    %183 = arith.select %142, %179, %131 : vector<8x128xi1>, vector<8x128xf32>
    %cst_51 = arith.constant 0.000000e+00 : f32
    %184 = vector.broadcast %cst_51 : f32 to vector<8x128xf32>
    %185 = arith.select %142, %181, %184 : vector<8x128xi1>, vector<8x128xf32>
    %186 = arith.index_cast %c2_i32 : i32 to index
    %c0_52 = arith.constant 0 : index
    %c0_53 = arith.constant 0 : index
    %187 = vector.load %arg9[%186, %c0_52, %c0_53] : memref<8x8x128xf32, #tpu.memory_space<vmem>>, vector<1x8x128xf32>
    %188 = vector.shape_cast %187 : vector<1x8x128xf32> to vector<8x128xf32>
    %189 = vector.shape_cast %185 : vector<8x128xf32> to vector<1x8x128xf32>
    tpu.vector_store %arg9[%186, %c0_52, %c0_53], %189 {strides = array<i32>} : memref<8x8x128xf32, #tpu.memory_space<vmem>>, vector<1x8x128xf32>,
    %c3_i32 = arith.constant 3 : i32
    %190 = arith.addi %6, %c3_i32 : i32
    %191 = vector.broadcast %190 : i32 to vector<8x1xi32>
    %192 = arith.cmpi slt, %191, %3 : vector<8x1xi32>
    %193 = vector.shape_cast %192 : vector<8x1xi1> to vector<8x1xi1>
    %194 = vector.broadcast %193 : vector<8x1xi1> to vector<8x128xi1>
    %c8_i32_54 = arith.constant 8 : i32
    %195 = arith.muli %c3_i32, %c8_i32_54 : i32
    %196 = tpu.assume_multiple %195, 8 : i32
    %197 = arith.index_cast %196 : i32 to index
    %c0_55 = arith.constant 0 : index
    %198 = vector.load %arg12[%197, %c0_55] : memref<64x512xf32, #tpu.memory_space<vmem>>, vector<8x512xf32>
    %cst_56 = arith.constant dense<0.000000e+00> : vector<8x512xf32>
    %199 = tpu.matmul %162, %4, %cst_56 {dimension_numbers = #tpu.dot_dimension_numbers<[1], [0], [0], [1], [0, 0, 1, 1], [], []>} : vector<8x128xf32>, vector<128x512xf32>, vector<8x512xf32> -> vector<8x512xf32>
    %200 = arith.addf %198, %199 : vector<8x512xf32>
    %201 = arith.mulf %200, %18 : vector<8x512xf32>
    %202 = math.tanh %201 : vector<8x512xf32>
    %203 = arith.mulf %202, %18 : vector<8x512xf32>
    %204 = arith.addf %203, %21 : vector<8x512xf32>
    %205 = vector.extract_strided_slice %204 {offsets = [0, 0], sizes = [8, 128], strides = [1, 1]} : vector<8x512xf32> to vector<8x128xf32>
    %206 = vector.extract_strided_slice %204 {offsets = [0, 128], sizes = [8, 128], strides = [1, 1]} : vector<8x512xf32> to vector<8x128xf32>
    %207 = vector.extract_strided_slice %204 {offsets = [0, 256], sizes = [8, 128], strides = [1, 1]} : vector<8x512xf32> to vector<8x128xf32>
    %208 = vector.extract_strided_slice %204 {offsets = [0, 384], sizes = [8, 128], strides = [1, 1]} : vector<8x512xf32> to vector<8x128xf32>
    %209 = arith.mulf %206, %163 : vector<8x128xf32>
    %210 = arith.mulf %205, %207 : vector<8x128xf32>
    %211 = arith.addf %209, %210 : vector<8x128xf32>
    %212 = math.tanh %211 : vector<8x128xf32>
    %213 = arith.mulf %208, %212 : vector<8x128xf32>
    %214 = arith.select %194, %213, %162 : vector<8x128xi1>, vector<8x128xf32>
    %215 = arith.select %194, %211, %163 : vector<8x128xi1>, vector<8x128xf32>
    %cst_57 = arith.constant 0.000000e+00 : f32
    %216 = vector.broadcast %cst_57 : f32 to vector<8x128xf32>
    %217 = arith.select %194, %213, %216 : vector<8x128xi1>, vector<8x128xf32>
    %218 = tpu.concatenate %217, %182 in 1 : vector<8x128xf32>, vector<8x128xf32> -> vector<8x256xf32>
    %cst_58 = arith.constant dense<0.000000e+00> : vector<8x512xf32>
    %219 = tpu.matmul %218, %5, %cst_58 {dimension_numbers = #tpu.dot_dimension_numbers<[1], [0], [0], [1], [0, 0, 1, 1], [], []>} : vector<8x256xf32>, vector<256x512xf32>, vector<8x512xf32> -> vector<8x512xf32>
    %220 = arith.addf %219, %9 : vector<8x512xf32>
    %221 = arith.mulf %220, %18 : vector<8x512xf32>
    %222 = math.tanh %221 : vector<8x512xf32>
    %223 = arith.mulf %222, %18 : vector<8x512xf32>
    %224 = arith.addf %223, %21 : vector<8x512xf32>
    %225 = vector.extract_strided_slice %224 {offsets = [0, 0], sizes = [8, 128], strides = [1, 1]} : vector<8x512xf32> to vector<8x128xf32>
    %226 = vector.extract_strided_slice %224 {offsets = [0, 128], sizes = [8, 128], strides = [1, 1]} : vector<8x512xf32> to vector<8x128xf32>
    %227 = vector.extract_strided_slice %224 {offsets = [0, 256], sizes = [8, 128], strides = [1, 1]} : vector<8x512xf32> to vector<8x128xf32>
    %228 = vector.extract_strided_slice %224 {offsets = [0, 384], sizes = [8, 128], strides = [1, 1]} : vector<8x512xf32> to vector<8x128xf32>
    %229 = arith.mulf %226, %183 : vector<8x128xf32>
    %230 = arith.mulf %225, %227 : vector<8x128xf32>
    %231 = arith.addf %229, %230 : vector<8x128xf32>
    %232 = math.tanh %231 : vector<8x128xf32>
    %233 = arith.mulf %228, %232 : vector<8x128xf32>
    %234 = arith.select %194, %233, %182 : vector<8x128xi1>, vector<8x128xf32>
    %235 = arith.select %194, %231, %183 : vector<8x128xi1>, vector<8x128xf32>
    %cst_59 = arith.constant 0.000000e+00 : f32
    %236 = vector.broadcast %cst_59 : f32 to vector<8x128xf32>
    %237 = arith.select %194, %233, %236 : vector<8x128xi1>, vector<8x128xf32>
    %238 = arith.index_cast %c3_i32 : i32 to index
    %c0_60 = arith.constant 0 : index
    %c0_61 = arith.constant 0 : index
    %239 = vector.load %arg9[%238, %c0_60, %c0_61] : memref<8x8x128xf32, #tpu.memory_space<vmem>>, vector<1x8x128xf32>
    %240 = vector.shape_cast %239 : vector<1x8x128xf32> to vector<8x128xf32>
    %241 = vector.shape_cast %237 : vector<8x128xf32> to vector<1x8x128xf32>
    tpu.vector_store %arg9[%238, %c0_60, %c0_61], %241 {strides = array<i32>} : memref<8x8x128xf32, #tpu.memory_space<vmem>>, vector<1x8x128xf32>,
    %c4_i32 = arith.constant 4 : i32
    %242 = arith.addi %6, %c4_i32 : i32
    %243 = vector.broadcast %242 : i32 to vector<8x1xi32>
    %244 = arith.cmpi slt, %243, %3 : vector<8x1xi32>
    %245 = vector.shape_cast %244 : vector<8x1xi1> to vector<8x1xi1>
    %246 = vector.broadcast %245 : vector<8x1xi1> to vector<8x128xi1>
    %c8_i32_62 = arith.constant 8 : i32
    %247 = arith.muli %c4_i32, %c8_i32_62 : i32
    %248 = tpu.assume_multiple %247, 8 : i32
    %249 = arith.index_cast %248 : i32 to index
    %c0_63 = arith.constant 0 : index
    %250 = vector.load %arg12[%249, %c0_63] : memref<64x512xf32, #tpu.memory_space<vmem>>, vector<8x512xf32>
    %cst_64 = arith.constant dense<0.000000e+00> : vector<8x512xf32>
    %251 = tpu.matmul %214, %4, %cst_64 {dimension_numbers = #tpu.dot_dimension_numbers<[1], [0], [0], [1], [0, 0, 1, 1], [], []>} : vector<8x128xf32>, vector<128x512xf32>, vector<8x512xf32> -> vector<8x512xf32>
    %252 = arith.addf %250, %251 : vector<8x512xf32>
    %253 = arith.mulf %252, %18 : vector<8x512xf32>
    %254 = math.tanh %253 : vector<8x512xf32>
    %255 = arith.mulf %254, %18 : vector<8x512xf32>
    %256 = arith.addf %255, %21 : vector<8x512xf32>
    %257 = vector.extract_strided_slice %256 {offsets = [0, 0], sizes = [8, 128], strides = [1, 1]} : vector<8x512xf32> to vector<8x128xf32>
    %258 = vector.extract_strided_slice %256 {offsets = [0, 128], sizes = [8, 128], strides = [1, 1]} : vector<8x512xf32> to vector<8x128xf32>
    %259 = vector.extract_strided_slice %256 {offsets = [0, 256], sizes = [8, 128], strides = [1, 1]} : vector<8x512xf32> to vector<8x128xf32>
    %260 = vector.extract_strided_slice %256 {offsets = [0, 384], sizes = [8, 128], strides = [1, 1]} : vector<8x512xf32> to vector<8x128xf32>
    %261 = arith.mulf %258, %215 : vector<8x128xf32>
    %262 = arith.mulf %257, %259 : vector<8x128xf32>
    %263 = arith.addf %261, %262 : vector<8x128xf32>
    %264 = math.tanh %263 : vector<8x128xf32>
    %265 = arith.mulf %260, %264 : vector<8x128xf32>
    %266 = arith.select %246, %265, %214 : vector<8x128xi1>, vector<8x128xf32>
    %267 = arith.select %246, %263, %215 : vector<8x128xi1>, vector<8x128xf32>
    %cst_65 = arith.constant 0.000000e+00 : f32
    %268 = vector.broadcast %cst_65 : f32 to vector<8x128xf32>
    %269 = arith.select %246, %265, %268 : vector<8x128xi1>, vector<8x128xf32>
    %270 = tpu.concatenate %269, %234 in 1 : vector<8x128xf32>, vector<8x128xf32> -> vector<8x256xf32>
    %cst_66 = arith.constant dense<0.000000e+00> : vector<8x512xf32>
    %271 = tpu.matmul %270, %5, %cst_66 {dimension_numbers = #tpu.dot_dimension_numbers<[1], [0], [0], [1], [0, 0, 1, 1], [], []>} : vector<8x256xf32>, vector<256x512xf32>, vector<8x512xf32> -> vector<8x512xf32>
    %272 = arith.addf %271, %9 : vector<8x512xf32>
    %273 = arith.mulf %272, %18 : vector<8x512xf32>
    %274 = math.tanh %273 : vector<8x512xf32>
    %275 = arith.mulf %274, %18 : vector<8x512xf32>
    %276 = arith.addf %275, %21 : vector<8x512xf32>
    %277 = vector.extract_strided_slice %276 {offsets = [0, 0], sizes = [8, 128], strides = [1, 1]} : vector<8x512xf32> to vector<8x128xf32>
    %278 = vector.extract_strided_slice %276 {offsets = [0, 128], sizes = [8, 128], strides = [1, 1]} : vector<8x512xf32> to vector<8x128xf32>
    %279 = vector.extract_strided_slice %276 {offsets = [0, 256], sizes = [8, 128], strides = [1, 1]} : vector<8x512xf32> to vector<8x128xf32>
    %280 = vector.extract_strided_slice %276 {offsets = [0, 384], sizes = [8, 128], strides = [1, 1]} : vector<8x512xf32> to vector<8x128xf32>
    %281 = arith.mulf %278, %235 : vector<8x128xf32>
    %282 = arith.mulf %277, %279 : vector<8x128xf32>
    %283 = arith.addf %281, %282 : vector<8x128xf32>
    %284 = math.tanh %283 : vector<8x128xf32>
    %285 = arith.mulf %280, %284 : vector<8x128xf32>
    %286 = arith.select %246, %285, %234 : vector<8x128xi1>, vector<8x128xf32>
    %287 = arith.select %246, %283, %235 : vector<8x128xi1>, vector<8x128xf32>
    %cst_67 = arith.constant 0.000000e+00 : f32
    %288 = vector.broadcast %cst_67 : f32 to vector<8x128xf32>
    %289 = arith.select %246, %285, %288 : vector<8x128xi1>, vector<8x128xf32>
    %290 = arith.index_cast %c4_i32 : i32 to index
    %c0_68 = arith.constant 0 : index
    %c0_69 = arith.constant 0 : index
    %291 = vector.load %arg9[%290, %c0_68, %c0_69] : memref<8x8x128xf32, #tpu.memory_space<vmem>>, vector<1x8x128xf32>
    %292 = vector.shape_cast %291 : vector<1x8x128xf32> to vector<8x128xf32>
    %293 = vector.shape_cast %289 : vector<8x128xf32> to vector<1x8x128xf32>
    tpu.vector_store %arg9[%290, %c0_68, %c0_69], %293 {strides = array<i32>} : memref<8x8x128xf32, #tpu.memory_space<vmem>>, vector<1x8x128xf32>,
    %c5_i32 = arith.constant 5 : i32
    %294 = arith.addi %6, %c5_i32 : i32
    %295 = vector.broadcast %294 : i32 to vector<8x1xi32>
    %296 = arith.cmpi slt, %295, %3 : vector<8x1xi32>
    %297 = vector.shape_cast %296 : vector<8x1xi1> to vector<8x1xi1>
    %298 = vector.broadcast %297 : vector<8x1xi1> to vector<8x128xi1>
    %c8_i32_70 = arith.constant 8 : i32
    %299 = arith.muli %c5_i32, %c8_i32_70 : i32
    %300 = tpu.assume_multiple %299, 8 : i32
    %301 = arith.index_cast %300 : i32 to index
    %c0_71 = arith.constant 0 : index
    %302 = vector.load %arg12[%301, %c0_71] : memref<64x512xf32, #tpu.memory_space<vmem>>, vector<8x512xf32>
    %cst_72 = arith.constant dense<0.000000e+00> : vector<8x512xf32>
    %303 = tpu.matmul %266, %4, %cst_72 {dimension_numbers = #tpu.dot_dimension_numbers<[1], [0], [0], [1], [0, 0, 1, 1], [], []>} : vector<8x128xf32>, vector<128x512xf32>, vector<8x512xf32> -> vector<8x512xf32>
    %304 = arith.addf %302, %303 : vector<8x512xf32>
    %305 = arith.mulf %304, %18 : vector<8x512xf32>
    %306 = math.tanh %305 : vector<8x512xf32>
    %307 = arith.mulf %306, %18 : vector<8x512xf32>
    %308 = arith.addf %307, %21 : vector<8x512xf32>
    %309 = vector.extract_strided_slice %308 {offsets = [0, 0], sizes = [8, 128], strides = [1, 1]} : vector<8x512xf32> to vector<8x128xf32>
    %310 = vector.extract_strided_slice %308 {offsets = [0, 128], sizes = [8, 128], strides = [1, 1]} : vector<8x512xf32> to vector<8x128xf32>
    %311 = vector.extract_strided_slice %308 {offsets = [0, 256], sizes = [8, 128], strides = [1, 1]} : vector<8x512xf32> to vector<8x128xf32>
    %312 = vector.extract_strided_slice %308 {offsets = [0, 384], sizes = [8, 128], strides = [1, 1]} : vector<8x512xf32> to vector<8x128xf32>
    %313 = arith.mulf %310, %267 : vector<8x128xf32>
    %314 = arith.mulf %309, %311 : vector<8x128xf32>
    %315 = arith.addf %313, %314 : vector<8x128xf32>
    %316 = math.tanh %315 : vector<8x128xf32>
    %317 = arith.mulf %312, %316 : vector<8x128xf32>
    %318 = arith.select %298, %317, %266 : vector<8x128xi1>, vector<8x128xf32>
    %319 = arith.select %298, %315, %267 : vector<8x128xi1>, vector<8x128xf32>
    %cst_73 = arith.constant 0.000000e+00 : f32
    %320 = vector.broadcast %cst_73 : f32 to vector<8x128xf32>
    %321 = arith.select %298, %317, %320 : vector<8x128xi1>, vector<8x128xf32>
    %322 = tpu.concatenate %321, %286 in 1 : vector<8x128xf32>, vector<8x128xf32> -> vector<8x256xf32>
    %cst_74 = arith.constant dense<0.000000e+00> : vector<8x512xf32>
    %323 = tpu.matmul %322, %5, %cst_74 {dimension_numbers = #tpu.dot_dimension_numbers<[1], [0], [0], [1], [0, 0, 1, 1], [], []>} : vector<8x256xf32>, vector<256x512xf32>, vector<8x512xf32> -> vector<8x512xf32>
    %324 = arith.addf %323, %9 : vector<8x512xf32>
    %325 = arith.mulf %324, %18 : vector<8x512xf32>
    %326 = math.tanh %325 : vector<8x512xf32>
    %327 = arith.mulf %326, %18 : vector<8x512xf32>
    %328 = arith.addf %327, %21 : vector<8x512xf32>
    %329 = vector.extract_strided_slice %328 {offsets = [0, 0], sizes = [8, 128], strides = [1, 1]} : vector<8x512xf32> to vector<8x128xf32>
    %330 = vector.extract_strided_slice %328 {offsets = [0, 128], sizes = [8, 128], strides = [1, 1]} : vector<8x512xf32> to vector<8x128xf32>
    %331 = vector.extract_strided_slice %328 {offsets = [0, 256], sizes = [8, 128], strides = [1, 1]} : vector<8x512xf32> to vector<8x128xf32>
    %332 = vector.extract_strided_slice %328 {offsets = [0, 384], sizes = [8, 128], strides = [1, 1]} : vector<8x512xf32> to vector<8x128xf32>
    %333 = arith.mulf %330, %287 : vector<8x128xf32>
    %334 = arith.mulf %329, %331 : vector<8x128xf32>
    %335 = arith.addf %333, %334 : vector<8x128xf32>
    %336 = math.tanh %335 : vector<8x128xf32>
    %337 = arith.mulf %332, %336 : vector<8x128xf32>
    %338 = arith.select %298, %337, %286 : vector<8x128xi1>, vector<8x128xf32>
    %339 = arith.select %298, %335, %287 : vector<8x128xi1>, vector<8x128xf32>
    %cst_75 = arith.constant 0.000000e+00 : f32
    %340 = vector.broadcast %cst_75 : f32 to vector<8x128xf32>
    %341 = arith.select %298, %337, %340 : vector<8x128xi1>, vector<8x128xf32>
    %342 = arith.index_cast %c5_i32 : i32 to index
    %c0_76 = arith.constant 0 : index
    %c0_77 = arith.constant 0 : index
    %343 = vector.load %arg9[%342, %c0_76, %c0_77] : memref<8x8x128xf32, #tpu.memory_space<vmem>>, vector<1x8x128xf32>
    %344 = vector.shape_cast %343 : vector<1x8x128xf32> to vector<8x128xf32>
    %345 = vector.shape_cast %341 : vector<8x128xf32> to vector<1x8x128xf32>
    tpu.vector_store %arg9[%342, %c0_76, %c0_77], %345 {strides = array<i32>} : memref<8x8x128xf32, #tpu.memory_space<vmem>>, vector<1x8x128xf32>,
    %c6_i32 = arith.constant 6 : i32
    %346 = arith.addi %6, %c6_i32 : i32
    %347 = vector.broadcast %346 : i32 to vector<8x1xi32>
    %348 = arith.cmpi slt, %347, %3 : vector<8x1xi32>
    %349 = vector.shape_cast %348 : vector<8x1xi1> to vector<8x1xi1>
    %350 = vector.broadcast %349 : vector<8x1xi1> to vector<8x128xi1>
    %c8_i32_78 = arith.constant 8 : i32
    %351 = arith.muli %c6_i32, %c8_i32_78 : i32
    %352 = tpu.assume_multiple %351, 8 : i32
    %353 = arith.index_cast %352 : i32 to index
    %c0_79 = arith.constant 0 : index
    %354 = vector.load %arg12[%353, %c0_79] : memref<64x512xf32, #tpu.memory_space<vmem>>, vector<8x512xf32>
    %cst_80 = arith.constant dense<0.000000e+00> : vector<8x512xf32>
    %355 = tpu.matmul %318, %4, %cst_80 {dimension_numbers = #tpu.dot_dimension_numbers<[1], [0], [0], [1], [0, 0, 1, 1], [], []>} : vector<8x128xf32>, vector<128x512xf32>, vector<8x512xf32> -> vector<8x512xf32>
    %356 = arith.addf %354, %355 : vector<8x512xf32>
    %357 = arith.mulf %356, %18 : vector<8x512xf32>
    %358 = math.tanh %357 : vector<8x512xf32>
    %359 = arith.mulf %358, %18 : vector<8x512xf32>
    %360 = arith.addf %359, %21 : vector<8x512xf32>
    %361 = vector.extract_strided_slice %360 {offsets = [0, 0], sizes = [8, 128], strides = [1, 1]} : vector<8x512xf32> to vector<8x128xf32>
    %362 = vector.extract_strided_slice %360 {offsets = [0, 128], sizes = [8, 128], strides = [1, 1]} : vector<8x512xf32> to vector<8x128xf32>
    %363 = vector.extract_strided_slice %360 {offsets = [0, 256], sizes = [8, 128], strides = [1, 1]} : vector<8x512xf32> to vector<8x128xf32>
    %364 = vector.extract_strided_slice %360 {offsets = [0, 384], sizes = [8, 128], strides = [1, 1]} : vector<8x512xf32> to vector<8x128xf32>
    %365 = arith.mulf %362, %319 : vector<8x128xf32>
    %366 = arith.mulf %361, %363 : vector<8x128xf32>
    %367 = arith.addf %365, %366 : vector<8x128xf32>
    %368 = math.tanh %367 : vector<8x128xf32>
    %369 = arith.mulf %364, %368 : vector<8x128xf32>
    %370 = arith.select %350, %369, %318 : vector<8x128xi1>, vector<8x128xf32>
    %371 = arith.select %350, %367, %319 : vector<8x128xi1>, vector<8x128xf32>
    %cst_81 = arith.constant 0.000000e+00 : f32
    %372 = vector.broadcast %cst_81 : f32 to vector<8x128xf32>
    %373 = arith.select %350, %369, %372 : vector<8x128xi1>, vector<8x128xf32>
    %374 = tpu.concatenate %373, %338 in 1 : vector<8x128xf32>, vector<8x128xf32> -> vector<8x256xf32>
    %cst_82 = arith.constant dense<0.000000e+00> : vector<8x512xf32>
    %375 = tpu.matmul %374, %5, %cst_82 {dimension_numbers = #tpu.dot_dimension_numbers<[1], [0], [0], [1], [0, 0, 1, 1], [], []>} : vector<8x256xf32>, vector<256x512xf32>, vector<8x512xf32> -> vector<8x512xf32>
    %376 = arith.addf %375, %9 : vector<8x512xf32>
    %377 = arith.mulf %376, %18 : vector<8x512xf32>
    %378 = math.tanh %377 : vector<8x512xf32>
    %379 = arith.mulf %378, %18 : vector<8x512xf32>
    %380 = arith.addf %379, %21 : vector<8x512xf32>
    %381 = vector.extract_strided_slice %380 {offsets = [0, 0], sizes = [8, 128], strides = [1, 1]} : vector<8x512xf32> to vector<8x128xf32>
    %382 = vector.extract_strided_slice %380 {offsets = [0, 128], sizes = [8, 128], strides = [1, 1]} : vector<8x512xf32> to vector<8x128xf32>
    %383 = vector.extract_strided_slice %380 {offsets = [0, 256], sizes = [8, 128], strides = [1, 1]} : vector<8x512xf32> to vector<8x128xf32>
    %384 = vector.extract_strided_slice %380 {offsets = [0, 384], sizes = [8, 128], strides = [1, 1]} : vector<8x512xf32> to vector<8x128xf32>
    %385 = arith.mulf %382, %339 : vector<8x128xf32>
    %386 = arith.mulf %381, %383 : vector<8x128xf32>
    %387 = arith.addf %385, %386 : vector<8x128xf32>
    %388 = math.tanh %387 : vector<8x128xf32>
    %389 = arith.mulf %384, %388 : vector<8x128xf32>
    %390 = arith.select %350, %389, %338 : vector<8x128xi1>, vector<8x128xf32>
    %391 = arith.select %350, %387, %339 : vector<8x128xi1>, vector<8x128xf32>
    %cst_83 = arith.constant 0.000000e+00 : f32
    %392 = vector.broadcast %cst_83 : f32 to vector<8x128xf32>
    %393 = arith.select %350, %389, %392 : vector<8x128xi1>, vector<8x128xf32>
    %394 = arith.index_cast %c6_i32 : i32 to index
    %c0_84 = arith.constant 0 : index
    %c0_85 = arith.constant 0 : index
    %395 = vector.load %arg9[%394, %c0_84, %c0_85] : memref<8x8x128xf32, #tpu.memory_space<vmem>>, vector<1x8x128xf32>
    %396 = vector.shape_cast %395 : vector<1x8x128xf32> to vector<8x128xf32>
    %397 = vector.shape_cast %393 : vector<8x128xf32> to vector<1x8x128xf32>
    tpu.vector_store %arg9[%394, %c0_84, %c0_85], %397 {strides = array<i32>} : memref<8x8x128xf32, #tpu.memory_space<vmem>>, vector<1x8x128xf32>,
    %c7_i32 = arith.constant 7 : i32
    %398 = arith.addi %6, %c7_i32 : i32
    %399 = vector.broadcast %398 : i32 to vector<8x1xi32>
    %400 = arith.cmpi slt, %399, %3 : vector<8x1xi32>
    %401 = vector.shape_cast %400 : vector<8x1xi1> to vector<8x1xi1>
    %402 = vector.broadcast %401 : vector<8x1xi1> to vector<8x128xi1>
    %c8_i32_86 = arith.constant 8 : i32
    %403 = arith.muli %c7_i32, %c8_i32_86 : i32
    %404 = tpu.assume_multiple %403, 8 : i32
    %405 = arith.index_cast %404 : i32 to index
    %c0_87 = arith.constant 0 : index
    %406 = vector.load %arg12[%405, %c0_87] : memref<64x512xf32, #tpu.memory_space<vmem>>, vector<8x512xf32>
    %cst_88 = arith.constant dense<0.000000e+00> : vector<8x512xf32>
    %407 = tpu.matmul %370, %4, %cst_88 {dimension_numbers = #tpu.dot_dimension_numbers<[1], [0], [0], [1], [0, 0, 1, 1], [], []>} : vector<8x128xf32>, vector<128x512xf32>, vector<8x512xf32> -> vector<8x512xf32>
    %408 = arith.addf %406, %407 : vector<8x512xf32>
    %409 = arith.mulf %408, %18 : vector<8x512xf32>
    %410 = math.tanh %409 : vector<8x512xf32>
    %411 = arith.mulf %410, %18 : vector<8x512xf32>
    %412 = arith.addf %411, %21 : vector<8x512xf32>
    %413 = vector.extract_strided_slice %412 {offsets = [0, 0], sizes = [8, 128], strides = [1, 1]} : vector<8x512xf32> to vector<8x128xf32>
    %414 = vector.extract_strided_slice %412 {offsets = [0, 128], sizes = [8, 128], strides = [1, 1]} : vector<8x512xf32> to vector<8x128xf32>
    %415 = vector.extract_strided_slice %412 {offsets = [0, 256], sizes = [8, 128], strides = [1, 1]} : vector<8x512xf32> to vector<8x128xf32>
    %416 = vector.extract_strided_slice %412 {offsets = [0, 384], sizes = [8, 128], strides = [1, 1]} : vector<8x512xf32> to vector<8x128xf32>
    %417 = arith.mulf %414, %371 : vector<8x128xf32>
    %418 = arith.mulf %413, %415 : vector<8x128xf32>
    %419 = arith.addf %417, %418 : vector<8x128xf32>
    %420 = math.tanh %419 : vector<8x128xf32>
    %421 = arith.mulf %416, %420 : vector<8x128xf32>
    %422 = arith.select %402, %421, %370 : vector<8x128xi1>, vector<8x128xf32>
    %423 = arith.select %402, %419, %371 : vector<8x128xi1>, vector<8x128xf32>
    %cst_89 = arith.constant 0.000000e+00 : f32
    %424 = vector.broadcast %cst_89 : f32 to vector<8x128xf32>
    %425 = arith.select %402, %421, %424 : vector<8x128xi1>, vector<8x128xf32>
    %426 = tpu.concatenate %425, %390 in 1 : vector<8x128xf32>, vector<8x128xf32> -> vector<8x256xf32>
    %cst_90 = arith.constant dense<0.000000e+00> : vector<8x512xf32>
    %427 = tpu.matmul %426, %5, %cst_90 {dimension_numbers = #tpu.dot_dimension_numbers<[1], [0], [0], [1], [0, 0, 1, 1], [], []>} : vector<8x256xf32>, vector<256x512xf32>, vector<8x512xf32> -> vector<8x512xf32>
    %428 = arith.addf %427, %9 : vector<8x512xf32>
    %429 = arith.mulf %428, %18 : vector<8x512xf32>
    %430 = math.tanh %429 : vector<8x512xf32>
    %431 = arith.mulf %430, %18 : vector<8x512xf32>
    %432 = arith.addf %431, %21 : vector<8x512xf32>
    %433 = vector.extract_strided_slice %432 {offsets = [0, 0], sizes = [8, 128], strides = [1, 1]} : vector<8x512xf32> to vector<8x128xf32>
    %434 = vector.extract_strided_slice %432 {offsets = [0, 128], sizes = [8, 128], strides = [1, 1]} : vector<8x512xf32> to vector<8x128xf32>
    %435 = vector.extract_strided_slice %432 {offsets = [0, 256], sizes = [8, 128], strides = [1, 1]} : vector<8x512xf32> to vector<8x128xf32>
    %436 = vector.extract_strided_slice %432 {offsets = [0, 384], sizes = [8, 128], strides = [1, 1]} : vector<8x512xf32> to vector<8x128xf32>
    %437 = arith.mulf %434, %391 : vector<8x128xf32>
    %438 = arith.mulf %433, %435 : vector<8x128xf32>
    %439 = arith.addf %437, %438 : vector<8x128xf32>
    %440 = math.tanh %439 : vector<8x128xf32>
    %441 = arith.mulf %436, %440 : vector<8x128xf32>
    %442 = arith.select %402, %441, %390 : vector<8x128xi1>, vector<8x128xf32>
    %443 = arith.select %402, %439, %391 : vector<8x128xi1>, vector<8x128xf32>
    %cst_91 = arith.constant 0.000000e+00 : f32
    %444 = vector.broadcast %cst_91 : f32 to vector<8x128xf32>
    %445 = arith.select %402, %441, %444 : vector<8x128xi1>, vector<8x128xf32>
    %446 = arith.index_cast %c7_i32 : i32 to index
    %c0_92 = arith.constant 0 : index
    %c0_93 = arith.constant 0 : index
    %447 = vector.load %arg9[%446, %c0_92, %c0_93] : memref<8x8x128xf32, #tpu.memory_space<vmem>>, vector<1x8x128xf32>
    %448 = vector.shape_cast %447 : vector<1x8x128xf32> to vector<8x128xf32>
    %449 = vector.shape_cast %445 : vector<8x128xf32> to vector<1x8x128xf32>
    tpu.vector_store %arg9[%446, %c0_92, %c0_93], %449 {strides = array<i32>} : memref<8x8x128xf32, #tpu.memory_space<vmem>>, vector<1x8x128xf32>,
    %c8_i32_94 = arith.constant 8 : i32
    %c0_95 = arith.constant 0 : index
    %c0_96 = arith.constant 0 : index
    %450 = vector.load %arg13[%c0_95, %c0_96] : memref<8x128xf32, #tpu.memory_space<vmem>>, vector<8x128xf32>
    tpu.vector_store %arg13[%c0_95, %c0_96], %422 {strides = array<i32>} : memref<8x128xf32, #tpu.memory_space<vmem>>, vector<8x128xf32>,
    %c0_97 = arith.constant 0 : index
    %c0_98 = arith.constant 0 : index
    %451 = vector.load %arg14[%c0_97, %c0_98] : memref<8x128xf32, #tpu.memory_space<vmem>>, vector<8x128xf32>
    tpu.vector_store %arg14[%c0_97, %c0_98], %423 {strides = array<i32>} : memref<8x128xf32, #tpu.memory_space<vmem>>, vector<8x128xf32>,
    %c0_99 = arith.constant 0 : index
    %c0_100 = arith.constant 0 : index
    %452 = vector.load %arg15[%c0_99, %c0_100] : memref<8x128xf32, #tpu.memory_space<vmem>>, vector<8x128xf32>
    tpu.vector_store %arg15[%c0_99, %c0_100], %442 {strides = array<i32>} : memref<8x128xf32, #tpu.memory_space<vmem>>, vector<8x128xf32>,
    %c0_101 = arith.constant 0 : index
    %c0_102 = arith.constant 0 : index
    %453 = vector.load %arg16[%c0_101, %c0_102] : memref<8x128xf32, #tpu.memory_space<vmem>>, vector<8x128xf32>
    tpu.vector_store %arg16[%c0_101, %c0_102], %443 {strides = array<i32>} : memref<8x128xf32, #tpu.memory_space<vmem>>, vector<8x128xf32>,
    %c1_i32_103 = arith.constant 1 : i32
    %454 = arith.cmpi eq, %arg1, %c1_i32_103 : i32
    %455 = arith.extui %454 : i1 to i32
    %c0_i32_104 = arith.constant 0 : i32
    %456 = arith.cmpi ne, %455, %c0_i32_104 : i32
    scf.if %456 {
      %c0_105 = arith.constant 0 : index
      %c0_106 = arith.constant 0 : index
      %c0_107 = arith.constant 0 : index
      %457 = vector.load %arg10[%c0_105, %c0_106, %c0_107] : memref<2x8x128xf32, #tpu.memory_space<vmem>>, vector<1x8x128xf32>
      %458 = vector.shape_cast %457 : vector<1x8x128xf32> to vector<8x128xf32>
      %459 = vector.shape_cast %422 : vector<8x128xf32> to vector<1x8x128xf32>
      tpu.vector_store %arg10[%c0_105, %c0_106, %c0_107], %459 {strides = array<i32>} : memref<2x8x128xf32, #tpu.memory_space<vmem>>, vector<1x8x128xf32>,
      %c1 = arith.constant 1 : index
      %c0_108 = arith.constant 0 : index
      %c0_109 = arith.constant 0 : index
      %460 = vector.load %arg10[%c1, %c0_108, %c0_109] : memref<2x8x128xf32, #tpu.memory_space<vmem>>, vector<1x8x128xf32>
      %461 = vector.shape_cast %460 : vector<1x8x128xf32> to vector<8x128xf32>
      %462 = vector.shape_cast %442 : vector<8x128xf32> to vector<1x8x128xf32>
      tpu.vector_store %arg10[%c1, %c0_108, %c0_109], %462 {strides = array<i32>} : memref<2x8x128xf32, #tpu.memory_space<vmem>>, vector<1x8x128xf32>,
      %c0_110 = arith.constant 0 : index
      %c0_111 = arith.constant 0 : index
      %c0_112 = arith.constant 0 : index
      %463 = vector.load %arg11[%c0_110, %c0_111, %c0_112] : memref<2x8x128xf32, #tpu.memory_space<vmem>>, vector<1x8x128xf32>
      %464 = vector.shape_cast %463 : vector<1x8x128xf32> to vector<8x128xf32>
      %465 = vector.shape_cast %423 : vector<8x128xf32> to vector<1x8x128xf32>
      tpu.vector_store %arg11[%c0_110, %c0_111, %c0_112], %465 {strides = array<i32>} : memref<2x8x128xf32, #tpu.memory_space<vmem>>, vector<1x8x128xf32>,
      %c1_113 = arith.constant 1 : index
      %c0_114 = arith.constant 0 : index
      %c0_115 = arith.constant 0 : index
      %466 = vector.load %arg11[%c1_113, %c0_114, %c0_115] : memref<2x8x128xf32, #tpu.memory_space<vmem>>, vector<1x8x128xf32>
      %467 = vector.shape_cast %466 : vector<1x8x128xf32> to vector<8x128xf32>
      %468 = vector.shape_cast %443 : vector<8x128xf32> to vector<1x8x128xf32>
      tpu.vector_store %arg11[%c1_113, %c0_114, %c0_115], %468 {strides = array<i32>} : memref<2x8x128xf32, #tpu.memory_space<vmem>>, vector<1x8x128xf32>,
    } else {
    }
    return
  }
  func.func @transform_0(%arg0: i32, %arg1: i32) -> (i32, i32) {
    %c0_i32 = arith.constant 0 : i32
    %c0_i32_0 = arith.constant 0 : i32
    return %arg0, %c0_i32 : i32, i32
  }
  func.func @transform_1(%arg0: i32, %arg1: i32) -> (i32, i32, i32) {
    %c0_i32 = arith.constant 0 : i32
    %c0_i32_0 = arith.constant 0 : i32
    return %arg1, %arg0, %c0_i32 : i32, i32, i32
  }
  func.func @transform_2(%arg0: i32, %arg1: i32) -> (i32, i32) {
    %c0_i32 = arith.constant 0 : i32
    %c0_i32_0 = arith.constant 0 : i32
    %c0_i32_1 = arith.constant 0 : i32
    return %c0_i32, %c0_i32_0 : i32, i32
  }
  func.func @transform_3(%arg0: i32, %arg1: i32) -> (i32, i32) {
    %c0_i32 = arith.constant 0 : i32
    %c0_i32_0 = arith.constant 0 : i32
    %c0_i32_1 = arith.constant 0 : i32
    return %c0_i32, %c0_i32_0 : i32, i32
  }
  func.func @transform_4(%arg0: i32, %arg1: i32) -> (i32, i32) {
    %c0_i32 = arith.constant 0 : i32
    %c0_i32_0 = arith.constant 0 : i32
    %c0_i32_1 = arith.constant 0 : i32
    return %c0_i32, %c0_i32_0 : i32, i32
  }
  func.func @transform_5(%arg0: i32, %arg1: i32) -> (i32, i32) {
    %c0_i32 = arith.constant 0 : i32
    %c0_i32_0 = arith.constant 0 : i32
    %c0_i32_1 = arith.constant 0 : i32
    return %c0_i32, %c0_i32_0 : i32, i32
  }
  func.func @transform_6(%arg0: i32, %arg1: i32) -> (i32, i32) {
    %c0_i32 = arith.constant 0 : i32
    %c0_i32_0 = arith.constant 0 : i32
    %c0_i32_1 = arith.constant 0 : i32
    return %c0_i32, %c0_i32_0 : i32, i32
  }
  func.func @transform_7(%arg0: i32, %arg1: i32) -> (i32, i32, i32) {
    %c0_i32 = arith.constant 0 : i32
    %c0_i32_0 = arith.constant 0 : i32
    return %arg1, %arg0, %c0_i32 : i32, i32, i32
  }
  func.func @transform_8(%arg0: i32, %arg1: i32) -> (i32, i32, i32) {
    %c0_i32 = arith.constant 0 : i32
    %c0_i32_0 = arith.constant 0 : i32
    %c0_i32_1 = arith.constant 0 : i32
    return %c0_i32, %arg0, %c0_i32_0 : i32, i32, i32
  }
  func.func @transform_9(%arg0: i32, %arg1: i32) -> (i32, i32, i32) {
    %c0_i32 = arith.constant 0 : i32
    %c0_i32_0 = arith.constant 0 : i32
    %c0_i32_1 = arith.constant 0 : i32
    return %c0_i32, %arg0, %c0_i32_0 : i32, i32, i32
  }
}

</mosaic_0001>

<llo_original>
// kernel: tpu_custom_call.1
$region0: #{tpu_custom_call.1}
  #allocation0 [shape = 'u32[]', space=smem, size = 0x4, offset = 0x4, fixed_abs, tag = 'smem constant byte address 0x4 - core index']
  #allocation1 [shape = 'u32[144,128]{1,0:T(1,128)}', space=vmem, size = 0x12000, scoped, tag = 'internal scratch']
  #allocation2 [shape = 'f32[64,512]{1,0:T(8,128)}', space=vmem, size = 0x20000, scoped, tag = 'scratch operand']
  #allocation3 [shape = 'f32[8,128]{1,0:T(8,128)}', space=vmem, size = 0x1000, scoped, tag = 'scratch operand']
  #allocation4 [shape = 'f32[8,128]{1,0:T(8,128)}', space=vmem, size = 0x1000, scoped, tag = 'scratch operand']
  #allocation5 [shape = 'f32[8,128]{1,0:T(8,128)}', space=vmem, size = 0x1000, scoped, tag = 'scratch operand']
  #allocation6 [shape = 'f32[8,128]{1,0:T(8,128)}', space=vmem, size = 0x1000, scoped, tag = 'scratch operand']
  %s0 = inlined_call_operand.hbm [shape: s32[8,1], index: 0, kind: input, shape index: {}]
  %s1 = inlined_call_operand.hbm [shape: f32[16,8,128], index: 1, kind: input, shape index: {}]
  %s2 = inlined_call_operand.hbm [shape: f32[128,512], index: 2, kind: input, shape index: {}]
  %s3 = inlined_call_operand.hbm [shape: f32[128,512], index: 3, kind: input, shape index: {}]
  %s4 = inlined_call_operand.hbm [shape: f32[1,512], index: 4, kind: input, shape index: {}]
  %s5 = inlined_call_operand.hbm [shape: f32[256,512], index: 5, kind: input, shape index: {}]
  %s6 = inlined_call_operand.hbm [shape: f32[1,512], index: 6, kind: input, shape index: {}]
  %s7 = inlined_call_operand.hbm [shape: f32[16,8,128], index: 7, kind: output, shape index: {0}]
  %s8 = inlined_call_operand.hbm [shape: f32[2,8,128], index: 8, kind: output, shape index: {1}]
  %s9 = inlined_call_operand.hbm [shape: f32[2,8,128], index: 9, kind: output, shape index: {2}]
  %10 = xla_tuple %s7, %s8, %s9
  %s11 = sld [smem:[#allocation0]]
  $region113: #{tpu_custom_call.1} parent=0
    _
  %s13 = ssub.s32 1, %s11
  %s14 = scalar_select 0, %s13, %s11
  $region1: #{tpu_custom_call.1} parent=0
    #allocation7 [shape = 'u8[4096]{0}', space=vmem, size = 0x1000, scoped, tag = 'input window, operand 0, single buffered']
    #allocation8 [shape = 's32[2]{0}', space=sflag, size = 0x8, scoped, tag = 'scoped memory for tpu_custom_call.1']
    #allocation9 [shape = 's32[2]{0}', space=sflag, size = 0x8, scoped, tag = 'scoped memory for tpu_custom_call.1']
    #allocation10 [shape = 'u8[65536]{0}', space=vmem, size = 0x10000, scoped, tag = 'input window, operand 1']
    #allocation11 [shape = 's32[2]{0}', space=sflag, size = 0x8, scoped, tag = 'scoped memory for tpu_custom_call.1']
    #allocation12 [shape = 'u8[262144]{0}', space=vmem, size = 0x40000, scoped, tag = 'input window, operand 2, single buffered']
    #allocation13 [shape = 'u8[262144]{0}', space=vmem, size = 0x40000, scoped, tag = 'input window, operand 3, single buffered']
    #allocation14 [shape = 's32[1]{0}', space=sflag, size = 0x4, scoped, tag = 'scoped memory for tpu_custom_call.1']
    #allocation15 [shape = 'u8[2048]{0}', space=vmem, size = 0x800, scoped, tag = 'input window, operand 4, single buffered']
    #allocation16 [shape = 'u8[524288]{0}', space=vmem, size = 0x80000, scoped, tag = 'input window, operand 5, single buffered']
    #allocation17 [shape = 's32[1]{0}', space=sflag, size = 0x4, scoped, tag = 'scoped memory for tpu_custom_call.1']
    #allocation18 [shape = 'u8[2048]{0}', space=vmem, size = 0x800, scoped, tag = 'input window, operand 6, single buffered']
    #allocation19 [shape = 'u8[65536]{0}', space=vmem, size = 0x10000, scoped, tag = 'output window, operand 0']
    #allocation20 [shape = 'u8[8192]{0}', space=vmem, size = 0x2000, scoped, tag = 'output window, operand 1, single buffered']
    #allocation21 [shape = 's32[1]{0}', space=sflag, size = 0x4, scoped, tag = 'scoped memory for tpu_custom_call.1']
    #allocation22 [shape = 'u8[8192]{0}', space=vmem, size = 0x2000, scoped, tag = 'output window, operand 2, single buffered']
    %15 = vsyncpa [#allocation8], 0
    %16 = vsyncpa [#allocation11], 0
    %s17 = scalar_lea.sflag [#allocation11], 1
    %18 = vsyncpa %s17, 0
    %19 = vsyncpa [#allocation14], 0
    %20 = vsyncpa [#allocation17], 0
    %21 = vsyncpa [#allocation9], 0
    %s22 = scalar_lea.sflag [#allocation9], 1
    %23 = vsyncpa %s22, 0
    %24 = vsyncpa [#allocation21], 0
    loop: start=0, step=1, limit=4
    $region2: #{tpu_custom_call.1} parent=1 // loop_pre_header
      _
    $region3: #{tpu_custom_call.1} parent=1 // loop_header
      %s26 = sphi 0, %s30
      %p27 = scmp.ge.s32.totalorder %s26, 4
      %s33 = sphi 0, %s45
      %s34 = sphi 0, %s41
      %s35 = sphi 0, %s33
      %s36 = sphi 0, %s34
      %s37 = sphi 0, %s35
      %s38 = sphi 0, %s36
      %s48 = sphi 0, %s50
      %s51 = sphi 0, %s48
      %s52 = sphi 0, %s51
      %s68 = sphi 0, %s52
      %s76 = sphi 0, %s78
      %s79 = sphi 0, %s76
      %s80 = sphi 0, %s79
      %s96 = sphi 0, %s80
      %s100 = sphi 0, %s100
      %s102 = sphi 0, %s100
      %s103 = sphi 0, %s102
      %s117 = sphi 0, %s103
      %s121 = sphi 0, %s121
      %s123 = sphi 0, %s121
      %s124 = sphi 0, %s123
      %s138 = sphi 0, %s124
      %s142 = sphi 0, %s142
      %s144 = sphi 0, %s142
      %s145 = sphi 0, %s144
      %s159 = sphi 0, %s145
      %s163 = sphi 0, %s163
      %s165 = sphi 0, %s163
      %s166 = sphi 0, %s165
      %s180 = sphi 0, %s166
      %s184 = sphi 0, %s184
      %s186 = sphi 0, %s184
      %s187 = sphi 0, %s186
      %s201 = sphi 0, %s187
      %s209 = sphi 0, %s211
      %s212 = sphi 0, %s209
      %s213 = sphi 0, %s212
      %s229 = sphi 0, %s213
      %s235 = sphi 0, %s237
      %s238 = sphi 0, %s235
      %s239 = sphi 0, %s238
      %s255 = sphi 0, %s239
      %s261 = sphi 0, %s263
      %s264 = sphi 0, %s261
      %s265 = sphi 0, %s264
      %s281 = sphi 0, %s265
    $region4: #{tpu_custom_call.1} parent=1 // loop_header_branch
      %29 = sbr.rel (%p27) target = $region8
    $region5: #{tpu_custom_call.1} parent=1 // loop_body
      %s31 = ssub.s32 %s26, 1
      %s32 = ssub.s32 %s26, 2
      %s39 = sadd.s32 1, %s34
      %p40 = scmp.ge.s32.totalorder %s39, 2
      %s41 = scalar_select %p40, 0, %s39
      %s42 = sadd.s32 1, %s33
      %s43 = scalar_select %p40, %s42, %s33
      %p44 = scmp.ge.s32.totalorder %s43, 1
      %s45 = scalar_select %p44, 0, %s43
      %s46 = ssub.s32 %s33, %s45
      %p47 = scmp.eq.s32.totalorder %s46, 0
      %s49 = sadd.s32 %s48, 1
      %s50 = scalar_select %p47, %s48, %s49
      %p53 = pneg %p47
      %p54 = scmp.eq.s32.totalorder %s26, 1
      %p55 = por %p53, %p54
      %p56 = scmp.ne.s32.totalorder %s48, %s51
      %p57 = scmp.eq.s32.totalorder %s26, 0
      %p58 = por %p56, %p57
      %p59 = scmp.ne.s32.totalorder %s48, %s51
      %p60 = scmp.eq.s32.totalorder %s31, 1
      %p61 = por %p59, %p60
      %p62 = scmp.ne.s32.totalorder %s51, %s52
      %p63 = scmp.eq.s32.totalorder %s31, 0
      %p64 = por %p62, %p63
      %p65 = scmp.ne.s32.totalorder %s51, %s52
      %p66 = scmp.eq.s32.totalorder %s32, 1
      %p67 = por %p65, %p66
      %p69 = scmp.ne.s32.totalorder %s52, %s68
      %p70 = scmp.eq.s32.totalorder %s32, 0
      %p71 = por %p69, %p70
      %s72 = ssub.s32 %s34, %s41
      %s73 = ssub.s32 %s33, %s45
      %s74 = sor.u32 %s72, %s73
      %p75 = scmp.eq.s32.totalorder %s74, 0
      %s77 = sadd.s32 %s76, 1
      %s78 = scalar_select %p75, %s76, %s77
      %p81 = pneg %p75
      %p82 = scmp.eq.s32.totalorder %s26, 1
      %p83 = por %p81, %p82
      %p84 = scmp.ne.s32.totalorder %s76, %s79
      %p85 = scmp.eq.s32.totalorder %s26, 0
      %p86 = por %p84, %p85
      %p87 = scmp.ne.s32.totalorder %s76, %s79
      %p88 = scmp.eq.s32.totalorder %s31, 1
      %p89 = por %p87, %p88
      %p90 = scmp.ne.s32.totalorder %s79, %s80
      %p91 = scmp.eq.s32.totalorder %s31, 0
      %p92 = por %p90, %p91
      %p93 = scmp.ne.s32.totalorder %s79, %s80
      %p94 = scmp.eq.s32.totalorder %s32, 1
      %p95 = por %p93, %p94
      %p97 = scmp.ne.s32.totalorder %s80, %s96
      %p98 = scmp.eq.s32.totalorder %s32, 0
      %p99 = por %p97, %p98
      %s101 = sadd.s32 %s100, 1
      %p104 = scmp.eq.s32.totalorder %s26, 1
      %p105 = scmp.ne.s32.totalorder %s100, %s102
      %p106 = scmp.eq.s32.totalorder %s26, 0
      %p107 = por %p105, %p106
      %p108 = scmp.ne.s32.totalorder %s100, %s102
      %p109 = scmp.eq.s32.totalorder %s31, 1
      %p110 = por %p108, %p109
      %p111 = scmp.ne.s32.totalorder %s102, %s103
      %p112 = scmp.eq.s32.totalorder %s31, 0
      %p113 = por %p111, %p112
      %p114 = scmp.ne.s32.totalorder %s102, %s103
      %p115 = scmp.eq.s32.totalorder %s32, 1
      %p116 = por %p114, %p115
      %p118 = scmp.ne.s32.totalorder %s103, %s117
      %p119 = scmp.eq.s32.totalorder %s32, 0
      %p120 = por %p118, %p119
      %s122 = sadd.s32 %s121, 1
      %p125 = scmp.eq.s32.totalorder %s26, 1
      %p126 = scmp.ne.s32.totalorder %s121, %s123
      %p127 = scmp.eq.s32.totalorder %s26, 0
      %p128 = por %p126, %p127
      %p129 = scmp.ne.s32.totalorder %s121, %s123
      %p130 = scmp.eq.s32.totalorder %s31, 1
      %p131 = por %p129, %p130
      %p132 = scmp.ne.s32.totalorder %s123, %s124
      %p133 = scmp.eq.s32.totalorder %s31, 0
      %p134 = por %p132, %p133
      %p135 = scmp.ne.s32.totalorder %s123, %s124
      %p136 = scmp.eq.s32.totalorder %s32, 1
      %p137 = por %p135, %p136
      %p139 = scmp.ne.s32.totalorder %s124, %s138
      %p140 = scmp.eq.s32.totalorder %s32, 0
      %p141 = por %p139, %p140
      %s143 = sadd.s32 %s142, 1
      %p146 = scmp.eq.s32.totalorder %s26, 1
      %p147 = scmp.ne.s32.totalorder %s142, %s144
      %p148 = scmp.eq.s32.totalorder %s26, 0
      %p149 = por %p147, %p148
      %p150 = scmp.ne.s32.totalorder %s142, %s144
      %p151 = scmp.eq.s32.totalorder %s31, 1
      %p152 = por %p150, %p151
      %p153 = scmp.ne.s32.totalorder %s144, %s145
      %p154 = scmp.eq.s32.totalorder %s31, 0
      %p155 = por %p153, %p154
      %p156 = scmp.ne.s32.totalorder %s144, %s145
      %p157 = scmp.eq.s32.totalorder %s32, 1
      %p158 = por %p156, %p157
      %p160 = scmp.ne.s32.totalorder %s145, %s159
      %p161 = scmp.eq.s32.totalorder %s32, 0
      %p162 = por %p160, %p161
      %s164 = sadd.s32 %s163, 1
      %p167 = scmp.eq.s32.totalorder %s26, 1
      %p168 = scmp.ne.s32.totalorder %s163, %s165
      %p169 = scmp.eq.s32.totalorder %s26, 0
      %p170 = por %p168, %p169
      %p171 = scmp.ne.s32.totalorder %s163, %s165
      %p172 = scmp.eq.s32.totalorder %s31, 1
      %p173 = por %p171, %p172
      %p174 = scmp.ne.s32.totalorder %s165, %s166
      %p175 = scmp.eq.s32.totalorder %s31, 0
      %p176 = por %p174, %p175
      %p177 = scmp.ne.s32.totalorder %s165, %s166
      %p178 = scmp.eq.s32.totalorder %s32, 1
      %p179 = por %p177, %p178
      %p181 = scmp.ne.s32.totalorder %s166, %s180
      %p182 = scmp.eq.s32.totalorder %s32, 0
      %p183 = por %p181, %p182
      %s185 = sadd.s32 %s184, 1
      %p188 = scmp.eq.s32.totalorder %s26, 1
      %p189 = scmp.ne.s32.totalorder %s184, %s186
      %p190 = scmp.eq.s32.totalorder %s26, 0
      %p191 = por %p189, %p190
      %p192 = scmp.ne.s32.totalorder %s184, %s186
      %p193 = scmp.eq.s32.totalorder %s31, 1
      %p194 = por %p192, %p193
      %p195 = scmp.ne.s32.totalorder %s186, %s187
      %p196 = scmp.eq.s32.totalorder %s31, 0
      %p197 = por %p195, %p196
      %p198 = scmp.ne.s32.totalorder %s186, %s187
      %p199 = scmp.eq.s32.totalorder %s32, 1
      %p200 = por %p198, %p199
      %p202 = scmp.ne.s32.totalorder %s187, %s201
      %p203 = scmp.eq.s32.totalorder %s32, 0
      %p204 = por %p202, %p203
      %s205 = ssub.s32 %s34, %s41
      %s206 = ssub.s32 %s33, %s45
      %s207 = sor.u32 %s205, %s206
      %p208 = scmp.eq.s32.totalorder %s207, 0
      %s210 = sadd.s32 %s209, 1
      %s211 = scalar_select %p208, %s209, %s210
      %p214 = pneg %p208
      %p215 = scmp.eq.s32.totalorder %s26, 1
      %p216 = por %p214, %p215
      %p217 = scmp.ne.s32.totalorder %s209, %s212
      %p218 = scmp.eq.s32.totalorder %s26, 0
      %p219 = por %p217, %p218
      %p220 = scmp.ne.s32.totalorder %s209, %s212
      %p221 = scmp.eq.s32.totalorder %s31, 1
      %p222 = por %p220, %p221
      %p223 = scmp.ne.s32.totalorder %s212, %s213
      %p224 = scmp.eq.s32.totalorder %s31, 0
      %p225 = por %p223, %p224
      %p226 = scmp.ne.s32.totalorder %s212, %s213
      %p227 = scmp.eq.s32.totalorder %s32, 1
      %p228 = por %p226, %p227
      %p230 = scmp.ne.s32.totalorder %s213, %s229
      %p231 = scmp.eq.s32.totalorder %s32, 0
      %p232 = por %p230, %p231
      %s233 = ssub.s32 %s33, %s45
      %p234 = scmp.eq.s32.totalorder %s233, 0
      %s236 = sadd.s32 %s235, 1
      %s237 = scalar_select %p234, %s235, %s236
      %p240 = pneg %p234
      %p241 = scmp.eq.s32.totalorder %s26, 1
      %p242 = por %p240, %p241
      %p243 = scmp.ne.s32.totalorder %s235, %s238
      %p244 = scmp.eq.s32.totalorder %s26, 0
      %p245 = por %p243, %p244
      %p246 = scmp.ne.s32.totalorder %s235, %s238
      %p247 = scmp.eq.s32.totalorder %s31, 1
      %p248 = por %p246, %p247
      %p249 = scmp.ne.s32.totalorder %s238, %s239
      %p250 = scmp.eq.s32.totalorder %s31, 0
      %p251 = por %p249, %p250
      %p252 = scmp.ne.s32.totalorder %s238, %s239
      %p253 = scmp.eq.s32.totalorder %s32, 1
      %p254 = por %p252, %p253
      %p256 = scmp.ne.s32.totalorder %s239, %s255
      %p257 = scmp.eq.s32.totalorder %s32, 0
      %p258 = por %p256, %p257
      %s259 = ssub.s32 %s33, %s45
      %p260 = scmp.eq.s32.totalorder %s259, 0
      %s262 = sadd.s32 %s261, 1
      %s263 = scalar_select %p260, %s261, %s262
      %p266 = pneg %p260
      %p267 = scmp.eq.s32.totalorder %s26, 1
      %p268 = por %p266, %p267
      %p269 = scmp.ne.s32.totalorder %s261, %s264
      %p270 = scmp.eq.s32.totalorder %s26, 0
      %p271 = por %p269, %p270
      %p272 = scmp.ne.s32.totalorder %s261, %s264
      %p273 = scmp.eq.s32.totalorder %s31, 1
      %p274 = por %p272, %p273
      %p275 = scmp.ne.s32.totalorder %s264, %s265
      %p276 = scmp.eq.s32.totalorder %s31, 0
      %p277 = por %p275, %p276
      %p278 = scmp.ne.s32.totalorder %s264, %s265
      %p279 = scmp.eq.s32.totalorder %s32, 1
      %p280 = por %p278, %p279
      %p282 = scmp.ne.s32.totalorder %s265, %s281
      %p283 = scmp.eq.s32.totalorder %s32, 0
      %p284 = por %p282, %p283
      %p285 = scmp.le.s32.totalorder 1, %s26
      %p286 = scmp.lt.s32.totalorder %s26, 3
      %p287 = pnand %p285, %p286
      %p288 = pneg %p287
      // Predicated region
      $region9: #{tpu_custom_call.1} parent=5 // pred_check
        _
      $region10: #{tpu_custom_call.1} parent=5 // pred_check_branch
        %290 = sbr.rel (%p287) target = $region12
      $region11: #{tpu_custom_call.1} parent=5 // pred_region
        %s291 = ssub.s32 %s26, 1
        // Predicated region
        $region13: #{tpu_custom_call.1} parent=11 // pred_check
          %p292 = pneg %p64
        $region14: #{tpu_custom_call.1} parent=11 // pred_check_branch
          %294 = sbr.rel (%p292) target = $region16
        $region15: #{tpu_custom_call.1} parent=11 // pred_region
          %s296 = ssub.s32 128, 128
          %297 = vsyncadd [#allocation8], %s296
          %s298 = smul.addr %s35, 128
          %s299 = scalar_lea.hbm %s0, %s298
          %s301 = sshll.u32 [#allocation7], 4
          %s302 = int_to_ptr.vmem [resolvable:$true] %s301
          %304 = dma.hbm_to_vmem [thread:$0]  %s299, 128, %s302, [#allocation8]
        $region16: #{tpu_custom_call.1} parent=11 // pred_fallthru
          _
        // Predicated region
        $region17: #{tpu_custom_call.1} parent=11 // pred_check
          %p305 = pneg %p113
        $region18: #{tpu_custom_call.1} parent=11 // pred_check_branch
          %307 = sbr.rel (%p305) target = $region20
        $region19: #{tpu_custom_call.1} parent=11 // pred_region
          %s309 = ssub.s32 8192, 8192
          %310 = vsyncadd [#allocation11], %s309
          %s311 = sshll.u32 [#allocation12], 4
          %s312 = int_to_ptr.vmem [resolvable:$true] %s311
          %317 = dma.hbm_to_vmem [thread:$0]  %s2, 8192, %s312, [#allocation11], 512, 512, 32
        $region20: #{tpu_custom_call.1} parent=11 // pred_fallthru
          _
        // Predicated region
        $region21: #{tpu_custom_call.1} parent=11 // pred_check
          %p318 = pneg %p134
        $region22: #{tpu_custom_call.1} parent=11 // pred_check_branch
          %320 = sbr.rel (%p318) target = $region24
        $region23: #{tpu_custom_call.1} parent=11 // pred_region
          %s322 = ssub.s32 8192, 8192
          %323 = vsyncadd [#allocation14], %s322
          %s324 = sshll.u32 [#allocation13], 4
          %s325 = int_to_ptr.vmem [resolvable:$true] %s324
          %330 = dma.hbm_to_vmem [thread:$0]  %s3, 8192, %s325, [#allocation14], 512, 512, 32
        $region24: #{tpu_custom_call.1} parent=11 // pred_fallthru
          _
        // Predicated region
        $region25: #{tpu_custom_call.1} parent=11 // pred_check
          %p331 = pneg %p155
        $region26: #{tpu_custom_call.1} parent=11 // pred_check_branch
          %333 = sbr.rel (%p331) target = $region28
        $region27: #{tpu_custom_call.1} parent=11 // pred_region
          %s335 = ssub.s32 64, 64
          %336 = vsyncadd [#allocation14], %s335
          %s338 = sshll.u32 [#allocation15], 4
          %s339 = int_to_ptr.vmem [resolvable:$true] %s338
          %341 = dma.hbm_to_vmem [thread:$0]  %s4, 64, %s339, [#allocation14]
        $region28: #{tpu_custom_call.1} parent=11 // pred_fallthru
          _
        // Predicated region
        $region29: #{tpu_custom_call.1} parent=11 // pred_check
          %p342 = pneg %p176
        $region30: #{tpu_custom_call.1} parent=11 // pred_check_branch
          %344 = sbr.rel (%p342) target = $region32
        $region31: #{tpu_custom_call.1} parent=11 // pred_region
          %s346 = ssub.s32 16384, 16384
          %347 = vsyncadd [#allocation17], %s346
          %s348 = sshll.u32 [#allocation16], 4
          %s349 = int_to_ptr.vmem [resolvable:$true] %s348
          %354 = dma.hbm_to_vmem [thread:$0]  %s5, 16384, %s349, [#allocation17], 512, 512, 32
        $region32: #{tpu_custom_call.1} parent=11 // pred_fallthru
          _
        // Predicated region
        $region33: #{tpu_custom_call.1} parent=11 // pred_check
          %p355 = pneg %p197
        $region34: #{tpu_custom_call.1} parent=11 // pred_check_branch
          %357 = sbr.rel (%p355) target = $region36
        $region35: #{tpu_custom_call.1} parent=11 // pred_region
          %s359 = ssub.s32 64, 64
          %360 = vsyncadd [#allocation17], %s359
          %s362 = sshll.u32 [#allocation18], 4
          %s363 = int_to_ptr.vmem [resolvable:$true] %s362
          %365 = dma.hbm_to_vmem [thread:$0]  %s6, 64, %s363, [#allocation17]
        $region36: #{tpu_custom_call.1} parent=11 // pred_fallthru
          _
      $region12: #{tpu_custom_call.1} parent=5 // pred_fallthru
        _
      %p366 = scmp.lt.s32.totalorder %s26, 2
      // Predicated region
      $region37: #{tpu_custom_call.1} parent=5 // pred_check
        %p367 = pneg %p366
      $region38: #{tpu_custom_call.1} parent=5 // pred_check_branch
        %369 = sbr.rel (%p367) target = $region40
      $region39: #{tpu_custom_call.1} parent=5 // pred_region
        // Predicated region
        $region41: #{tpu_custom_call.1} parent=39 // pred_check
          %p370 = pneg %p86
        $region42: #{tpu_custom_call.1} parent=39 // pred_check_branch
          %372 = sbr.rel (%p370) target = $region44
        $region43: #{tpu_custom_call.1} parent=39 // pred_region
          %s373 = sand.u32 %s26, 1
          %s374 = scalar_lea.sflag [#allocation11], %s373
          %s375 = sand.u32 %s76, 1
          %s376 = smul.addr %s375, 64
          %s377 = scalar_lea.vmem [#allocation10], %s376
          %s378 = smul.u32 8, %s34
          %s380 = ssub.s32 1024, 1024
          %381 = vsyncadd %s374, %s380
          %s382 = sadd.s32 %s33, %s378
          %s383 = smul.addr %s382, 128
          %s384 = scalar_lea.hbm %s1, %s383
          %s385 = sshll.u32 %s377, 4
          %s386 = int_to_ptr.vmem [resolvable:$true] %s385
          %391 = dma.hbm_to_vmem [thread:$0]  %s384, 1024, %s386, %s374, 128, 128, 8
        $region44: #{tpu_custom_call.1} parent=39 // pred_fallthru
          _
      $region40: #{tpu_custom_call.1} parent=5 // pred_fallthru
        _
      %p392 = scmp.le.s32.totalorder 1, %s26
      %p393 = scmp.lt.s32.totalorder %s26, 3
      %p394 = pnand %p392, %p393
      %p395 = pneg %p394
      // Predicated region
      $region45: #{tpu_custom_call.1} parent=5 // pred_check
        _
      $region46: #{tpu_custom_call.1} parent=5 // pred_check_branch
        %397 = sbr.rel (%p394) target = $region48
      $region47: #{tpu_custom_call.1} parent=5 // pred_region
        %s398 = ssub.s32 %s26, 1
        // Predicated region
        $region49: #{tpu_custom_call.1} parent=47 // pred_check
          %p399 = pneg %p64
        $region50: #{tpu_custom_call.1} parent=47 // pred_check_branch
          %401 = sbr.rel (%p399) target = $region52
        $region51: #{tpu_custom_call.1} parent=47 // pred_region
          %402 = dma.done [#allocation8], 128
        $region52: #{tpu_custom_call.1} parent=47 // pred_fallthru
          _
        %s403 = sand.u32 %s31, 1
        %s404 = scalar_lea.sflag [#allocation11], %s403
        %s405 = sand.u32 %s79, 1
        %s406 = smul.addr %s405, 64
        %s407 = scalar_lea.vmem [#allocation10], %s406
        // Predicated region
        $region53: #{tpu_custom_call.1} parent=47 // pred_check
          %p408 = pneg %p92
        $region54: #{tpu_custom_call.1} parent=47 // pred_check_branch
          %410 = sbr.rel (%p408) target = $region56
        $region55: #{tpu_custom_call.1} parent=47 // pred_region
          %411 = dma.done %s404, 1024
        $region56: #{tpu_custom_call.1} parent=47 // pred_fallthru
          _
        // Predicated region
        $region57: #{tpu_custom_call.1} parent=47 // pred_check
          %p412 = pneg %p113
        $region58: #{tpu_custom_call.1} parent=47 // pred_check_branch
          %414 = sbr.rel (%p412) target = $region60
        $region59: #{tpu_custom_call.1} parent=47 // pred_region
          %415 = dma.done [#allocation11], 8192
        $region60: #{tpu_custom_call.1} parent=47 // pred_fallthru
          _
        // Predicated region
        $region61: #{tpu_custom_call.1} parent=47 // pred_check
          %p416 = pneg %p134
        $region62: #{tpu_custom_call.1} parent=47 // pred_check_branch
          %418 = sbr.rel (%p416) target = $region64
        $region63: #{tpu_custom_call.1} parent=47 // pred_region
          %419 = dma.done [#allocation14], 8192
        $region64: #{tpu_custom_call.1} parent=47 // pred_fallthru
          _
        // Predicated region
        $region65: #{tpu_custom_call.1} parent=47 // pred_check
          %p420 = pneg %p155
        $region66: #{tpu_custom_call.1} parent=47 // pred_check_branch
          %422 = sbr.rel (%p420) target = $region68
        $region67: #{tpu_custom_call.1} parent=47 // pred_region
          %423 = dma.done [#allocation14], 64
        $region68: #{tpu_custom_call.1} parent=47 // pred_fallthru
          _
        // Predicated region
        $region69: #{tpu_custom_call.1} parent=47 // pred_check
          %p424 = pneg %p176
        $region70: #{tpu_custom_call.1} parent=47 // pred_check_branch
          %426 = sbr.rel (%p424) target = $region72
        $region71: #{tpu_custom_call.1} parent=47 // pred_region
          %427 = dma.done [#allocation17], 16384
        $region72: #{tpu_custom_call.1} parent=47 // pred_fallthru
          _
        // Predicated region
        $region73: #{tpu_custom_call.1} parent=47 // pred_check
          %p428 = pneg %p197
        $region74: #{tpu_custom_call.1} parent=47 // pred_check_branch
          %430 = sbr.rel (%p428) target = $region76
        $region75: #{tpu_custom_call.1} parent=47 // pred_region
          %431 = dma.done [#allocation17], 64
        $region76: #{tpu_custom_call.1} parent=47 // pred_fallthru
          _
        %p432 = pneg %p64
        %p433 = pneg %p61
        %s434 = sand.u32 %s31, 1
        %s435 = scalar_lea.sflag [#allocation11], %s434
        %s436 = sand.u32 %s79, 1
        %s437 = smul.addr %s436, 64
        %s438 = scalar_lea.vmem [#allocation10], %s437
        %p439 = pneg %p92
        %p440 = pneg %p89
        %p441 = pneg %p113
        %p442 = pneg %p110
        %p443 = pneg %p134
        %p444 = pneg %p131
        %p445 = pneg %p155
        %p446 = pneg %p152
        %p447 = pneg %p176
        %p448 = pneg %p173
        %p449 = pneg %p197
        %p450 = pneg %p194
        %p451 = pneg %p225
        %p452 = pneg %p222
        %s453 = sand.u32 %s212, 1
        %s454 = scalar_lea.sflag [#allocation9], %s453
        %s455 = sand.u32 %s212, 1
        %s456 = smul.addr %s455, 64
        %s457 = scalar_lea.vmem [#allocation19], %s456
        %p458 = pneg %p251
        %p459 = pneg %p248
        %p460 = pneg %p277
        %p461 = pneg %p274
        %s462 = smul.u32 8, %s36
        %s463 = smul.u32 8, %s36
        %p464 = scmp.eq.s32.totalorder %s36, 0
        // Predicated region
        $region77: #{tpu_custom_call.1} parent=47 // pred_check
          %p465 = pneg %p464
        $region78: #{tpu_custom_call.1} parent=47 // pred_check_branch
          %467 = sbr.rel (%p465) target = $region80
        $region79: #{tpu_custom_call.1} parent=47 // pred_region
          %468 = vst [vmem:[#allocation3] sm:$0xff] 0.0
          %469 = vst [vmem:[#allocation4] sm:$0xff] 0.0
          %470 = vst [vmem:[#allocation5] sm:$0xff] 0.0
          %471 = vst [vmem:[#allocation6] sm:$0xff] 0.0
        $region80: #{tpu_custom_call.1} parent=47 // pred_fallthru
          _
        %v472 = vld [vmem:[#allocation7] sm:$0xff]
        %v473 = vld [vmem:[#allocation13] sm:$0xff]
        %v474 = vld [vmem:[#allocation13 + $0x8] sm:$0xff]
        %v475 = vld [vmem:[#allocation13 + $0x10] sm:$0xff]
        %v476 = vld [vmem:[#allocation13 + $0x18] sm:$0xff]
        %v477 = vld [vmem:[#allocation13 + $0x20] sm:$0xff]
        %v478 = vld [vmem:[#allocation13 + $0x28] sm:$0xff]
        %v479 = vld [vmem:[#allocation13 + $0x30] sm:$0xff]
        %v480 = vld [vmem:[#allocation13 + $0x38] sm:$0xff]
        %v481 = vld [vmem:[#allocation13 + $0x40] sm:$0xff]
        %v482 = vld [vmem:[#allocation13 + $0x48] sm:$0xff]
        %v483 = vld [vmem:[#allocation13 + $0x50] sm:$0xff]
        %v484 = vld [vmem:[#allocation13 + $0x58] sm:$0xff]
        %v485 = vld [vmem:[#allocation13 + $0x60] sm:$0xff]
        %v486 = vld [vmem:[#allocation13 + $0x68] sm:$0xff]
        %v487 = vld [vmem:[#allocation13 + $0x70] sm:$0xff]
        %v488 = vld [vmem:[#allocation13 + $0x78] sm:$0xff]
        %v489 = vld [vmem:[#allocation13 + $0x80] sm:$0xff]
        %v490 = vld [vmem:[#allocation13 + $0x88] sm:$0xff]
        %v491 = vld [vmem:[#allocation13 + $0x90] sm:$0xff]
        %v492 = vld [vmem:[#allocation13 + $0x98] sm:$0xff]
        %v493 = vld [vmem:[#allocation13 + $0xa0] sm:$0xff]
        %v494 = vld [vmem:[#allocation13 + $0xa8] sm:$0xff]
        %v495 = vld [vmem:[#allocation13 + $0xb0] sm:$0xff]
        %v496 = vld [vmem:[#allocation13 + $0xb8] sm:$0xff]
        %v497 = vld [vmem:[#allocation13 + $0xc0] sm:$0xff]
        %v498 = vld [vmem:[#allocation13 + $0xc8] sm:$0xff]
        %v499 = vld [vmem:[#allocation13 + $0xd0] sm:$0xff]
        %v500 = vld [vmem:[#allocation13 + $0xd8] sm:$0xff]
        %v501 = vld [vmem:[#allocation13 + $0xe0] sm:$0xff]
        %v502 = vld [vmem:[#allocation13 + $0xe8] sm:$0xff]
        %v503 = vld [vmem:[#allocation13 + $0xf0] sm:$0xff]
        %v504 = vld [vmem:[#allocation13 + $0xf8] sm:$0xff]
        %v505 = vld [vmem:[#allocation13 + $0x100] sm:$0xff]
        %v506 = vld [vmem:[#allocation13 + $0x108] sm:$0xff]
        %v507 = vld [vmem:[#allocation13 + $0x110] sm:$0xff]
        %v508 = vld [vmem:[#allocation13 + $0x118] sm:$0xff]
        %v509 = vld [vmem:[#allocation13 + $0x120] sm:$0xff]
        %v510 = vld [vmem:[#allocation13 + $0x128] sm:$0xff]
        %v511 = vld [vmem:[#allocation13 + $0x130] sm:$0xff]
        %v512 = vld [vmem:[#allocation13 + $0x138] sm:$0xff]
        %v513 = vld [vmem:[#allocation13 + $0x140] sm:$0xff]
        %v514 = vld [vmem:[#allocation13 + $0x148] sm:$0xff]
        %v515 = vld [vmem:[#allocation13 + $0x150] sm:$0xff]
        %v516 = vld [vmem:[#allocation13 + $0x158] sm:$0xff]
        %v517 = vld [vmem:[#allocation13 + $0x160] sm:$0xff]
        %v518 = vld [vmem:[#allocation13 + $0x168] sm:$0xff]
        %v519 = vld [vmem:[#allocation13 + $0x170] sm:$0xff]
        %v520 = vld [vmem:[#allocation13 + $0x178] sm:$0xff]
        %v521 = vld [vmem:[#allocation13 + $0x180] sm:$0xff]
        %v522 = vld [vmem:[#allocation13 + $0x188] sm:$0xff]
        %v523 = vld [vmem:[#allocation13 + $0x190] sm:$0xff]
        %v524 = vld [vmem:[#allocation13 + $0x198] sm:$0xff]
        %v525 = vld [vmem:[#allocation13 + $0x1a0] sm:$0xff]
        %v526 = vld [vmem:[#allocation13 + $0x1a8] sm:$0xff]
        %v527 = vld [vmem:[#allocation13 + $0x1b0] sm:$0xff]
        %v528 = vld [vmem:[#allocation13 + $0x1b8] sm:$0xff]
        %v529 = vld [vmem:[#allocation13 + $0x1c0] sm:$0xff]
        %v530 = vld [vmem:[#allocation13 + $0x1c8] sm:$0xff]
        %v531 = vld [vmem:[#allocation13 + $0x1d0] sm:$0xff]
        %v532 = vld [vmem:[#allocation13 + $0x1d8] sm:$0xff]
        %v533 = vld [vmem:[#allocation13 + $0x1e0] sm:$0xff]
        %v534 = vld [vmem:[#allocation13 + $0x1e8] sm:$0xff]
        %v535 = vld [vmem:[#allocation13 + $0x1f0] sm:$0xff]
        %v536 = vld [vmem:[#allocation13 + $0x1f8] sm:$0xff]
        %v537 = vld [vmem:[#allocation16] sm:$0xff]
        %v538 = vld [vmem:[#allocation16 + $0x8] sm:$0xff]
        %v539 = vld [vmem:[#allocation16 + $0x10] sm:$0xff]
        %v540 = vld [vmem:[#allocation16 + $0x18] sm:$0xff]
        %v541 = vld [vmem:[#allocation16 + $0x20] sm:$0xff]
        %v542 = vld [vmem:[#allocation16 + $0x28] sm:$0xff]
        %v543 = vld [vmem:[#allocation16 + $0x30] sm:$0xff]
        %v544 = vld [vmem:[#allocation16 + $0x38] sm:$0xff]
        %v545 = vld [vmem:[#allocation16 + $0x40] sm:$0xff]
        %v546 = vld [vmem:[#allocation16 + $0x48] sm:$0xff]
        %v547 = vld [vmem:[#allocation16 + $0x50] sm:$0xff]
        %v548 = vld [vmem:[#allocation16 + $0x58] sm:$0xff]
        %v549 = vld [vmem:[#allocation16 + $0x60] sm:$0xff]
        %v550 = vld [vmem:[#allocation16 + $0x68] sm:$0xff]
        %v551 = vld [vmem:[#allocation16 + $0x70] sm:$0xff]
        %v552 = vld [vmem:[#allocation16 + $0x78] sm:$0xff]
        %v553 = vld [vmem:[#allocation16 + $0x80] sm:$0xff]
        %v554 = vld [vmem:[#allocation16 + $0x88] sm:$0xff]
        %v555 = vld [vmem:[#allocation16 + $0x90] sm:$0xff]
        %v556 = vld [vmem:[#allocation16 + $0x98] sm:$0xff]
        %v557 = vld [vmem:[#allocation16 + $0xa0] sm:$0xff]
        %v558 = vld [vmem:[#allocation16 + $0xa8] sm:$0xff]
        %v559 = vld [vmem:[#allocation16 + $0xb0] sm:$0xff]
        %v560 = vld [vmem:[#allocation16 + $0xb8] sm:$0xff]
        %v561 = vld [vmem:[#allocation16 + $0xc0] sm:$0xff]
        %v562 = vld [vmem:[#allocation16 + $0xc8] sm:$0xff]
        %v563 = vld [vmem:[#allocation16 + $0xd0] sm:$0xff]
        %v564 = vld [vmem:[#allocation16 + $0xd8] sm:$0xff]
        %v565 = vld [vmem:[#allocation16 + $0xe0] sm:$0xff]
        %v566 = vld [vmem:[#allocation16 + $0xe8] sm:$0xff]
        %v567 = vld [vmem:[#allocation16 + $0xf0] sm:$0xff]
        %v568 = vld [vmem:[#allocation16 + $0xf8] sm:$0xff]
        %v569 = vld [vmem:[#allocation16 + $0x100] sm:$0xff]
        %v570 = vld [vmem:[#allocation16 + $0x108] sm:$0xff]
        %v571 = vld [vmem:[#allocation16 + $0x110] sm:$0xff]
        %v572 = vld [vmem:[#allocation16 + $0x118] sm:$0xff]
        %v573 = vld [vmem:[#allocation16 + $0x120] sm:$0xff]
        %v574 = vld [vmem:[#allocation16 + $0x128] sm:$0xff]
        %v575 = vld [vmem:[#allocation16 + $0x130] sm:$0xff]
        %v576 = vld [vmem:[#allocation16 + $0x138] sm:$0xff]
        %v577 = vld [vmem:[#allocation16 + $0x140] sm:$0xff]
        %v578 = vld [vmem:[#allocation16 + $0x148] sm:$0xff]
        %v579 = vld [vmem:[#allocation16 + $0x150] sm:$0xff]
        %v580 = vld [vmem:[#allocation16 + $0x158] sm:$0xff]
        %v581 = vld [vmem:[#allocation16 + $0x160] sm:$0xff]
        %v582 = vld [vmem:[#allocation16 + $0x168] sm:$0xff]
        %v583 = vld [vmem:[#allocation16 + $0x170] sm:$0xff]
        %v584 = vld [vmem:[#allocation16 + $0x178] sm:$0xff]
        %v585 = vld [vmem:[#allocation16 + $0x180] sm:$0xff]
        %v586 = vld [vmem:[#allocation16 + $0x188] sm:$0xff]
        %v587 = vld [vmem:[#allocation16 + $0x190] sm:$0xff]
        %v588 = vld [vmem:[#allocation16 + $0x198] sm:$0xff]
        %v589 = vld [vmem:[#allocation16 + $0x1a0] sm:$0xff]
        %v590 = vld [vmem:[#allocation16 + $0x1a8] sm:$0xff]
        %v591 = vld [vmem:[#allocation16 + $0x1b0] sm:$0xff]
        %v592 = vld [vmem:[#allocation16 + $0x1b8] sm:$0xff]
        %v593 = vld [vmem:[#allocation16 + $0x1c0] sm:$0xff]
        %v594 = vld [vmem:[#allocation16 + $0x1c8] sm:$0xff]
        %v595 = vld [vmem:[#allocation16 + $0x1d0] sm:$0xff]
        %v596 = vld [vmem:[#allocation16 + $0x1d8] sm:$0xff]
        %v597 = vld [vmem:[#allocation16 + $0x1e0] sm:$0xff]
        %v598 = vld [vmem:[#allocation16 + $0x1e8] sm:$0xff]
        %v599 = vld [vmem:[#allocation16 + $0x1f0] sm:$0xff]
        %v600 = vld [vmem:[#allocation16 + $0x1f8] sm:$0xff]
        %v601 = vld [vmem:[#allocation16 + $0x200] sm:$0xff]
        %v602 = vld [vmem:[#allocation16 + $0x208] sm:$0xff]
        %v603 = vld [vmem:[#allocation16 + $0x210] sm:$0xff]
        %v604 = vld [vmem:[#allocation16 + $0x218] sm:$0xff]
        %v605 = vld [vmem:[#allocation16 + $0x220] sm:$0xff]
        %v606 = vld [vmem:[#allocation16 + $0x228] sm:$0xff]
        %v607 = vld [vmem:[#allocation16 + $0x230] sm:$0xff]
        %v608 = vld [vmem:[#allocation16 + $0x238] sm:$0xff]
        %v609 = vld [vmem:[#allocation16 + $0x240] sm:$0xff]
        %v610 = vld [vmem:[#allocation16 + $0x248] sm:$0xff]
        %v611 = vld [vmem:[#allocation16 + $0x250] sm:$0xff]
        %v612 = vld [vmem:[#allocation16 + $0x258] sm:$0xff]
        %v613 = vld [vmem:[#allocation16 + $0x260] sm:$0xff]
        %v614 = vld [vmem:[#allocation16 + $0x268] sm:$0xff]
        %v615 = vld [vmem:[#allocation16 + $0x270] sm:$0xff]
        %v616 = vld [vmem:[#allocation16 + $0x278] sm:$0xff]
        %v617 = vld [vmem:[#allocation16 + $0x280] sm:$0xff]
        %v618 = vld [vmem:[#allocation16 + $0x288] sm:$0xff]
        %v619 = vld [vmem:[#allocation16 + $0x290] sm:$0xff]
        %v620 = vld [vmem:[#allocation16 + $0x298] sm:$0xff]
        %v621 = vld [vmem:[#allocation16 + $0x2a0] sm:$0xff]
        %v622 = vld [vmem:[#allocation16 + $0x2a8] sm:$0xff]
        %v623 = vld [vmem:[#allocation16 + $0x2b0] sm:$0xff]
        %v624 = vld [vmem:[#allocation16 + $0x2b8] sm:$0xff]
        %v625 = vld [vmem:[#allocation16 + $0x2c0] sm:$0xff]
        %v626 = vld [vmem:[#allocation16 + $0x2c8] sm:$0xff]
        %v627 = vld [vmem:[#allocation16 + $0x2d0] sm:$0xff]
        %v628 = vld [vmem:[#allocation16 + $0x2d8] sm:$0xff]
        %v629 = vld [vmem:[#allocation16 + $0x2e0] sm:$0xff]
        %v630 = vld [vmem:[#allocation16 + $0x2e8] sm:$0xff]
        %v631 = vld [vmem:[#allocation16 + $0x2f0] sm:$0xff]
        %v632 = vld [vmem:[#allocation16 + $0x2f8] sm:$0xff]
        %v633 = vld [vmem:[#allocation16 + $0x300] sm:$0xff]
        %v634 = vld [vmem:[#allocation16 + $0x308] sm:$0xff]
        %v635 = vld [vmem:[#allocation16 + $0x310] sm:$0xff]
        %v636 = vld [vmem:[#allocation16 + $0x318] sm:$0xff]
        %v637 = vld [vmem:[#allocation16 + $0x320] sm:$0xff]
        %v638 = vld [vmem:[#allocation16 + $0x328] sm:$0xff]
        %v639 = vld [vmem:[#allocation16 + $0x330] sm:$0xff]
        %v640 = vld [vmem:[#allocation16 + $0x338] sm:$0xff]
        %v641 = vld [vmem:[#allocation16 + $0x340] sm:$0xff]
        %v642 = vld [vmem:[#allocation16 + $0x348] sm:$0xff]
        %v643 = vld [vmem:[#allocation16 + $0x350] sm:$0xff]
        %v644 = vld [vmem:[#allocation16 + $0x358] sm:$0xff]
        %v645 = vld [vmem:[#allocation16 + $0x360] sm:$0xff]
        %v646 = vld [vmem:[#allocation16 + $0x368] sm:$0xff]
        %v647 = vld [vmem:[#allocation16 + $0x370] sm:$0xff]
        %v648 = vld [vmem:[#allocation16 + $0x378] sm:$0xff]
        %v649 = vld [vmem:[#allocation16 + $0x380] sm:$0xff]
        %v650 = vld [vmem:[#allocation16 + $0x388] sm:$0xff]
        %v651 = vld [vmem:[#allocation16 + $0x390] sm:$0xff]
        %v652 = vld [vmem:[#allocation16 + $0x398] sm:$0xff]
        %v653 = vld [vmem:[#allocation16 + $0x3a0] sm:$0xff]
        %v654 = vld [vmem:[#allocation16 + $0x3a8] sm:$0xff]
        %v655 = vld [vmem:[#allocation16 + $0x3b0] sm:$0xff]
        %v656 = vld [vmem:[#allocation16 + $0x3b8] sm:$0xff]
        %v657 = vld [vmem:[#allocation16 + $0x3c0] sm:$0xff]
        %v658 = vld [vmem:[#allocation16 + $0x3c8] sm:$0xff]
        %v659 = vld [vmem:[#allocation16 + $0x3d0] sm:$0xff]
        %v660 = vld [vmem:[#allocation16 + $0x3d8] sm:$0xff]
        %v661 = vld [vmem:[#allocation16 + $0x3e0] sm:$0xff]
        %v662 = vld [vmem:[#allocation16 + $0x3e8] sm:$0xff]
        %v663 = vld [vmem:[#allocation16 + $0x3f0] sm:$0xff]
        %v664 = vld [vmem:[#allocation16 + $0x3f8] sm:$0xff]
        %s665 = smul.u32 %s36, 8
        %v666 = vld [vmem:[#allocation18] sm:$0xf]
        %v668 = vlaneseq
        %v669 = vshrl.u32 %v668, 7
        %v670 = vsub.s32 0, %v669
        %v671 = vrot.slane %v666, %v670
        %v672 = vlaneseq
        %v673 = vshrl.u32 %v672, 7
        %v674 = vsub.s32 1, %v673
        %v675 = vrot.slane %v666, %v674
        %v676 = vlaneseq
        %v677 = vshrl.u32 %v676, 7
        %v678 = vsub.s32 2, %v677
        %v679 = vrot.slane %v666, %v678
        %v680 = vlaneseq
        %v681 = vshrl.u32 %v680, 7
        %v682 = vsub.s32 3, %v681
        %v683 = vrot.slane %v666, %v682
        %v688 = vlaneseq
        %v689 = vand.u32 %v688, 127
        %v690 = vadd.s32 %v689, 128
        %v691 = vadd.s32 %v689, 256
        %v692 = vadd.s32 %v689, 384
        %vm693 = vcmp.ge.s32.totalorder %v689, 256
        %vm694 = vcmp.ge.s32.totalorder %v690, 256
        %vm695 = vcmp.ge.s32.totalorder %v691, 256
        %vm696 = vcmp.ge.s32.totalorder %v692, 256
        %vm697 = vcmp.lt.s32.totalorder %v689, 384
        %vm698 = vcmp.lt.s32.totalorder %v690, 384
        %vm699 = vcmp.lt.s32.totalorder %v691, 384
        %vm700 = vcmp.lt.s32.totalorder %v692, 384
        %vm701 = vmand %vm693, %vm697
        %vm702 = vmand %vm694, %vm698
        %vm703 = vmand %vm695, %vm699
        %vm704 = vmand %vm696, %vm700
        %v705 = vsel %vm701, 1.0, 0.5
        %v706 = vsel %vm702, 1.0, 0.5
        %v707 = vsel %vm703, 1.0, 0.5
        %v708 = vsel %vm704, 1.0, 0.5
        %v709 = vsel %vm701, 0.0, 0.5
        %v710 = vsel %vm702, 0.0, 0.5
        %v711 = vsel %vm703, 0.0, 0.5
        %v712 = vsel %vm704, 0.0, 0.5
        %v713 = vld [vmem:[%s407] sm:$0xff]
        %v714 = vld [vmem:[%s407 + $0x8] sm:$0xff]
        %v715 = vld [vmem:[%s407 + $0x10] sm:$0xff]
        %v716 = vld [vmem:[%s407 + $0x18] sm:$0xff]
        %v717 = vld [vmem:[%s407 + $0x20] sm:$0xff]
        %v718 = vld [vmem:[%s407 + $0x28] sm:$0xff]
        %v719 = vld [vmem:[%s407 + $0x30] sm:$0xff]
        %v720 = vld [vmem:[%s407 + $0x38] sm:$0xff]
        %v721 = vld [vmem:[#allocation12] sm:$0xff]
        %v722 = vld [vmem:[#allocation12 + $0x8] sm:$0xff]
        %v723 = vld [vmem:[#allocation12 + $0x10] sm:$0xff]
        %v724 = vld [vmem:[#allocation12 + $0x18] sm:$0xff]
        %v725 = vld [vmem:[#allocation12 + $0x20] sm:$0xff]
        %v726 = vld [vmem:[#allocation12 + $0x28] sm:$0xff]
        %v727 = vld [vmem:[#allocation12 + $0x30] sm:$0xff]
        %v728 = vld [vmem:[#allocation12 + $0x38] sm:$0xff]
        %v729 = vld [vmem:[#allocation12 + $0x40] sm:$0xff]
        %v730 = vld [vmem:[#allocation12 + $0x48] sm:$0xff]
        %v731 = vld [vmem:[#allocation12 + $0x50] sm:$0xff]
        %v732 = vld [vmem:[#allocation12 + $0x58] sm:$0xff]
        %v733 = vld [vmem:[#allocation12 + $0x60] sm:$0xff]
        %v734 = vld [vmem:[#allocation12 + $0x68] sm:$0xff]
        %v735 = vld [vmem:[#allocation12 + $0x70] sm:$0xff]
        %v736 = vld [vmem:[#allocation12 + $0x78] sm:$0xff]
        %v737 = vld [vmem:[#allocation12 + $0x80] sm:$0xff]
        %v738 = vld [vmem:[#allocation12 + $0x88] sm:$0xff]
        %v739 = vld [vmem:[#allocation12 + $0x90] sm:$0xff]
        %v740 = vld [vmem:[#allocation12 + $0x98] sm:$0xff]
        %v741 = vld [vmem:[#allocation12 + $0xa0] sm:$0xff]
        %v742 = vld [vmem:[#allocation12 + $0xa8] sm:$0xff]
        %v743 = vld [vmem:[#allocation12 + $0xb0] sm:$0xff]
        %v744 = vld [vmem:[#allocation12 + $0xb8] sm:$0xff]
        %v745 = vld [vmem:[#allocation12 + $0xc0] sm:$0xff]
        %v746 = vld [vmem:[#allocation12 + $0xc8] sm:$0xff]
        %v747 = vld [vmem:[#allocation12 + $0xd0] sm:$0xff]
        %v748 = vld [vmem:[#allocation12 + $0xd8] sm:$0xff]
        %v749 = vld [vmem:[#allocation12 + $0xe0] sm:$0xff]
        %v750 = vld [vmem:[#allocation12 + $0xe8] sm:$0xff]
        %v751 = vld [vmem:[#allocation12 + $0xf0] sm:$0xff]
        %v752 = vld [vmem:[#allocation12 + $0xf8] sm:$0xff]
        %v753 = vld [vmem:[#allocation12 + $0x100] sm:$0xff]
        %v754 = vld [vmem:[#allocation12 + $0x108] sm:$0xff]
        %v755 = vld [vmem:[#allocation12 + $0x110] sm:$0xff]
        %v756 = vld [vmem:[#allocation12 + $0x118] sm:$0xff]
        %v757 = vld [vmem:[#allocation12 + $0x120] sm:$0xff]
        %v758 = vld [vmem:[#allocation12 + $0x128] sm:$0xff]
        %v759 = vld [vmem:[#allocation12 + $0x130] sm:$0xff]
        %v760 = vld [vmem:[#allocation12 + $0x138] sm:$0xff]
        %v761 = vld [vmem:[#allocation12 + $0x140] sm:$0xff]
        %v762 = vld [vmem:[#allocation12 + $0x148] sm:$0xff]
        %v763 = vld [vmem:[#allocation12 + $0x150] sm:$0xff]
        %v764 = vld [vmem:[#allocation12 + $0x158] sm:$0xff]
        %v765 = vld [vmem:[#allocation12 + $0x160] sm:$0xff]
        %v766 = vld [vmem:[#allocation12 + $0x168] sm:$0xff]
        %v767 = vld [vmem:[#allocation12 + $0x170] sm:$0xff]
        %v768 = vld [vmem:[#allocation12 + $0x178] sm:$0xff]
        %v769 = vld [vmem:[#allocation12 + $0x180] sm:$0xff]
        %v770 = vld [vmem:[#allocation12 + $0x188] sm:$0xff]
        %v771 = vld [vmem:[#allocation12 + $0x190] sm:$0xff]
        %v772 = vld [vmem:[#allocation12 + $0x198] sm:$0xff]
        %v773 = vld [vmem:[#allocation12 + $0x1a0] sm:$0xff]
        %v774 = vld [vmem:[#allocation12 + $0x1a8] sm:$0xff]
        %v775 = vld [vmem:[#allocation12 + $0x1b0] sm:$0xff]
        %v776 = vld [vmem:[#allocation12 + $0x1b8] sm:$0xff]
        %v777 = vld [vmem:[#allocation12 + $0x1c0] sm:$0xff]
        %v778 = vld [vmem:[#allocation12 + $0x1c8] sm:$0xff]
        %v779 = vld [vmem:[#allocation12 + $0x1d0] sm:$0xff]
        %v780 = vld [vmem:[#allocation12 + $0x1d8] sm:$0xff]
        %v781 = vld [vmem:[#allocation12 + $0x1e0] sm:$0xff]
        %v782 = vld [vmem:[#allocation12 + $0x1e8] sm:$0xff]
        %v783 = vld [vmem:[#allocation12 + $0x1f0] sm:$0xff]
        %v784 = vld [vmem:[#allocation12 + $0x1f8] sm:$0xff]
        %v785 = vld [vmem:[#allocation15] sm:$0xf]
        %v787 = vlaneseq
        %v788 = vshrl.u32 %v787, 7
        %v789 = vsub.s32 0, %v788
        %v790 = vrot.slane %v785, %v789
        %v791 = vlaneseq
        %v792 = vshrl.u32 %v791, 7
        %v793 = vsub.s32 1, %v792
        %v794 = vrot.slane %v785, %v793
        %v795 = vlaneseq
        %v796 = vshrl.u32 %v795, 7
        %v797 = vsub.s32 2, %v796
        %v798 = vrot.slane %v785, %v797
        %v799 = vlaneseq
        %v800 = vshrl.u32 %v799, 7
        %v801 = vsub.s32 3, %v800
        %v802 = vrot.slane %v785, %v801
        %807 = vmatprep.subr.mxu0 %v722
        %808 = vmatpush1.msra.mxu0 %v721
        %809 = vmatprep.subr.mxu0 %v726
        %810 = vmatpush1.msra.mxu0 %v725
        %811 = vmatprep.subr.mxu0 %v730
        %812 = vmatpush1.msra.mxu0 %v729
        %813 = vmatprep.subr.mxu0 %v734
        %814 = vmatpush1.msra.mxu0 %v733
        %815 = vmatprep.subr.mxu0 %v738
        %816 = vmatpush1.msra.mxu0 %v737
        %817 = vmatprep.subr.mxu0 %v742
        %818 = vmatpush1.msra.mxu0 %v741
        %819 = vmatprep.subr.mxu0 %v746
        %820 = vmatpush1.msra.mxu0 %v745
        %821 = vmatprep.subr.mxu0 %v750
        %822 = vmatpush1.msra.mxu0 %v749
        %823 = vmatprep.subr.mxu0 %v754
        %824 = vmatpush1.msra.mxu0 %v753
        %825 = vmatprep.subr.mxu0 %v758
        %826 = vmatpush1.msra.mxu0 %v757
        %827 = vmatprep.subr.mxu0 %v762
        %828 = vmatpush1.msra.mxu0 %v761
        %829 = vmatprep.subr.mxu0 %v766
        %830 = vmatpush1.msra.mxu0 %v765
        %831 = vmatprep.subr.mxu0 %v770
        %832 = vmatpush1.msra.mxu0 %v769
        %833 = vmatprep.subr.mxu0 %v774
        %834 = vmatpush1.msra.mxu0 %v773
        %835 = vmatprep.subr.mxu0 %v778
        %836 = vmatpush1.msra.mxu0 %v777
        %837 = vmatprep.subr.mxu0 %v782
        %838 = vmatpush1.msra.mxu0 %v781
        %839 = vmatprep.subr.mxu0 0.0
        %840 = vmatpush1.msra.mxu0 0.0
        %841 = vmatprep.subr.mxu0 0.0
        %842 = vmatpush1.msra.mxu0 0.0
        %843 = vmatprep.subr.mxu0 0.0
        %844 = vmatpush1.msra.mxu0 0.0
        %845 = vmatprep.subr.mxu0 0.0
        %846 = vmatpush1.msra.mxu0 0.0
        %847 = vmatprep.subr.mxu0 0.0
        %848 = vmatpush1.msra.mxu0 0.0
        %849 = vmatprep.subr.mxu0 0.0
        %850 = vmatpush1.msra.mxu0 0.0
        %851 = vmatprep.subr.mxu0 0.0
        %852 = vmatpush1.msra.mxu0 0.0
        %853 = vmatprep.subr.mxu0 0.0
        %854 = vmatpush1.msra.mxu0 0.0
        %855 = vmatprep.subr.mxu0 0.0
        %856 = vmatpush1.msra.mxu0 0.0
        %857 = vmatprep.subr.mxu0 0.0
        %858 = vmatpush1.msra.mxu0 0.0
        %859 = vmatprep.subr.mxu0 0.0
        %860 = vmatpush1.msra.mxu0 0.0
        %861 = vmatprep.subr.mxu0 0.0
        %862 = vmatpush1.msra.mxu0 0.0
        %863 = vmatprep.subr.mxu0 0.0
        %864 = vmatpush1.msra.mxu0 0.0
        %865 = vmatprep.subr.mxu0 0.0
        %866 = vmatpush1.msra.mxu0 0.0
        %867 = vmatprep.subr.mxu0 0.0
        %868 = vmatpush1.msra.mxu0 0.0
        %869 = vmatprep.subr.mxu0 0.0
        %870 = vmatpush1.msra.mxu0 0.0
        %871 = vmatprep.mubr.f32.mxu0 0.0
        %872 = vmatmul.mubr.f32.gmra.mrb[0].mxu0 %v713
        %v873 = vpop.f32.mrb[0].mxu0
        %v874 = vadd.f32 %v790, %v873
        %v875 = vpop.f32.mrb[0].mxu0
        %v876 = vadd.f32 %v794, %v875
        %877 = vmatprep.mubr.f32.mxu0 0.0
        %878 = vmatmul.mubr.f32.gmra.mrb[0].mxu0 %v714
        %v879 = vpop.f32.mrb[0].mxu0
        %v880 = vadd.f32 %v790, %v879
        %v881 = vpop.f32.mrb[0].mxu0
        %v882 = vadd.f32 %v794, %v881
        %883 = vmatprep.mubr.f32.mxu0 0.0
        %884 = vmatmul.mubr.f32.gmra.mrb[0].mxu0 %v715
        %v885 = vpop.f32.mrb[0].mxu0
        %v886 = vadd.f32 %v790, %v885
        %v887 = vpop.f32.mrb[0].mxu0
        %v888 = vadd.f32 %v794, %v887
        %889 = vmatprep.mubr.f32.mxu0 0.0
        %890 = vmatmul.mubr.f32.gmra.mrb[0].mxu0 %v716
        %v891 = vpop.f32.mrb[0].mxu0
        %v892 = vadd.f32 %v790, %v891
        %v893 = vpop.f32.mrb[0].mxu0
        %v894 = vadd.f32 %v794, %v893
        %895 = vmatprep.mubr.f32.mxu0 0.0
        %896 = vmatmul.mubr.f32.gmra.mrb[0].mxu0 %v717
        %v897 = vpop.f32.mrb[0].mxu0
        %v898 = vadd.f32 %v790, %v897
        %v899 = vpop.f32.mrb[0].mxu0
        %v900 = vadd.f32 %v794, %v899
        %901 = vmatprep.mubr.f32.mxu0 0.0
        %902 = vmatmul.mubr.f32.gmra.mrb[0].mxu0 %v718
        %v903 = vpop.f32.mrb[0].mxu0
        %v904 = vadd.f32 %v790, %v903
        %v905 = vpop.f32.mrb[0].mxu0
        %v906 = vadd.f32 %v794, %v905
        %907 = vmatprep.mubr.f32.mxu0 0.0
        %908 = vmatmul.mubr.f32.gmra.mrb[0].mxu0 %v719
        %v909 = vpop.f32.mrb[0].mxu0
        %v910 = vadd.f32 %v790, %v909
        %v911 = vpop.f32.mrb[0].mxu0
        %v912 = vadd.f32 %v794, %v911
        %913 = vmatprep.mubr.f32.mxu0 0.0
        %914 = vmatmul.mubr.f32.gmra.mrb[0].mxu0 %v720
        %v915 = vpop.f32.mrb[0].mxu0
        %v916 = vadd.f32 %v790, %v915
        %v917 = vpop.f32.mrb[0].mxu0
        %v918 = vadd.f32 %v794, %v917
        %919 = vdwg.mxu0
        %920 = vmatprep.subr.mxu0 %v724
        %921 = vmatpush1.msra.mxu0 %v723
        %922 = vmatprep.subr.mxu0 %v728
        %923 = vmatpush1.msra.mxu0 %v727
        %924 = vmatprep.subr.mxu0 %v732
        %925 = vmatpush1.msra.mxu0 %v731
        %926 = vmatprep.subr.mxu0 %v736
        %927 = vmatpush1.msra.mxu0 %v735
        %928 = vmatprep.subr.mxu0 %v740
        %929 = vmatpush1.msra.mxu0 %v739
        %930 = vmatprep.subr.mxu0 %v744
        %931 = vmatpush1.msra.mxu0 %v743
        %932 = vmatprep.subr.mxu0 %v748
        %933 = vmatpush1.msra.mxu0 %v747
        %934 = vmatprep.subr.mxu0 %v752
        %935 = vmatpush1.msra.mxu0 %v751
        %936 = vmatprep.subr.mxu0 %v756
        %937 = vmatpush1.msra.mxu0 %v755
        %938 = vmatprep.subr.mxu0 %v760
        %939 = vmatpush1.msra.mxu0 %v759
        %940 = vmatprep.subr.mxu0 %v764
        %941 = vmatpush1.msra.mxu0 %v763
        %942 = vmatprep.subr.mxu0 %v768
        %943 = vmatpush1.msra.mxu0 %v767
        %944 = vmatprep.subr.mxu0 %v772
        %945 = vmatpush1.msra.mxu0 %v771
        %946 = vmatprep.subr.mxu0 %v776
        %947 = vmatpush1.msra.mxu0 %v775
        %948 = vmatprep.subr.mxu0 %v780
        %949 = vmatpush1.msra.mxu0 %v779
        %950 = vmatprep.subr.mxu0 %v784
        %951 = vmatpush1.msra.mxu0 %v783
        %952 = vmatprep.subr.mxu0 0.0
        %953 = vmatpush1.msra.mxu0 0.0
        %954 = vmatprep.subr.mxu0 0.0
        %955 = vmatpush1.msra.mxu0 0.0
        %956 = vmatprep.subr.mxu0 0.0
        %957 = vmatpush1.msra.mxu0 0.0
        %958 = vmatprep.subr.mxu0 0.0
        %959 = vmatpush1.msra.mxu0 0.0
        %960 = vmatprep.subr.mxu0 0.0
        %961 = vmatpush1.msra.mxu0 0.0
        %962 = vmatprep.subr.mxu0 0.0
        %963 = vmatpush1.msra.mxu0 0.0
        %964 = vmatprep.subr.mxu0 0.0
        %965 = vmatpush1.msra.mxu0 0.0
        %966 = vmatprep.subr.mxu0 0.0
        %967 = vmatpush1.msra.mxu0 0.0
        %968 = vmatprep.subr.mxu0 0.0
        %969 = vmatpush1.msra.mxu0 0.0
        %970 = vmatprep.subr.mxu0 0.0
        %971 = vmatpush1.msra.mxu0 0.0
        %972 = vmatprep.subr.mxu0 0.0
        %973 = vmatpush1.msra.mxu0 0.0
        %974 = vmatprep.subr.mxu0 0.0
        %975 = vmatpush1.msra.mxu0 0.0
        %976 = vmatprep.subr.mxu0 0.0
        %977 = vmatpush1.msra.mxu0 0.0
        %978 = vmatprep.subr.mxu0 0.0
        %979 = vmatpush1.msra.mxu0 0.0
        %980 = vmatprep.subr.mxu0 0.0
        %981 = vmatpush1.msra.mxu0 0.0
        %982 = vmatprep.subr.mxu0 0.0
        %983 = vmatpush1.msra.mxu0 0.0
        %984 = vmatprep.mubr.f32.mxu0 0.0
        %985 = vmatmul.mubr.f32.gmra.mrb[0].mxu0 %v713
        %v986 = vpop.f32.mrb[0].mxu0
        %v987 = vadd.f32 %v798, %v986
        %v988 = vpop.f32.mrb[0].mxu0
        %v989 = vadd.f32 %v802, %v988
        %990 = vmatprep.mubr.f32.mxu0 0.0
        %991 = vmatmul.mubr.f32.gmra.mrb[0].mxu0 %v714
        %v992 = vpop.f32.mrb[0].mxu0
        %v993 = vadd.f32 %v798, %v992
        %v994 = vpop.f32.mrb[0].mxu0
        %v995 = vadd.f32 %v802, %v994
        %996 = vmatprep.mubr.f32.mxu0 0.0
        %997 = vmatmul.mubr.f32.gmra.mrb[0].mxu0 %v715
        %v998 = vpop.f32.mrb[0].mxu0
        %v999 = vadd.f32 %v798, %v998
        %v1000 = vpop.f32.mrb[0].mxu0
        %v1001 = vadd.f32 %v802, %v1000
        %1002 = vmatprep.mubr.f32.mxu0 0.0
        %1003 = vmatmul.mubr.f32.gmra.mrb[0].mxu0 %v716
        %v1004 = vpop.f32.mrb[0].mxu0
        %v1005 = vadd.f32 %v798, %v1004
        %v1006 = vpop.f32.mrb[0].mxu0
        %v1007 = vadd.f32 %v802, %v1006
        %1008 = vmatprep.mubr.f32.mxu0 0.0
        %1009 = vmatmul.mubr.f32.gmra.mrb[0].mxu0 %v717
        %v1010 = vpop.f32.mrb[0].mxu0
        %v1011 = vadd.f32 %v798, %v1010
        %v1012 = vpop.f32.mrb[0].mxu0
        %v1013 = vadd.f32 %v802, %v1012
        %1014 = vmatprep.mubr.f32.mxu0 0.0
        %1015 = vmatmul.mubr.f32.gmra.mrb[0].mxu0 %v718
        %v1016 = vpop.f32.mrb[0].mxu0
        %v1017 = vadd.f32 %v798, %v1016
        %v1018 = vpop.f32.mrb[0].mxu0
        %v1019 = vadd.f32 %v802, %v1018
        %1020 = vmatprep.mubr.f32.mxu0 0.0
        %1021 = vmatmul.mubr.f32.gmra.mrb[0].mxu0 %v719
        %v1022 = vpop.f32.mrb[0].mxu0
        %v1023 = vadd.f32 %v798, %v1022
        %v1024 = vpop.f32.mrb[0].mxu0
        %v1025 = vadd.f32 %v802, %v1024
        %1026 = vmatprep.mubr.f32.mxu0 0.0
        %1027 = vmatmul.mubr.f32.gmra.mrb[0].mxu0 %v720
        %v1028 = vpop.f32.mrb[0].mxu0
        %v1029 = vadd.f32 %v798, %v1028
        %v1030 = vpop.f32.mrb[0].mxu0
        %v1031 = vadd.f32 %v802, %v1030
        %1032 = vdwg.mxu0
        %1033 = vst [vmem:[#allocation2] sm:$0xff] %v874
        %1034 = vst [vmem:[#allocation2 + $0x8] sm:$0xff] %v876
        %1035 = vst [vmem:[#allocation2 + $0x10] sm:$0xff] %v987
        %1036 = vst [vmem:[#allocation2 + $0x18] sm:$0xff] %v989
        %1037 = vst [vmem:[#allocation2 + $0x20] sm:$0xff] %v880
        %1038 = vst [vmem:[#allocation2 + $0x28] sm:$0xff] %v882
        %1039 = vst [vmem:[#allocation2 + $0x30] sm:$0xff] %v993
        %1040 = vst [vmem:[#allocation2 + $0x38] sm:$0xff] %v995
        %1041 = vst [vmem:[#allocation2 + $0x40] sm:$0xff] %v886
        %1042 = vst [vmem:[#allocation2 + $0x48] sm:$0xff] %v888
        %1043 = vst [vmem:[#allocation2 + $0x50] sm:$0xff] %v999
        %1044 = vst [vmem:[#allocation2 + $0x58] sm:$0xff] %v1001
        %1045 = vst [vmem:[#allocation2 + $0x60] sm:$0xff] %v892
        %1046 = vst [vmem:[#allocation2 + $0x68] sm:$0xff] %v894
        %1047 = vst [vmem:[#allocation2 + $0x70] sm:$0xff] %v1005
        %1048 = vst [vmem:[#allocation2 + $0x78] sm:$0xff] %v1007
        %1049 = vst [vmem:[#allocation2 + $0x80] sm:$0xff] %v898
        %1050 = vst [vmem:[#allocation2 + $0x88] sm:$0xff] %v900
        %1051 = vst [vmem:[#allocation2 + $0x90] sm:$0xff] %v1011
        %1052 = vst [vmem:[#allocation2 + $0x98] sm:$0xff] %v1013
        %1053 = vst [vmem:[#allocation2 + $0xa0] sm:$0xff] %v904
        %1054 = vst [vmem:[#allocation2 + $0xa8] sm:$0xff] %v906
        %1055 = vst [vmem:[#allocation2 + $0xb0] sm:$0xff] %v1017
        %1056 = vst [vmem:[#allocation2 + $0xb8] sm:$0xff] %v1019
        %1057 = vst [vmem:[#allocation2 + $0xc0] sm:$0xff] %v910
        %1058 = vst [vmem:[#allocation2 + $0xc8] sm:$0xff] %v912
        %1059 = vst [vmem:[#allocation2 + $0xd0] sm:$0xff] %v1023
        %1060 = vst [vmem:[#allocation2 + $0xd8] sm:$0xff] %v1025
        %1061 = vst [vmem:[#allocation2 + $0xe0] sm:$0xff] %v916
        %1062 = vst [vmem:[#allocation2 + $0xe8] sm:$0xff] %v918
        %1063 = vst [vmem:[#allocation2 + $0xf0] sm:$0xff] %v1029
        %1064 = vst [vmem:[#allocation2 + $0xf8] sm:$0xff] %v1031
        %v1065 = vld [vmem:[#allocation3] sm:$0xff]
        %v1066 = vld [vmem:[#allocation4] sm:$0xff]
        %v1067 = vld [vmem:[#allocation5] sm:$0xff]
        %v1068 = vld [vmem:[#allocation6] sm:$0xff]
        %v1069 = vstv %s665
        %vm1070 = vcmp.lt.s32.totalorder %v1069, %v472
        %v1071 = vsel %vm1070, 1, 0
        %1072 = vset.pattern.permute.xlu0 0
        %1073 = vperm.xlu0 %1072, %v1071
        %v1074 = vpop.permute.xlu0 %1073
        %vm1075 = vcmp.eq.s32.totalorder %v1074, 1
        %s1076 = smul.u32 0, 4
        %s1077 = smul.addr %s1076, 8
        %s1078 = scalar_lea.vmem [#allocation2], %s1077
        %v1079 = vld [vmem:[%s1078] sm:$0xff]
        %v1080 = vld [vmem:[%s1078 + $0x8] sm:$0xff]
        %v1081 = vld [vmem:[%s1078 + $0x10] sm:$0xff]
        %v1082 = vld [vmem:[%s1078 + $0x18] sm:$0xff]
        %1083 = vmatprep.subr.mxu0 %v474
        %1084 = vmatpush1.msra.mxu0 %v473
        %1085 = vmatprep.subr.mxu0 %v478
        %1086 = vmatpush1.msra.mxu0 %v477
        %1087 = vmatprep.subr.mxu0 %v482
        %1088 = vmatpush1.msra.mxu0 %v481
        %1089 = vmatprep.subr.mxu0 %v486
        %1090 = vmatpush1.msra.mxu0 %v485
        %1091 = vmatprep.subr.mxu0 %v490
        %1092 = vmatpush1.msra.mxu0 %v489
        %1093 = vmatprep.subr.mxu0 %v494
        %1094 = vmatpush1.msra.mxu0 %v493
        %1095 = vmatprep.subr.mxu0 %v498
        %1096 = vmatpush1.msra.mxu0 %v497
        %1097 = vmatprep.subr.mxu0 %v502
        %1098 = vmatpush1.msra.mxu0 %v501
        %1099 = vmatprep.subr.mxu0 %v506
        %1100 = vmatpush1.msra.mxu0 %v505
        %1101 = vmatprep.subr.mxu0 %v510
        %1102 = vmatpush1.msra.mxu0 %v509
        %1103 = vmatprep.subr.mxu0 %v514
        %1104 = vmatpush1.msra.mxu0 %v513
        %1105 = vmatprep.subr.mxu0 %v518
        %1106 = vmatpush1.msra.mxu0 %v517
        %1107 = vmatprep.subr.mxu0 %v522
        %1108 = vmatpush1.msra.mxu0 %v521
        %1109 = vmatprep.subr.mxu0 %v526
        %1110 = vmatpush1.msra.mxu0 %v525
        %1111 = vmatprep.subr.mxu0 %v530
        %1112 = vmatpush1.msra.mxu0 %v529
        %1113 = vmatprep.subr.mxu0 %v534
        %1114 = vmatpush1.msra.mxu0 %v533
        %1115 = vmatprep.subr.mxu0 0.0
        %1116 = vmatpush1.msra.mxu0 0.0
        %1117 = vmatprep.subr.mxu0 0.0
        %1118 = vmatpush1.msra.mxu0 0.0
        %1119 = vmatprep.subr.mxu0 0.0
        %1120 = vmatpush1.msra.mxu0 0.0
        %1121 = vmatprep.subr.mxu0 0.0
        %1122 = vmatpush1.msra.mxu0 0.0
        %1123 = vmatprep.subr.mxu0 0.0
        %1124 = vmatpush1.msra.mxu0 0.0
        %1125 = vmatprep.subr.mxu0 0.0
        %1126 = vmatpush1.msra.mxu0 0.0
        %1127 = vmatprep.subr.mxu0 0.0
        %1128 = vmatpush1.msra.mxu0 0.0
        %1129 = vmatprep.subr.mxu0 0.0
        %1130 = vmatpush1.msra.mxu0 0.0
        %1131 = vmatprep.subr.mxu0 0.0
        %1132 = vmatpush1.msra.mxu0 0.0
        %1133 = vmatprep.subr.mxu0 0.0
        %1134 = vmatpush1.msra.mxu0 0.0
        %1135 = vmatprep.subr.mxu0 0.0
        %1136 = vmatpush1.msra.mxu0 0.0
        %1137 = vmatprep.subr.mxu0 0.0
        %1138 = vmatpush1.msra.mxu0 0.0
        %1139 = vmatprep.subr.mxu0 0.0
        %1140 = vmatpush1.msra.mxu0 0.0
        %1141 = vmatprep.subr.mxu0 0.0
        %1142 = vmatpush1.msra.mxu0 0.0
        %1143 = vmatprep.subr.mxu0 0.0
        %1144 = vmatpush1.msra.mxu0 0.0
        %1145 = vmatprep.subr.mxu0 0.0
        %1146 = vmatpush1.msra.mxu0 0.0
        %1147 = vmatprep.mubr.f32.mxu0 0.0
        %1148 = vmatmul.mubr.f32.gmra.mrb[0].mxu0 %v1065
        %v1149 = vpop.f32.mrb[0].mxu0
        %v1150 = vadd.f32 0.0, %v1149
        %v1151 = vpop.f32.mrb[0].mxu0
        %v1152 = vadd.f32 0.0, %v1151
        %1153 = vdwg.mxu0
        %1154 = vmatprep.subr.mxu0 %v476
        %1155 = vmatpush1.msra.mxu0 %v475
        %1156 = vmatprep.subr.mxu0 %v480
        %1157 = vmatpush1.msra.mxu0 %v479
        %1158 = vmatprep.subr.mxu0 %v484
        %1159 = vmatpush1.msra.mxu0 %v483
        %1160 = vmatprep.subr.mxu0 %v488
        %1161 = vmatpush1.msra.mxu0 %v487
        %1162 = vmatprep.subr.mxu0 %v492
        %1163 = vmatpush1.msra.mxu0 %v491
        %1164 = vmatprep.subr.mxu0 %v496
        %1165 = vmatpush1.msra.mxu0 %v495
        %1166 = vmatprep.subr.mxu0 %v500
        %1167 = vmatpush1.msra.mxu0 %v499
        %1168 = vmatprep.subr.mxu0 %v504
        %1169 = vmatpush1.msra.mxu0 %v503
        %1170 = vmatprep.subr.mxu0 %v508
        %1171 = vmatpush1.msra.mxu0 %v507
        %1172 = vmatprep.subr.mxu0 %v512
        %1173 = vmatpush1.msra.mxu0 %v511
        %1174 = vmatprep.subr.mxu0 %v516
        %1175 = vmatpush1.msra.mxu0 %v515
        %1176 = vmatprep.subr.mxu0 %v520
        %1177 = vmatpush1.msra.mxu0 %v519
        %1178 = vmatprep.subr.mxu0 %v524
        %1179 = vmatpush1.msra.mxu0 %v523
        %1180 = vmatprep.subr.mxu0 %v528
        %1181 = vmatpush1.msra.mxu0 %v527
        %1182 = vmatprep.subr.mxu0 %v532
        %1183 = vmatpush1.msra.mxu0 %v531
        %1184 = vmatprep.subr.mxu0 %v536
        %1185 = vmatpush1.msra.mxu0 %v535
        %1186 = vmatprep.subr.mxu0 0.0
        %1187 = vmatpush1.msra.mxu0 0.0
        %1188 = vmatprep.subr.mxu0 0.0
        %1189 = vmatpush1.msra.mxu0 0.0
        %1190 = vmatprep.subr.mxu0 0.0
        %1191 = vmatpush1.msra.mxu0 0.0
        %1192 = vmatprep.subr.mxu0 0.0
        %1193 = vmatpush1.msra.mxu0 0.0
        %1194 = vmatprep.subr.mxu0 0.0
        %1195 = vmatpush1.msra.mxu0 0.0
        %1196 = vmatprep.subr.mxu0 0.0
        %1197 = vmatpush1.msra.mxu0 0.0
        %1198 = vmatprep.subr.mxu0 0.0
        %1199 = vmatpush1.msra.mxu0 0.0
        %1200 = vmatprep.subr.mxu0 0.0
        %1201 = vmatpush1.msra.mxu0 0.0
        %1202 = vmatprep.subr.mxu0 0.0
        %1203 = vmatpush1.msra.mxu0 0.0
        %1204 = vmatprep.subr.mxu0 0.0
        %1205 = vmatpush1.msra.mxu0 0.0
        %1206 = vmatprep.subr.mxu0 0.0
        %1207 = vmatpush1.msra.mxu0 0.0
        %1208 = vmatprep.subr.mxu0 0.0
        %1209 = vmatpush1.msra.mxu0 0.0
        %1210 = vmatprep.subr.mxu0 0.0
        %1211 = vmatpush1.msra.mxu0 0.0
        %1212 = vmatprep.subr.mxu0 0.0
        %1213 = vmatpush1.msra.mxu0 0.0
        %1214 = vmatprep.subr.mxu0 0.0
        %1215 = vmatpush1.msra.mxu0 0.0
        %1216 = vmatprep.subr.mxu0 0.0
        %1217 = vmatpush1.msra.mxu0 0.0
        %1218 = vmatprep.mubr.f32.mxu0 0.0
        %1219 = vmatmul.mubr.f32.gmra.mrb[0].mxu0 %v1065
        %v1220 = vpop.f32.mrb[0].mxu0
        %v1221 = vadd.f32 0.0, %v1220
        %v1222 = vpop.f32.mrb[0].mxu0
        %v1223 = vadd.f32 0.0, %v1222
        %1224 = vdwg.mxu0
        %v1225 = vadd.f32 %v1079, %v1150
        %v1226 = vadd.f32 %v1080, %v1152
        %v1227 = vadd.f32 %v1081, %v1221
        %v1228 = vadd.f32 %v1082, %v1223
        %v1229 = vmul.f32 %v1225, %v705
        %v1230 = vmul.f32 %v1226, %v706
        %v1231 = vmul.f32 %v1227, %v707
        %v1232 = vmul.f32 %v1228, %v708
        %v1233 = vtanh.pop %v1229
        %v1234 = vtanh.pop %v1230
        %v1235 = vtanh.pop %v1231
        %v1236 = vtanh.pop %v1232
        %v1237 = vmul.f32 %v1233, %v705
        %v1238 = vmul.f32 %v1234, %v706
        %v1239 = vmul.f32 %v1235, %v707
        %v1240 = vmul.f32 %v1236, %v708
        %v1241 = vadd.f32 %v1237, %v709
        %v1242 = vadd.f32 %v1238, %v710
        %v1243 = vadd.f32 %v1239, %v711
        %v1244 = vadd.f32 %v1240, %v712
        %v1245 = vmul.f32 %v1242, %v1066
        %v1246 = vmul.f32 %v1241, %v1243
        %v1247 = vadd.f32 %v1245, %v1246
        %v1248 = vtanh.pop %v1247
        %v1249 = vmul.f32 %v1244, %v1248
        %v1250 = vsel %vm1075, %v1249, %v1065
        %v1251 = vsel %vm1075, %v1247, %v1066
        %v1252 = vsel %vm1075, %v1249, 0.0
        %1253 = vmatprep.subr.mxu0 %v538
        %1254 = vmatpush1.msra.mxu0 %v537
        %1255 = vmatprep.subr.mxu0 %v542
        %1256 = vmatpush1.msra.mxu0 %v541
        %1257 = vmatprep.subr.mxu0 %v546
        %1258 = vmatpush1.msra.mxu0 %v545
        %1259 = vmatprep.subr.mxu0 %v550
        %1260 = vmatpush1.msra.mxu0 %v549
        %1261 = vmatprep.subr.mxu0 %v554
        %1262 = vmatpush1.msra.mxu0 %v553
        %1263 = vmatprep.subr.mxu0 %v558
        %1264 = vmatpush1.msra.mxu0 %v557
        %1265 = vmatprep.subr.mxu0 %v562
        %1266 = vmatpush1.msra.mxu0 %v561
        %1267 = vmatprep.subr.mxu0 %v566
        %1268 = vmatpush1.msra.mxu0 %v565
        %1269 = vmatprep.subr.mxu0 %v570
        %1270 = vmatpush1.msra.mxu0 %v569
        %1271 = vmatprep.subr.mxu0 %v574
        %1272 = vmatpush1.msra.mxu0 %v573
        %1273 = vmatprep.subr.mxu0 %v578
        %1274 = vmatpush1.msra.mxu0 %v577
        %1275 = vmatprep.subr.mxu0 %v582
        %1276 = vmatpush1.msra.mxu0 %v581
        %1277 = vmatprep.subr.mxu0 %v586
        %1278 = vmatpush1.msra.mxu0 %v585
        %1279 = vmatprep.subr.mxu0 %v590
        %1280 = vmatpush1.msra.mxu0 %v589
        %1281 = vmatprep.subr.mxu0 %v594
        %1282 = vmatpush1.msra.mxu0 %v593
        %1283 = vmatprep.subr.mxu0 %v598
        %1284 = vmatpush1.msra.mxu0 %v597
        %1285 = vmatprep.subr.mxu0 %v602
        %1286 = vmatpush1.msra.mxu0 %v601
        %1287 = vmatprep.subr.mxu0 %v606
        %1288 = vmatpush1.msra.mxu0 %v605
        %1289 = vmatprep.subr.mxu0 %v610
        %1290 = vmatpush1.msra.mxu0 %v609
        %1291 = vmatprep.subr.mxu0 %v614
        %1292 = vmatpush1.msra.mxu0 %v613
        %1293 = vmatprep.subr.mxu0 %v618
        %1294 = vmatpush1.msra.mxu0 %v617
        %1295 = vmatprep.subr.mxu0 %v622
        %1296 = vmatpush1.msra.mxu0 %v621
        %1297 = vmatprep.subr.mxu0 %v626
        %1298 = vmatpush1.msra.mxu0 %v625
        %1299 = vmatprep.subr.mxu0 %v630
        %1300 = vmatpush1.msra.mxu0 %v629
        %1301 = vmatprep.subr.mxu0 %v634
        %1302 = vmatpush1.msra.mxu0 %v633
        %1303 = vmatprep.subr.mxu0 %v638
        %1304 = vmatpush1.msra.mxu0 %v637
        %1305 = vmatprep.subr.mxu0 %v642
        %1306 = vmatpush1.msra.mxu0 %v641
        %1307 = vmatprep.subr.mxu0 %v646
        %1308 = vmatpush1.msra.mxu0 %v645
        %1309 = vmatprep.subr.mxu0 %v650
        %1310 = vmatpush1.msra.mxu0 %v649
        %1311 = vmatprep.subr.mxu0 %v654
        %1312 = vmatpush1.msra.mxu0 %v653
        %1313 = vmatprep.subr.mxu0 %v658
        %1314 = vmatpush1.msra.mxu0 %v657
        %1315 = vmatprep.subr.mxu0 %v662
        %1316 = vmatpush1.msra.mxu0 %v661
        %1317 = vmatprep.mubr.f32.mxu0 %v1067
        %1318 = vmatmul.mubr.f32.gmra.mrb[0].mxu0 %v1252
        %v1319 = vpop.f32.mrb[0].mxu0
        %v1320 = vadd.f32 %v671, %v1319
        %v1321 = vpop.f32.mrb[0].mxu0
        %v1322 = vadd.f32 %v675, %v1321
        %1323 = vdwg.mxu0
        %1324 = vmatprep.subr.mxu0 %v540
        %1325 = vmatpush1.msra.mxu0 %v539
        %1326 = vmatprep.subr.mxu0 %v544
        %1327 = vmatpush1.msra.mxu0 %v543
        %1328 = vmatprep.subr.mxu0 %v548
        %1329 = vmatpush1.msra.mxu0 %v547
        %1330 = vmatprep.subr.mxu0 %v552
        %1331 = vmatpush1.msra.mxu0 %v551
        %1332 = vmatprep.subr.mxu0 %v556
        %1333 = vmatpush1.msra.mxu0 %v555
        %1334 = vmatprep.subr.mxu0 %v560
        %1335 = vmatpush1.msra.mxu0 %v559
        %1336 = vmatprep.subr.mxu0 %v564
        %1337 = vmatpush1.msra.mxu0 %v563
        %1338 = vmatprep.subr.mxu0 %v568
        %1339 = vmatpush1.msra.mxu0 %v567
        %1340 = vmatprep.subr.mxu0 %v572
        %1341 = vmatpush1.msra.mxu0 %v571
        %1342 = vmatprep.subr.mxu0 %v576
        %1343 = vmatpush1.msra.mxu0 %v575
        %1344 = vmatprep.subr.mxu0 %v580
        %1345 = vmatpush1.msra.mxu0 %v579
        %1346 = vmatprep.subr.mxu0 %v584
        %1347 = vmatpush1.msra.mxu0 %v583
        %1348 = vmatprep.subr.mxu0 %v588
        %1349 = vmatpush1.msra.mxu0 %v587
        %1350 = vmatprep.subr.mxu0 %v592
        %1351 = vmatpush1.msra.mxu0 %v591
        %1352 = vmatprep.subr.mxu0 %v596
        %1353 = vmatpush1.msra.mxu0 %v595
        %1354 = vmatprep.subr.mxu0 %v600
        %1355 = vmatpush1.msra.mxu0 %v599
        %1356 = vmatprep.subr.mxu0 %v604
        %1357 = vmatpush1.msra.mxu0 %v603
        %1358 = vmatprep.subr.mxu0 %v608
        %1359 = vmatpush1.msra.mxu0 %v607
        %1360 = vmatprep.subr.mxu0 %v612
        %1361 = vmatpush1.msra.mxu0 %v611
        %1362 = vmatprep.subr.mxu0 %v616
        %1363 = vmatpush1.msra.mxu0 %v615
        %1364 = vmatprep.subr.mxu0 %v620
        %1365 = vmatpush1.msra.mxu0 %v619
        %1366 = vmatprep.subr.mxu0 %v624
        %1367 = vmatpush1.msra.mxu0 %v623
        %1368 = vmatprep.subr.mxu0 %v628
        %1369 = vmatpush1.msra.mxu0 %v627
        %1370 = vmatprep.subr.mxu0 %v632
        %1371 = vmatpush1.msra.mxu0 %v631
        %1372 = vmatprep.subr.mxu0 %v636
        %1373 = vmatpush1.msra.mxu0 %v635
        %1374 = vmatprep.subr.mxu0 %v640
        %1375 = vmatpush1.msra.mxu0 %v639
        %1376 = vmatprep.subr.mxu0 %v644
        %1377 = vmatpush1.msra.mxu0 %v643
        %1378 = vmatprep.subr.mxu0 %v648
        %1379 = vmatpush1.msra.mxu0 %v647
        %1380 = vmatprep.subr.mxu0 %v652
        %1381 = vmatpush1.msra.mxu0 %v651
        %1382 = vmatprep.subr.mxu0 %v656
        %1383 = vmatpush1.msra.mxu0 %v655
        %1384 = vmatprep.subr.mxu0 %v660
        %1385 = vmatpush1.msra.mxu0 %v659
        %1386 = vmatprep.subr.mxu0 %v664
        %1387 = vmatpush1.msra.mxu0 %v663
        %1388 = vmatprep.mubr.f32.mxu0 %v1067
        %1389 = vmatmul.mubr.f32.gmra.mrb[0].mxu0 %v1252
        %v1390 = vpop.f32.mrb[0].mxu0
        %v1391 = vadd.f32 %v679, %v1390
        %v1392 = vpop.f32.mrb[0].mxu0
        %v1393 = vadd.f32 %v683, %v1392
        %1394 = vdwg.mxu0
        %v1395 = vmul.f32 %v1320, %v705
        %v1396 = vmul.f32 %v1322, %v706
        %v1397 = vmul.f32 %v1391, %v707
        %v1398 = vmul.f32 %v1393, %v708
        %v1399 = vtanh.pop %v1395
        %v1400 = vtanh.pop %v1396
        %v1401 = vtanh.pop %v1397
        %v1402 = vtanh.pop %v1398
        %v1403 = vmul.f32 %v1399, %v705
        %v1404 = vmul.f32 %v1400, %v706
        %v1405 = vmul.f32 %v1401, %v707
        %v1406 = vmul.f32 %v1402, %v708
        %v1407 = vadd.f32 %v1403, %v709
        %v1408 = vadd.f32 %v1404, %v710
        %v1409 = vadd.f32 %v1405, %v711
        %v1410 = vadd.f32 %v1406, %v712
        %v1411 = vmul.f32 %v1408, %v1068
        %v1412 = vmul.f32 %v1407, %v1409
        %v1413 = vadd.f32 %v1411, %v1412
        %v1414 = vtanh.pop %v1413
        %v1415 = vmul.f32 %v1410, %v1414
        %v1416 = vsel %vm1075, %v1415, %v1067
        %v1417 = vsel %vm1075, %v1413, %v1068
        %v1418 = vsel %vm1075, %v1415, 0.0
        %1419 = vst [vmem:[%s457] sm:$0xff] %v1418
        %s1420 = sadd.s32 %s665, 1
        %v1421 = vstv %s1420
        %vm1422 = vcmp.lt.s32.totalorder %v1421, %v472
        %v1423 = vsel %vm1422, 1, 0
        %1424 = vset.pattern.permute.xlu0 0
        %1425 = vperm.xlu0 %1424, %v1423
        %v1426 = vpop.permute.xlu0 %1425
        %vm1427 = vcmp.eq.s32.totalorder %v1426, 1
        %s1428 = smul.u32 1, 4
        %s1429 = smul.addr %s1428, 8
        %s1430 = scalar_lea.vmem [#allocation2], %s1429
        %v1431 = vld [vmem:[%s1430] sm:$0xff]
        %v1432 = vld [vmem:[%s1430 + $0x8] sm:$0xff]
        %v1433 = vld [vmem:[%s1430 + $0x10] sm:$0xff]
        %v1434 = vld [vmem:[%s1430 + $0x18] sm:$0xff]
        %1435 = vmatprep.subr.mxu0 %v474
        %1436 = vmatpush1.msra.mxu0 %v473
        %1437 = vmatprep.subr.mxu0 %v478
        %1438 = vmatpush1.msra.mxu0 %v477
        %1439 = vmatprep.subr.mxu0 %v482
        %1440 = vmatpush1.msra.mxu0 %v481
        %1441 = vmatprep.subr.mxu0 %v486
        %1442 = vmatpush1.msra.mxu0 %v485
        %1443 = vmatprep.subr.mxu0 %v490
        %1444 = vmatpush1.msra.mxu0 %v489
        %1445 = vmatprep.subr.mxu0 %v494
        %1446 = vmatpush1.msra.mxu0 %v493
        %1447 = vmatprep.subr.mxu0 %v498
        %1448 = vmatpush1.msra.mxu0 %v497
        %1449 = vmatprep.subr.mxu0 %v502
        %1450 = vmatpush1.msra.mxu0 %v501
        %1451 = vmatprep.subr.mxu0 %v506
        %1452 = vmatpush1.msra.mxu0 %v505
        %1453 = vmatprep.subr.mxu0 %v510
        %1454 = vmatpush1.msra.mxu0 %v509
        %1455 = vmatprep.subr.mxu0 %v514
        %1456 = vmatpush1.msra.mxu0 %v513
        %1457 = vmatprep.subr.mxu0 %v518
        %1458 = vmatpush1.msra.mxu0 %v517
        %1459 = vmatprep.subr.mxu0 %v522
        %1460 = vmatpush1.msra.mxu0 %v521
        %1461 = vmatprep.subr.mxu0 %v526
        %1462 = vmatpush1.msra.mxu0 %v525
        %1463 = vmatprep.subr.mxu0 %v530
        %1464 = vmatpush1.msra.mxu0 %v529
        %1465 = vmatprep.subr.mxu0 %v534
        %1466 = vmatpush1.msra.mxu0 %v533
        %1467 = vmatprep.subr.mxu0 0.0
        %1468 = vmatpush1.msra.mxu0 0.0
        %1469 = vmatprep.subr.mxu0 0.0
        %1470 = vmatpush1.msra.mxu0 0.0
        %1471 = vmatprep.subr.mxu0 0.0
        %1472 = vmatpush1.msra.mxu0 0.0
        %1473 = vmatprep.subr.mxu0 0.0
        %1474 = vmatpush1.msra.mxu0 0.0
        %1475 = vmatprep.subr.mxu0 0.0
        %1476 = vmatpush1.msra.mxu0 0.0
        %1477 = vmatprep.subr.mxu0 0.0
        %1478 = vmatpush1.msra.mxu0 0.0
        %1479 = vmatprep.subr.mxu0 0.0
        %1480 = vmatpush1.msra.mxu0 0.0
        %1481 = vmatprep.subr.mxu0 0.0
        %1482 = vmatpush1.msra.mxu0 0.0
        %1483 = vmatprep.subr.mxu0 0.0
        %1484 = vmatpush1.msra.mxu0 0.0
        %1485 = vmatprep.subr.mxu0 0.0
        %1486 = vmatpush1.msra.mxu0 0.0
        %1487 = vmatprep.subr.mxu0 0.0
        %1488 = vmatpush1.msra.mxu0 0.0
        %1489 = vmatprep.subr.mxu0 0.0
        %1490 = vmatpush1.msra.mxu0 0.0
        %1491 = vmatprep.subr.mxu0 0.0
        %1492 = vmatpush1.msra.mxu0 0.0
        %1493 = vmatprep.subr.mxu0 0.0
        %1494 = vmatpush1.msra.mxu0 0.0
        %1495 = vmatprep.subr.mxu0 0.0
        %1496 = vmatpush1.msra.mxu0 0.0
        %1497 = vmatprep.subr.mxu0 0.0
        %1498 = vmatpush1.msra.mxu0 0.0
        %1499 = vmatprep.mubr.f32.mxu0 0.0
        %1500 = vmatmul.mubr.f32.gmra.mrb[0].mxu0 %v1250
        %v1501 = vpop.f32.mrb[0].mxu0
        %v1502 = vadd.f32 0.0, %v1501
        %v1503 = vpop.f32.mrb[0].mxu0
        %v1504 = vadd.f32 0.0, %v1503
        %1505 = vdwg.mxu0
        %1506 = vmatprep.subr.mxu0 %v476
        %1507 = vmatpush1.msra.mxu0 %v475
        %1508 = vmatprep.subr.mxu0 %v480
        %1509 = vmatpush1.msra.mxu0 %v479
        %1510 = vmatprep.subr.mxu0 %v484
        %1511 = vmatpush1.msra.mxu0 %v483
        %1512 = vmatprep.subr.mxu0 %v488
        %1513 = vmatpush1.msra.mxu0 %v487
        %1514 = vmatprep.subr.mxu0 %v492
        %1515 = vmatpush1.msra.mxu0 %v491
        %1516 = vmatprep.subr.mxu0 %v496
        %1517 = vmatpush1.msra.mxu0 %v495
        %1518 = vmatprep.subr.mxu0 %v500
        %1519 = vmatpush1.msra.mxu0 %v499
        %1520 = vmatprep.subr.mxu0 %v504
        %1521 = vmatpush1.msra.mxu0 %v503
        %1522 = vmatprep.subr.mxu0 %v508
        %1523 = vmatpush1.msra.mxu0 %v507
        %1524 = vmatprep.subr.mxu0 %v512
        %1525 = vmatpush1.msra.mxu0 %v511
        %1526 = vmatprep.subr.mxu0 %v516
        %1527 = vmatpush1.msra.mxu0 %v515
        %1528 = vmatprep.subr.mxu0 %v520
        %1529 = vmatpush1.msra.mxu0 %v519
        %1530 = vmatprep.subr.mxu0 %v524
        %1531 = vmatpush1.msra.mxu0 %v523
        %1532 = vmatprep.subr.mxu0 %v528
        %1533 = vmatpush1.msra.mxu0 %v527
        %1534 = vmatprep.subr.mxu0 %v532
        %1535 = vmatpush1.msra.mxu0 %v531
        %1536 = vmatprep.subr.mxu0 %v536
        %1537 = vmatpush1.msra.mxu0 %v535
        %1538 = vmatprep.subr.mxu0 0.0
        %1539 = vmatpush1.msra.mxu0 0.0
        %1540 = vmatprep.subr.mxu0 0.0
        %1541 = vmatpush1.msra.mxu0 0.0
        %1542 = vmatprep.subr.mxu0 0.0
        %1543 = vmatpush1.msra.mxu0 0.0
        %1544 = vmatprep.subr.mxu0 0.0
        %1545 = vmatpush1.msra.mxu0 0.0
        %1546 = vmatprep.subr.mxu0 0.0
        %1547 = vmatpush1.msra.mxu0 0.0
        %1548 = vmatprep.subr.mxu0 0.0
        %1549 = vmatpush1.msra.mxu0 0.0
        %1550 = vmatprep.subr.mxu0 0.0
        %1551 = vmatpush1.msra.mxu0 0.0
        %1552 = vmatprep.subr.mxu0 0.0
        %1553 = vmatpush1.msra.mxu0 0.0
        %1554 = vmatprep.subr.mxu0 0.0
        %1555 = vmatpush1.msra.mxu0 0.0
        %1556 = vmatprep.subr.mxu0 0.0
        %1557 = vmatpush1.msra.mxu0 0.0
        %1558 = vmatprep.subr.mxu0 0.0
        %1559 = vmatpush1.msra.mxu0 0.0
        %1560 = vmatprep.subr.mxu0 0.0
        %1561 = vmatpush1.msra.mxu0 0.0
        %1562 = vmatprep.subr.mxu0 0.0
        %1563 = vmatpush1.msra.mxu0 0.0
        %1564 = vmatprep.subr.mxu0 0.0
        %1565 = vmatpush1.msra.mxu0 0.0
        %1566 = vmatprep.subr.mxu0 0.0
        %1567 = vmatpush1.msra.mxu0 0.0
        %1568 = vmatprep.subr.mxu0 0.0
        %1569 = vmatpush1.msra.mxu0 0.0
        %1570 = vmatprep.mubr.f32.mxu0 0.0
        %1571 = vmatmul.mubr.f32.gmra.mrb[0].mxu0 %v1250
        %v1572 = vpop.f32.mrb[0].mxu0
        %v1573 = vadd.f32 0.0, %v1572
        %v1574 = vpop.f32.mrb[0].mxu0
        %v1575 = vadd.f32 0.0, %v1574
        %1576 = vdwg.mxu0
        %v1577 = vadd.f32 %v1431, %v1502
        %v1578 = vadd.f32 %v1432, %v1504
        %v1579 = vadd.f32 %v1433, %v1573
        %v1580 = vadd.f32 %v1434, %v1575
        %v1581 = vmul.f32 %v1577, %v705
        %v1582 = vmul.f32 %v1578, %v706
        %v1583 = vmul.f32 %v1579, %v707
        %v1584 = vmul.f32 %v1580, %v708
        %v1585 = vtanh.pop %v1581
        %v1586 = vtanh.pop %v1582
        %v1587 = vtanh.pop %v1583
        %v1588 = vtanh.pop %v1584
        %v1589 = vmul.f32 %v1585, %v705
        %v1590 = vmul.f32 %v1586, %v706
        %v1591 = vmul.f32 %v1587, %v707
        %v1592 = vmul.f32 %v1588, %v708
        %v1593 = vadd.f32 %v1589, %v709
        %v1594 = vadd.f32 %v1590, %v710
        %v1595 = vadd.f32 %v1591, %v711
        %v1596 = vadd.f32 %v1592, %v712
        %v1597 = vmul.f32 %v1594, %v1251
        %v1598 = vmul.f32 %v1593, %v1595
        %v1599 = vadd.f32 %v1597, %v1598
        %v1600 = vtanh.pop %v1599
        %v1601 = vmul.f32 %v1596, %v1600
        %v1602 = vsel %vm1427, %v1601, %v1250
        %v1603 = vsel %vm1427, %v1599, %v1251
        %v1604 = vsel %vm1427, %v1601, 0.0
        %1605 = vmatprep.subr.mxu0 %v538
        %1606 = vmatpush1.msra.mxu0 %v537
        %1607 = vmatprep.subr.mxu0 %v542
        %1608 = vmatpush1.msra.mxu0 %v541
        %1609 = vmatprep.subr.mxu0 %v546
        %1610 = vmatpush1.msra.mxu0 %v545
        %1611 = vmatprep.subr.mxu0 %v550
        %1612 = vmatpush1.msra.mxu0 %v549
        %1613 = vmatprep.subr.mxu0 %v554
        %1614 = vmatpush1.msra.mxu0 %v553
        %1615 = vmatprep.subr.mxu0 %v558
        %1616 = vmatpush1.msra.mxu0 %v557
        %1617 = vmatprep.subr.mxu0 %v562
        %1618 = vmatpush1.msra.mxu0 %v561
        %1619 = vmatprep.subr.mxu0 %v566
        %1620 = vmatpush1.msra.mxu0 %v565
        %1621 = vmatprep.subr.mxu0 %v570
        %1622 = vmatpush1.msra.mxu0 %v569
        %1623 = vmatprep.subr.mxu0 %v574
        %1624 = vmatpush1.msra.mxu0 %v573
        %1625 = vmatprep.subr.mxu0 %v578
        %1626 = vmatpush1.msra.mxu0 %v577
        %1627 = vmatprep.subr.mxu0 %v582
        %1628 = vmatpush1.msra.mxu0 %v581
        %1629 = vmatprep.subr.mxu0 %v586
        %1630 = vmatpush1.msra.mxu0 %v585
        %1631 = vmatprep.subr.mxu0 %v590
        %1632 = vmatpush1.msra.mxu0 %v589
        %1633 = vmatprep.subr.mxu0 %v594
        %1634 = vmatpush1.msra.mxu0 %v593
        %1635 = vmatprep.subr.mxu0 %v598
        %1636 = vmatpush1.msra.mxu0 %v597
        %1637 = vmatprep.subr.mxu0 %v602
        %1638 = vmatpush1.msra.mxu0 %v601
        %1639 = vmatprep.subr.mxu0 %v606
        %1640 = vmatpush1.msra.mxu0 %v605
        %1641 = vmatprep.subr.mxu0 %v610
        %1642 = vmatpush1.msra.mxu0 %v609
        %1643 = vmatprep.subr.mxu0 %v614
        %1644 = vmatpush1.msra.mxu0 %v613
        %1645 = vmatprep.subr.mxu0 %v618
        %1646 = vmatpush1.msra.mxu0 %v617
        %1647 = vmatprep.subr.mxu0 %v622
        %1648 = vmatpush1.msra.mxu0 %v621
        %1649 = vmatprep.subr.mxu0 %v626
        %1650 = vmatpush1.msra.mxu0 %v625
        %1651 = vmatprep.subr.mxu0 %v630
        %1652 = vmatpush1.msra.mxu0 %v629
        %1653 = vmatprep.subr.mxu0 %v634
        %1654 = vmatpush1.msra.mxu0 %v633
        %1655 = vmatprep.subr.mxu0 %v638
        %1656 = vmatpush1.msra.mxu0 %v637
        %1657 = vmatprep.subr.mxu0 %v642
        %1658 = vmatpush1.msra.mxu0 %v641
        %1659 = vmatprep.subr.mxu0 %v646
        %1660 = vmatpush1.msra.mxu0 %v645
        %1661 = vmatprep.subr.mxu0 %v650
        %1662 = vmatpush1.msra.mxu0 %v649
        %1663 = vmatprep.subr.mxu0 %v654
        %1664 = vmatpush1.msra.mxu0 %v653
        %1665 = vmatprep.subr.mxu0 %v658
        %1666 = vmatpush1.msra.mxu0 %v657
        %1667 = vmatprep.subr.mxu0 %v662
        %1668 = vmatpush1.msra.mxu0 %v661
        %1669 = vmatprep.mubr.f32.mxu0 %v1416
        %1670 = vmatmul.mubr.f32.gmra.mrb[0].mxu0 %v1604
        %v1671 = vpop.f32.mrb[0].mxu0
        %v1672 = vadd.f32 %v671, %v1671
        %v1673 = vpop.f32.mrb[0].mxu0
        %v1674 = vadd.f32 %v675, %v1673
        %1675 = vdwg.mxu0
        %1676 = vmatprep.subr.mxu0 %v540
        %1677 = vmatpush1.msra.mxu0 %v539
        %1678 = vmatprep.subr.mxu0 %v544
        %1679 = vmatpush1.msra.mxu0 %v543
        %1680 = vmatprep.subr.mxu0 %v548
        %1681 = vmatpush1.msra.mxu0 %v547
        %1682 = vmatprep.subr.mxu0 %v552
        %1683 = vmatpush1.msra.mxu0 %v551
        %1684 = vmatprep.subr.mxu0 %v556
        %1685 = vmatpush1.msra.mxu0 %v555
        %1686 = vmatprep.subr.mxu0 %v560
        %1687 = vmatpush1.msra.mxu0 %v559
        %1688 = vmatprep.subr.mxu0 %v564
        %1689 = vmatpush1.msra.mxu0 %v563
        %1690 = vmatprep.subr.mxu0 %v568
        %1691 = vmatpush1.msra.mxu0 %v567
        %1692 = vmatprep.subr.mxu0 %v572
        %1693 = vmatpush1.msra.mxu0 %v571
        %1694 = vmatprep.subr.mxu0 %v576
        %1695 = vmatpush1.msra.mxu0 %v575
        %1696 = vmatprep.subr.mxu0 %v580
        %1697 = vmatpush1.msra.mxu0 %v579
        %1698 = vmatprep.subr.mxu0 %v584
        %1699 = vmatpush1.msra.mxu0 %v583
        %1700 = vmatprep.subr.mxu0 %v588
        %1701 = vmatpush1.msra.mxu0 %v587
        %1702 = vmatprep.subr.mxu0 %v592
        %1703 = vmatpush1.msra.mxu0 %v591
        %1704 = vmatprep.subr.mxu0 %v596
        %1705 = vmatpush1.msra.mxu0 %v595
        %1706 = vmatprep.subr.mxu0 %v600
        %1707 = vmatpush1.msra.mxu0 %v599
        %1708 = vmatprep.subr.mxu0 %v604
        %1709 = vmatpush1.msra.mxu0 %v603
        %1710 = vmatprep.subr.mxu0 %v608
        %1711 = vmatpush1.msra.mxu0 %v607
        %1712 = vmatprep.subr.mxu0 %v612
        %1713 = vmatpush1.msra.mxu0 %v611
        %1714 = vmatprep.subr.mxu0 %v616
        %1715 = vmatpush1.msra.mxu0 %v615
        %1716 = vmatprep.subr.mxu0 %v620
        %1717 = vmatpush1.msra.mxu0 %v619
        %1718 = vmatprep.subr.mxu0 %v624
        %1719 = vmatpush1.msra.mxu0 %v623
        %1720 = vmatprep.subr.mxu0 %v628
        %1721 = vmatpush1.msra.mxu0 %v627
        %1722 = vmatprep.subr.mxu0 %v632
        %1723 = vmatpush1.msra.mxu0 %v631
        %1724 = vmatprep.subr.mxu0 %v636
        %1725 = vmatpush1.msra.mxu0 %v635
        %1726 = vmatprep.subr.mxu0 %v640
        %1727 = vmatpush1.msra.mxu0 %v639
        %1728 = vmatprep.subr.mxu0 %v644
        %1729 = vmatpush1.msra.mxu0 %v643
        %1730 = vmatprep.subr.mxu0 %v648
        %1731 = vmatpush1.msra.mxu0 %v647
        %1732 = vmatprep.subr.mxu0 %v652
        %1733 = vmatpush1.msra.mxu0 %v651
        %1734 = vmatprep.subr.mxu0 %v656
        %1735 = vmatpush1.msra.mxu0 %v655
        %1736 = vmatprep.subr.mxu0 %v660
        %1737 = vmatpush1.msra.mxu0 %v659
        %1738 = vmatprep.subr.mxu0 %v664
        %1739 = vmatpush1.msra.mxu0 %v663
        %1740 = vmatprep.mubr.f32.mxu0 %v1416
        %1741 = vmatmul.mubr.f32.gmra.mrb[0].mxu0 %v1604
        %v1742 = vpop.f32.mrb[0].mxu0
        %v1743 = vadd.f32 %v679, %v1742
        %v1744 = vpop.f32.mrb[0].mxu0
        %v1745 = vadd.f32 %v683, %v1744
        %1746 = vdwg.mxu0
        %v1747 = vmul.f32 %v1672, %v705
        %v1748 = vmul.f32 %v1674, %v706
        %v1749 = vmul.f32 %v1743, %v707
        %v1750 = vmul.f32 %v1745, %v708
        %v1751 = vtanh.pop %v1747
        %v1752 = vtanh.pop %v1748
        %v1753 = vtanh.pop %v1749
        %v1754 = vtanh.pop %v1750
        %v1755 = vmul.f32 %v1751, %v705
        %v1756 = vmul.f32 %v1752, %v706
        %v1757 = vmul.f32 %v1753, %v707
        %v1758 = vmul.f32 %v1754, %v708
        %v1759 = vadd.f32 %v1755, %v709
        %v1760 = vadd.f32 %v1756, %v710
        %v1761 = vadd.f32 %v1757, %v711
        %v1762 = vadd.f32 %v1758, %v712
        %v1763 = vmul.f32 %v1760, %v1417
        %v1764 = vmul.f32 %v1759, %v1761
        %v1765 = vadd.f32 %v1763, %v1764
        %v1766 = vtanh.pop %v1765
        %v1767 = vmul.f32 %v1762, %v1766
        %v1768 = vsel %vm1427, %v1767, %v1416
        %v1769 = vsel %vm1427, %v1765, %v1417
        %v1770 = vsel %vm1427, %v1767, 0.0
        %s1771 = scalar_lea.vmem %s457, 8 [#allocation19]
        %1772 = vst [vmem:[%s1771] sm:$0xff] %v1770
        %s1773 = sadd.s32 %s665, 2
        %v1774 = vstv %s1773
        %vm1775 = vcmp.lt.s32.totalorder %v1774, %v472
        %v1776 = vsel %vm1775, 1, 0
        %1777 = vset.pattern.permute.xlu0 0
        %1778 = vperm.xlu0 %1777, %v1776
        %v1779 = vpop.permute.xlu0 %1778
        %vm1780 = vcmp.eq.s32.totalorder %v1779, 1
        %s1781 = smul.u32 2, 4
        %s1782 = smul.addr %s1781, 8
        %s1783 = scalar_lea.vmem [#allocation2], %s1782
        %v1784 = vld [vmem:[%s1783] sm:$0xff]
        %v1785 = vld [vmem:[%s1783 + $0x8] sm:$0xff]
        %v1786 = vld [vmem:[%s1783 + $0x10] sm:$0xff]
        %v1787 = vld [vmem:[%s1783 + $0x18] sm:$0xff]
        %1788 = vmatprep.subr.mxu0 %v474
        %1789 = vmatpush1.msra.mxu0 %v473
        %1790 = vmatprep.subr.mxu0 %v478
        %1791 = vmatpush1.msra.mxu0 %v477
        %1792 = vmatprep.subr.mxu0 %v482
        %1793 = vmatpush1.msra.mxu0 %v481
        %1794 = vmatprep.subr.mxu0 %v486
        %1795 = vmatpush1.msra.mxu0 %v485
        %1796 = vmatprep.subr.mxu0 %v490
        %1797 = vmatpush1.msra.mxu0 %v489
        %1798 = vmatprep.subr.mxu0 %v494
        %1799 = vmatpush1.msra.mxu0 %v493
        %1800 = vmatprep.subr.mxu0 %v498
        %1801 = vmatpush1.msra.mxu0 %v497
        %1802 = vmatprep.subr.mxu0 %v502
        %1803 = vmatpush1.msra.mxu0 %v501
        %1804 = vmatprep.subr.mxu0 %v506
        %1805 = vmatpush1.msra.mxu0 %v505
        %1806 = vmatprep.subr.mxu0 %v510
        %1807 = vmatpush1.msra.mxu0 %v509
        %1808 = vmatprep.subr.mxu0 %v514
        %1809 = vmatpush1.msra.mxu0 %v513
        %1810 = vmatprep.subr.mxu0 %v518
        %1811 = vmatpush1.msra.mxu0 %v517
        %1812 = vmatprep.subr.mxu0 %v522
        %1813 = vmatpush1.msra.mxu0 %v521
        %1814 = vmatprep.subr.mxu0 %v526
        %1815 = vmatpush1.msra.mxu0 %v525
        %1816 = vmatprep.subr.mxu0 %v530
        %1817 = vmatpush1.msra.mxu0 %v529
        %1818 = vmatprep.subr.mxu0 %v534
        %1819 = vmatpush1.msra.mxu0 %v533
        %1820 = vmatprep.subr.mxu0 0.0
        %1821 = vmatpush1.msra.mxu0 0.0
        %1822 = vmatprep.subr.mxu0 0.0
        %1823 = vmatpush1.msra.mxu0 0.0
        %1824 = vmatprep.subr.mxu0 0.0
        %1825 = vmatpush1.msra.mxu0 0.0
        %1826 = vmatprep.subr.mxu0 0.0
        %1827 = vmatpush1.msra.mxu0 0.0
        %1828 = vmatprep.subr.mxu0 0.0
        %1829 = vmatpush1.msra.mxu0 0.0
        %1830 = vmatprep.subr.mxu0 0.0
        %1831 = vmatpush1.msra.mxu0 0.0
        %1832 = vmatprep.subr.mxu0 0.0
        %1833 = vmatpush1.msra.mxu0 0.0
        %1834 = vmatprep.subr.mxu0 0.0
        %1835 = vmatpush1.msra.mxu0 0.0
        %1836 = vmatprep.subr.mxu0 0.0
        %1837 = vmatpush1.msra.mxu0 0.0
        %1838 = vmatprep.subr.mxu0 0.0
        %1839 = vmatpush1.msra.mxu0 0.0
        %1840 = vmatprep.subr.mxu0 0.0
        %1841 = vmatpush1.msra.mxu0 0.0
        %1842 = vmatprep.subr.mxu0 0.0
        %1843 = vmatpush1.msra.mxu0 0.0
        %1844 = vmatprep.subr.mxu0 0.0
        %1845 = vmatpush1.msra.mxu0 0.0
        %1846 = vmatprep.subr.mxu0 0.0
        %1847 = vmatpush1.msra.mxu0 0.0
        %1848 = vmatprep.subr.mxu0 0.0
        %1849 = vmatpush1.msra.mxu0 0.0
        %1850 = vmatprep.subr.mxu0 0.0
        %1851 = vmatpush1.msra.mxu0 0.0
        %1852 = vmatprep.mubr.f32.mxu0 0.0
        %1853 = vmatmul.mubr.f32.gmra.mrb[0].mxu0 %v1602
        %v1854 = vpop.f32.mrb[0].mxu0
        %v1855 = vadd.f32 0.0, %v1854
        %v1856 = vpop.f32.mrb[0].mxu0
        %v1857 = vadd.f32 0.0, %v1856
        %1858 = vdwg.mxu0
        %1859 = vmatprep.subr.mxu0 %v476
        %1860 = vmatpush1.msra.mxu0 %v475
        %1861 = vmatprep.subr.mxu0 %v480
        %1862 = vmatpush1.msra.mxu0 %v479
        %1863 = vmatprep.subr.mxu0 %v484
        %1864 = vmatpush1.msra.mxu0 %v483
        %1865 = vmatprep.subr.mxu0 %v488
        %1866 = vmatpush1.msra.mxu0 %v487
        %1867 = vmatprep.subr.mxu0 %v492
        %1868 = vmatpush1.msra.mxu0 %v491
        %1869 = vmatprep.subr.mxu0 %v496
        %1870 = vmatpush1.msra.mxu0 %v495
        %1871 = vmatprep.subr.mxu0 %v500
        %1872 = vmatpush1.msra.mxu0 %v499
        %1873 = vmatprep.subr.mxu0 %v504
        %1874 = vmatpush1.msra.mxu0 %v503
        %1875 = vmatprep.subr.mxu0 %v508
        %1876 = vmatpush1.msra.mxu0 %v507
        %1877 = vmatprep.subr.mxu0 %v512
        %1878 = vmatpush1.msra.mxu0 %v511
        %1879 = vmatprep.subr.mxu0 %v516
        %1880 = vmatpush1.msra.mxu0 %v515
        %1881 = vmatprep.subr.mxu0 %v520
        %1882 = vmatpush1.msra.mxu0 %v519
        %1883 = vmatprep.subr.mxu0 %v524
        %1884 = vmatpush1.msra.mxu0 %v523
        %1885 = vmatprep.subr.mxu0 %v528
        %1886 = vmatpush1.msra.mxu0 %v527
        %1887 = vmatprep.subr.mxu0 %v532
        %1888 = vmatpush1.msra.mxu0 %v531
        %1889 = vmatprep.subr.mxu0 %v536
        %1890 = vmatpush1.msra.mxu0 %v535
        %1891 = vmatprep.subr.mxu0 0.0
        %1892 = vmatpush1.msra.mxu0 0.0
        %1893 = vmatprep.subr.mxu0 0.0
        %1894 = vmatpush1.msra.mxu0 0.0
        %1895 = vmatprep.subr.mxu0 0.0
        %1896 = vmatpush1.msra.mxu0 0.0
        %1897 = vmatprep.subr.mxu0 0.0
        %1898 = vmatpush1.msra.mxu0 0.0
        %1899 = vmatprep.subr.mxu0 0.0
        %1900 = vmatpush1.msra.mxu0 0.0
        %1901 = vmatprep.subr.mxu0 0.0
        %1902 = vmatpush1.msra.mxu0 0.0
        %1903 = vmatprep.subr.mxu0 0.0
        %1904 = vmatpush1.msra.mxu0 0.0
        %1905 = vmatprep.subr.mxu0 0.0
        %1906 = vmatpush1.msra.mxu0 0.0
        %1907 = vmatprep.subr.mxu0 0.0
        %1908 = vmatpush1.msra.mxu0 0.0
        %1909 = vmatprep.subr.mxu0 0.0
        %1910 = vmatpush1.msra.mxu0 0.0
        %1911 = vmatprep.subr.mxu0 0.0
        %1912 = vmatpush1.msra.mxu0 0.0
        %1913 = vmatprep.subr.mxu0 0.0
        %1914 = vmatpush1.msra.mxu0 0.0
        %1915 = vmatprep.subr.mxu0 0.0
        %1916 = vmatpush1.msra.mxu0 0.0
        %1917 = vmatprep.subr.mxu0 0.0
        %1918 = vmatpush1.msra.mxu0 0.0
        %1919 = vmatprep.subr.mxu0 0.0
        %1920 = vmatpush1.msra.mxu0 0.0
        %1921 = vmatprep.subr.mxu0 0.0
        %1922 = vmatpush1.msra.mxu0 0.0
        %1923 = vmatprep.mubr.f32.mxu0 0.0
        %1924 = vmatmul.mubr.f32.gmra.mrb[0].mxu0 %v1602
        %v1925 = vpop.f32.mrb[0].mxu0
        %v1926 = vadd.f32 0.0, %v1925
        %v1927 = vpop.f32.mrb[0].mxu0
        %v1928 = vadd.f32 0.0, %v1927
        %1929 = vdwg.mxu0
        %v1930 = vadd.f32 %v1784, %v1855
        %v1931 = vadd.f32 %v1785, %v1857
        %v1932 = vadd.f32 %v1786, %v1926
        %v1933 = vadd.f32 %v1787, %v1928
        %v1934 = vmul.f32 %v1930, %v705
        %v1935 = vmul.f32 %v1931, %v706
        %v1936 = vmul.f32 %v1932, %v707
        %v1937 = vmul.f32 %v1933, %v708
        %v1938 = vtanh.pop %v1934
        %v1939 = vtanh.pop %v1935
        %v1940 = vtanh.pop %v1936
        %v1941 = vtanh.pop %v1937
        %v1942 = vmul.f32 %v1938, %v705
        %v1943 = vmul.f32 %v1939, %v706
        %v1944 = vmul.f32 %v1940, %v707
        %v1945 = vmul.f32 %v1941, %v708
        %v1946 = vadd.f32 %v1942, %v709
        %v1947 = vadd.f32 %v1943, %v710
        %v1948 = vadd.f32 %v1944, %v711
        %v1949 = vadd.f32 %v1945, %v712
        %v1950 = vmul.f32 %v1947, %v1603
        %v1951 = vmul.f32 %v1946, %v1948
        %v1952 = vadd.f32 %v1950, %v1951
        %v1953 = vtanh.pop %v1952
        %v1954 = vmul.f32 %v1949, %v1953
        %v1955 = vsel %vm1780, %v1954, %v1602
        %v1956 = vsel %vm1780, %v1952, %v1603
        %v1957 = vsel %vm1780, %v1954, 0.0
        %1958 = vmatprep.subr.mxu0 %v538
        %1959 = vmatpush1.msra.mxu0 %v537
        %1960 = vmatprep.subr.mxu0 %v542
        %1961 = vmatpush1.msra.mxu0 %v541
        %1962 = vmatprep.subr.mxu0 %v546
        %1963 = vmatpush1.msra.mxu0 %v545
        %1964 = vmatprep.subr.mxu0 %v550
        %1965 = vmatpush1.msra.mxu0 %v549
        %1966 = vmatprep.subr.mxu0 %v554
        %1967 = vmatpush1.msra.mxu0 %v553
        %1968 = vmatprep.subr.mxu0 %v558
        %1969 = vmatpush1.msra.mxu0 %v557
        %1970 = vmatprep.subr.mxu0 %v562
        %1971 = vmatpush1.msra.mxu0 %v561
        %1972 = vmatprep.subr.mxu0 %v566
        %1973 = vmatpush1.msra.mxu0 %v565
        %1974 = vmatprep.subr.mxu0 %v570
        %1975 = vmatpush1.msra.mxu0 %v569
        %1976 = vmatprep.subr.mxu0 %v574
        %1977 = vmatpush1.msra.mxu0 %v573
        %1978 = vmatprep.subr.mxu0 %v578
        %1979 = vmatpush1.msra.mxu0 %v577
        %1980 = vmatprep.subr.mxu0 %v582
        %1981 = vmatpush1.msra.mxu0 %v581
        %1982 = vmatprep.subr.mxu0 %v586
        %1983 = vmatpush1.msra.mxu0 %v585
        %1984 = vmatprep.subr.mxu0 %v590
        %1985 = vmatpush1.msra.mxu0 %v589
        %1986 = vmatprep.subr.mxu0 %v594
        %1987 = vmatpush1.msra.mxu0 %v593
        %1988 = vmatprep.subr.mxu0 %v598
        %1989 = vmatpush1.msra.mxu0 %v597
        %1990 = vmatprep.subr.mxu0 %v602
        %1991 = vmatpush1.msra.mxu0 %v601
        %1992 = vmatprep.subr.mxu0 %v606
        %1993 = vmatpush1.msra.mxu0 %v605
        %1994 = vmatprep.subr.mxu0 %v610
        %1995 = vmatpush1.msra.mxu0 %v609
        %1996 = vmatprep.subr.mxu0 %v614
        %1997 = vmatpush1.msra.mxu0 %v613
        %1998 = vmatprep.subr.mxu0 %v618
        %1999 = vmatpush1.msra.mxu0 %v617
        %2000 = vmatprep.subr.mxu0 %v622
        %2001 = vmatpush1.msra.mxu0 %v621
        %2002 = vmatprep.subr.mxu0 %v626
        %2003 = vmatpush1.msra.mxu0 %v625
        %2004 = vmatprep.subr.mxu0 %v630
        %2005 = vmatpush1.msra.mxu0 %v629
        %2006 = vmatprep.subr.mxu0 %v634
        %2007 = vmatpush1.msra.mxu0 %v633
        %2008 = vmatprep.subr.mxu0 %v638
        %2009 = vmatpush1.msra.mxu0 %v637
        %2010 = vmatprep.subr.mxu0 %v642
        %2011 = vmatpush1.msra.mxu0 %v641
        %2012 = vmatprep.subr.mxu0 %v646
        %2013 = vmatpush1.msra.mxu0 %v645
        %2014 = vmatprep.subr.mxu0 %v650
        %2015 = vmatpush1.msra.mxu0 %v649
        %2016 = vmatprep.subr.mxu0 %v654
        %2017 = vmatpush1.msra.mxu0 %v653
        %2018 = vmatprep.subr.mxu0 %v658
        %2019 = vmatpush1.msra.mxu0 %v657
        %2020 = vmatprep.subr.mxu0 %v662
        %2021 = vmatpush1.msra.mxu0 %v661
        %2022 = vmatprep.mubr.f32.mxu0 %v1768
        %2023 = vmatmul.mubr.f32.gmra.mrb[0].mxu0 %v1957
        %v2024 = vpop.f32.mrb[0].mxu0
        %v2025 = vadd.f32 %v671, %v2024
        %v2026 = vpop.f32.mrb[0].mxu0
        %v2027 = vadd.f32 %v675, %v2026
        %2028 = vdwg.mxu0
        %2029 = vmatprep.subr.mxu0 %v540
        %2030 = vmatpush1.msra.mxu0 %v539
        %2031 = vmatprep.subr.mxu0 %v544
        %2032 = vmatpush1.msra.mxu0 %v543
        %2033 = vmatprep.subr.mxu0 %v548
        %2034 = vmatpush1.msra.mxu0 %v547
        %2035 = vmatprep.subr.mxu0 %v552
        %2036 = vmatpush1.msra.mxu0 %v551
        %2037 = vmatprep.subr.mxu0 %v556
        %2038 = vmatpush1.msra.mxu0 %v555
        %2039 = vmatprep.subr.mxu0 %v560
        %2040 = vmatpush1.msra.mxu0 %v559
        %2041 = vmatprep.subr.mxu0 %v564
        %2042 = vmatpush1.msra.mxu0 %v563
        %2043 = vmatprep.subr.mxu0 %v568
        %2044 = vmatpush1.msra.mxu0 %v567
        %2045 = vmatprep.subr.mxu0 %v572
        %2046 = vmatpush1.msra.mxu0 %v571
        %2047 = vmatprep.subr.mxu0 %v576
        %2048 = vmatpush1.msra.mxu0 %v575
        %2049 = vmatprep.subr.mxu0 %v580
        %2050 = vmatpush1.msra.mxu0 %v579
        %2051 = vmatprep.subr.mxu0 %v584
        %2052 = vmatpush1.msra.mxu0 %v583
        %2053 = vmatprep.subr.mxu0 %v588
        %2054 = vmatpush1.msra.mxu0 %v587
        %2055 = vmatprep.subr.mxu0 %v592
        %2056 = vmatpush1.msra.mxu0 %v591
        %2057 = vmatprep.subr.mxu0 %v596
        %2058 = vmatpush1.msra.mxu0 %v595
        %2059 = vmatprep.subr.mxu0 %v600
        %2060 = vmatpush1.msra.mxu0 %v599
        %2061 = vmatprep.subr.mxu0 %v604
        %2062 = vmatpush1.msra.mxu0 %v603
        %2063 = vmatprep.subr.mxu0 %v608
        %2064 = vmatpush1.msra.mxu0 %v607
        %2065 = vmatprep.subr.mxu0 %v612
        %2066 = vmatpush1.msra.mxu0 %v611
        %2067 = vmatprep.subr.mxu0 %v616
        %2068 = vmatpush1.msra.mxu0 %v615
        %2069 = vmatprep.subr.mxu0 %v620
        %2070 = vmatpush1.msra.mxu0 %v619
        %2071 = vmatprep.subr.mxu0 %v624
        %2072 = vmatpush1.msra.mxu0 %v623
        %2073 = vmatprep.subr.mxu0 %v628
        %2074 = vmatpush1.msra.mxu0 %v627
        %2075 = vmatprep.subr.mxu0 %v632
        %2076 = vmatpush1.msra.mxu0 %v631
        %2077 = vmatprep.subr.mxu0 %v636
        %2078 = vmatpush1.msra.mxu0 %v635
        %2079 = vmatprep.subr.mxu0 %v640
        %2080 = vmatpush1.msra.mxu0 %v639
        %2081 = vmatprep.subr.mxu0 %v644
        %2082 = vmatpush1.msra.mxu0 %v643
        %2083 = vmatprep.subr.mxu0 %v648
        %2084 = vmatpush1.msra.mxu0 %v647
        %2085 = vmatprep.subr.mxu0 %v652
        %2086 = vmatpush1.msra.mxu0 %v651
        %2087 = vmatprep.subr.mxu0 %v656
        %2088 = vmatpush1.msra.mxu0 %v655
        %2089 = vmatprep.subr.mxu0 %v660
        %2090 = vmatpush1.msra.mxu0 %v659
        %2091 = vmatprep.subr.mxu0 %v664
        %2092 = vmatpush1.msra.mxu0 %v663
        %2093 = vmatprep.mubr.f32.mxu0 %v1768
        %2094 = vmatmul.mubr.f32.gmra.mrb[0].mxu0 %v1957
        %v2095 = vpop.f32.mrb[0].mxu0
        %v2096 = vadd.f32 %v679, %v2095
        %v2097 = vpop.f32.mrb[0].mxu0
        %v2098 = vadd.f32 %v683, %v2097
        %2099 = vdwg.mxu0
        %v2100 = vmul.f32 %v2025, %v705
        %v2101 = vmul.f32 %v2027, %v706
        %v2102 = vmul.f32 %v2096, %v707
        %v2103 = vmul.f32 %v2098, %v708
        %v2104 = vtanh.pop %v2100
        %v2105 = vtanh.pop %v2101
        %v2106 = vtanh.pop %v2102
        %v2107 = vtanh.pop %v2103
        %v2108 = vmul.f32 %v2104, %v705
        %v2109 = vmul.f32 %v2105, %v706
        %v2110 = vmul.f32 %v2106, %v707
        %v2111 = vmul.f32 %v2107, %v708
        %v2112 = vadd.f32 %v2108, %v709
        %v2113 = vadd.f32 %v2109, %v710
        %v2114 = vadd.f32 %v2110, %v711
        %v2115 = vadd.f32 %v2111, %v712
        %v2116 = vmul.f32 %v2113, %v1769
        %v2117 = vmul.f32 %v2112, %v2114
        %v2118 = vadd.f32 %v2116, %v2117
        %v2119 = vtanh.pop %v2118
        %v2120 = vmul.f32 %v2115, %v2119
        %v2121 = vsel %vm1780, %v2120, %v1768
        %v2122 = vsel %vm1780, %v2118, %v1769
        %v2123 = vsel %vm1780, %v2120, 0.0
        %s2124 = scalar_lea.vmem %s457, 16 [#allocation19]
        %2125 = vst [vmem:[%s2124] sm:$0xff] %v2123
        %s2126 = sadd.s32 %s665, 3
        %v2127 = vstv %s2126
        %vm2128 = vcmp.lt.s32.totalorder %v2127, %v472
        %v2129 = vsel %vm2128, 1, 0
        %2130 = vset.pattern.permute.xlu0 0
        %2131 = vperm.xlu0 %2130, %v2129
        %v2132 = vpop.permute.xlu0 %2131
        %vm2133 = vcmp.eq.s32.totalorder %v2132, 1
        %s2134 = smul.u32 3, 4
        %s2135 = smul.addr %s2134, 8
        %s2136 = scalar_lea.vmem [#allocation2], %s2135
        %v2137 = vld [vmem:[%s2136] sm:$0xff]
        %v2138 = vld [vmem:[%s2136 + $0x8] sm:$0xff]
        %v2139 = vld [vmem:[%s2136 + $0x10] sm:$0xff]
        %v2140 = vld [vmem:[%s2136 + $0x18] sm:$0xff]
        %2141 = vmatprep.subr.mxu0 %v474
        %2142 = vmatpush1.msra.mxu0 %v473
        %2143 = vmatprep.subr.mxu0 %v478
        %2144 = vmatpush1.msra.mxu0 %v477
        %2145 = vmatprep.subr.mxu0 %v482
        %2146 = vmatpush1.msra.mxu0 %v481
        %2147 = vmatprep.subr.mxu0 %v486
        %2148 = vmatpush1.msra.mxu0 %v485
        %2149 = vmatprep.subr.mxu0 %v490
        %2150 = vmatpush1.msra.mxu0 %v489
        %2151 = vmatprep.subr.mxu0 %v494
        %2152 = vmatpush1.msra.mxu0 %v493
        %2153 = vmatprep.subr.mxu0 %v498
        %2154 = vmatpush1.msra.mxu0 %v497
        %2155 = vmatprep.subr.mxu0 %v502
        %2156 = vmatpush1.msra.mxu0 %v501
        %2157 = vmatprep.subr.mxu0 %v506
        %2158 = vmatpush1.msra.mxu0 %v505
        %2159 = vmatprep.subr.mxu0 %v510
        %2160 = vmatpush1.msra.mxu0 %v509
        %2161 = vmatprep.subr.mxu0 %v514
        %2162 = vmatpush1.msra.mxu0 %v513
        %2163 = vmatprep.subr.mxu0 %v518
        %2164 = vmatpush1.msra.mxu0 %v517
        %2165 = vmatprep.subr.mxu0 %v522
        %2166 = vmatpush1.msra.mxu0 %v521
        %2167 = vmatprep.subr.mxu0 %v526
        %2168 = vmatpush1.msra.mxu0 %v525
        %2169 = vmatprep.subr.mxu0 %v530
        %2170 = vmatpush1.msra.mxu0 %v529
        %2171 = vmatprep.subr.mxu0 %v534
        %2172 = vmatpush1.msra.mxu0 %v533
        %2173 = vmatprep.subr.mxu0 0.0
        %2174 = vmatpush1.msra.mxu0 0.0
        %2175 = vmatprep.subr.mxu0 0.0
        %2176 = vmatpush1.msra.mxu0 0.0
        %2177 = vmatprep.subr.mxu0 0.0
        %2178 = vmatpush1.msra.mxu0 0.0
        %2179 = vmatprep.subr.mxu0 0.0
        %2180 = vmatpush1.msra.mxu0 0.0
        %2181 = vmatprep.subr.mxu0 0.0
        %2182 = vmatpush1.msra.mxu0 0.0
        %2183 = vmatprep.subr.mxu0 0.0
        %2184 = vmatpush1.msra.mxu0 0.0
        %2185 = vmatprep.subr.mxu0 0.0
        %2186 = vmatpush1.msra.mxu0 0.0
        %2187 = vmatprep.subr.mxu0 0.0
        %2188 = vmatpush1.msra.mxu0 0.0
        %2189 = vmatprep.subr.mxu0 0.0
        %2190 = vmatpush1.msra.mxu0 0.0
        %2191 = vmatprep.subr.mxu0 0.0
        %2192 = vmatpush1.msra.mxu0 0.0
        %2193 = vmatprep.subr.mxu0 0.0
        %2194 = vmatpush1.msra.mxu0 0.0
        %2195 = vmatprep.subr.mxu0 0.0
        %2196 = vmatpush1.msra.mxu0 0.0
        %2197 = vmatprep.subr.mxu0 0.0
        %2198 = vmatpush1.msra.mxu0 0.0
        %2199 = vmatprep.subr.mxu0 0.0
        %2200 = vmatpush1.msra.mxu0 0.0
        %2201 = vmatprep.subr.mxu0 0.0
        %2202 = vmatpush1.msra.mxu0 0.0
        %2203 = vmatprep.subr.mxu0 0.0
        %2204 = vmatpush1.msra.mxu0 0.0
        %2205 = vmatprep.mubr.f32.mxu0 0.0
        %2206 = vmatmul.mubr.f32.gmra.mrb[0].mxu0 %v1955
        %v2207 = vpop.f32.mrb[0].mxu0
        %v2208 = vadd.f32 0.0, %v2207
        %v2209 = vpop.f32.mrb[0].mxu0
        %v2210 = vadd.f32 0.0, %v2209
        %2211 = vdwg.mxu0
        %2212 = vmatprep.subr.mxu0 %v476
        %2213 = vmatpush1.msra.mxu0 %v475
        %2214 = vmatprep.subr.mxu0 %v480
        %2215 = vmatpush1.msra.mxu0 %v479
        %2216 = vmatprep.subr.mxu0 %v484
        %2217 = vmatpush1.msra.mxu0 %v483
        %2218 = vmatprep.subr.mxu0 %v488
        %2219 = vmatpush1.msra.mxu0 %v487
        %2220 = vmatprep.subr.mxu0 %v492
        %2221 = vmatpush1.msra.mxu0 %v491
        %2222 = vmatprep.subr.mxu0 %v496
        %2223 = vmatpush1.msra.mxu0 %v495
        %2224 = vmatprep.subr.mxu0 %v500
        %2225 = vmatpush1.msra.mxu0 %v499
        %2226 = vmatprep.subr.mxu0 %v504
        %2227 = vmatpush1.msra.mxu0 %v503
        %2228 = vmatprep.subr.mxu0 %v508
        %2229 = vmatpush1.msra.mxu0 %v507
        %2230 = vmatprep.subr.mxu0 %v512
        %2231 = vmatpush1.msra.mxu0 %v511
        %2232 = vmatprep.subr.mxu0 %v516
        %2233 = vmatpush1.msra.mxu0 %v515
        %2234 = vmatprep.subr.mxu0 %v520
        %2235 = vmatpush1.msra.mxu0 %v519
        %2236 = vmatprep.subr.mxu0 %v524
        %2237 = vmatpush1.msra.mxu0 %v523
        %2238 = vmatprep.subr.mxu0 %v528
        %2239 = vmatpush1.msra.mxu0 %v527
        %2240 = vmatprep.subr.mxu0 %v532
        %2241 = vmatpush1.msra.mxu0 %v531
        %2242 = vmatprep.subr.mxu0 %v536
        %2243 = vmatpush1.msra.mxu0 %v535
        %2244 = vmatprep.subr.mxu0 0.0
        %2245 = vmatpush1.msra.mxu0 0.0
        %2246 = vmatprep.subr.mxu0 0.0
        %2247 = vmatpush1.msra.mxu0 0.0
        %2248 = vmatprep.subr.mxu0 0.0
        %2249 = vmatpush1.msra.mxu0 0.0
        %2250 = vmatprep.subr.mxu0 0.0
        %2251 = vmatpush1.msra.mxu0 0.0
        %2252 = vmatprep.subr.mxu0 0.0
        %2253 = vmatpush1.msra.mxu0 0.0
        %2254 = vmatprep.subr.mxu0 0.0
        %2255 = vmatpush1.msra.mxu0 0.0
        %2256 = vmatprep.subr.mxu0 0.0
        %2257 = vmatpush1.msra.mxu0 0.0
        %2258 = vmatprep.subr.mxu0 0.0
        %2259 = vmatpush1.msra.mxu0 0.0
        %2260 = vmatprep.subr.mxu0 0.0
        %2261 = vmatpush1.msra.mxu0 0.0
        %2262 = vmatprep.subr.mxu0 0.0
        %2263 = vmatpush1.msra.mxu0 0.0
        %2264 = vmatprep.subr.mxu0 0.0
        %2265 = vmatpush1.msra.mxu0 0.0
        %2266 = vmatprep.subr.mxu0 0.0
        %2267 = vmatpush1.msra.mxu0 0.0
        %2268 = vmatprep.subr.mxu0 0.0
        %2269 = vmatpush1.msra.mxu0 0.0
        %2270 = vmatprep.subr.mxu0 0.0
        %2271 = vmatpush1.msra.mxu0 0.0
        %2272 = vmatprep.subr.mxu0 0.0
        %2273 = vmatpush1.msra.mxu0 0.0
        %2274 = vmatprep.subr.mxu0 0.0
        %2275 = vmatpush1.msra.mxu0 0.0
        %2276 = vmatprep.mubr.f32.mxu0 0.0
        %2277 = vmatmul.mubr.f32.gmra.mrb[0].mxu0 %v1955
        %v2278 = vpop.f32.mrb[0].mxu0
        %v2279 = vadd.f32 0.0, %v2278
        %v2280 = vpop.f32.mrb[0].mxu0
        %v2281 = vadd.f32 0.0, %v2280
        %2282 = vdwg.mxu0
        %v2283 = vadd.f32 %v2137, %v2208
        %v2284 = vadd.f32 %v2138, %v2210
        %v2285 = vadd.f32 %v2139, %v2279
        %v2286 = vadd.f32 %v2140, %v2281
        %v2287 = vmul.f32 %v2283, %v705
        %v2288 = vmul.f32 %v2284, %v706
        %v2289 = vmul.f32 %v2285, %v707
        %v2290 = vmul.f32 %v2286, %v708
        %v2291 = vtanh.pop %v2287
        %v2292 = vtanh.pop %v2288
        %v2293 = vtanh.pop %v2289
        %v2294 = vtanh.pop %v2290
        %v2295 = vmul.f32 %v2291, %v705
        %v2296 = vmul.f32 %v2292, %v706
        %v2297 = vmul.f32 %v2293, %v707
        %v2298 = vmul.f32 %v2294, %v708
        %v2299 = vadd.f32 %v2295, %v709
        %v2300 = vadd.f32 %v2296, %v710
        %v2301 = vadd.f32 %v2297, %v711
        %v2302 = vadd.f32 %v2298, %v712
        %v2303 = vmul.f32 %v2300, %v1956
        %v2304 = vmul.f32 %v2299, %v2301
        %v2305 = vadd.f32 %v2303, %v2304
        %v2306 = vtanh.pop %v2305
        %v2307 = vmul.f32 %v2302, %v2306
        %v2308 = vsel %vm2133, %v2307, %v1955
        %v2309 = vsel %vm2133, %v2305, %v1956
        %v2310 = vsel %vm2133, %v2307, 0.0
        %2311 = vmatprep.subr.mxu0 %v538
        %2312 = vmatpush1.msra.mxu0 %v537
        %2313 = vmatprep.subr.mxu0 %v542
        %2314 = vmatpush1.msra.mxu0 %v541
        %2315 = vmatprep.subr.mxu0 %v546
        %2316 = vmatpush1.msra.mxu0 %v545
        %2317 = vmatprep.subr.mxu0 %v550
        %2318 = vmatpush1.msra.mxu0 %v549
        %2319 = vmatprep.subr.mxu0 %v554
        %2320 = vmatpush1.msra.mxu0 %v553
        %2321 = vmatprep.subr.mxu0 %v558
        %2322 = vmatpush1.msra.mxu0 %v557
        %2323 = vmatprep.subr.mxu0 %v562
        %2324 = vmatpush1.msra.mxu0 %v561
        %2325 = vmatprep.subr.mxu0 %v566
        %2326 = vmatpush1.msra.mxu0 %v565
        %2327 = vmatprep.subr.mxu0 %v570
        %2328 = vmatpush1.msra.mxu0 %v569
        %2329 = vmatprep.subr.mxu0 %v574
        %2330 = vmatpush1.msra.mxu0 %v573
        %2331 = vmatprep.subr.mxu0 %v578
        %2332 = vmatpush1.msra.mxu0 %v577
        %2333 = vmatprep.subr.mxu0 %v582
        %2334 = vmatpush1.msra.mxu0 %v581
        %2335 = vmatprep.subr.mxu0 %v586
        %2336 = vmatpush1.msra.mxu0 %v585
        %2337 = vmatprep.subr.mxu0 %v590
        %2338 = vmatpush1.msra.mxu0 %v589
        %2339 = vmatprep.subr.mxu0 %v594
        %2340 = vmatpush1.msra.mxu0 %v593
        %2341 = vmatprep.subr.mxu0 %v598
        %2342 = vmatpush1.msra.mxu0 %v597
        %2343 = vmatprep.subr.mxu0 %v602
        %2344 = vmatpush1.msra.mxu0 %v601
        %2345 = vmatprep.subr.mxu0 %v606
        %2346 = vmatpush1.msra.mxu0 %v605
        %2347 = vmatprep.subr.mxu0 %v610
        %2348 = vmatpush1.msra.mxu0 %v609
        %2349 = vmatprep.subr.mxu0 %v614
        %2350 = vmatpush1.msra.mxu0 %v613
        %2351 = vmatprep.subr.mxu0 %v618
        %2352 = vmatpush1.msra.mxu0 %v617
        %2353 = vmatprep.subr.mxu0 %v622
        %2354 = vmatpush1.msra.mxu0 %v621
        %2355 = vmatprep.subr.mxu0 %v626
        %2356 = vmatpush1.msra.mxu0 %v625
        %2357 = vmatprep.subr.mxu0 %v630
        %2358 = vmatpush1.msra.mxu0 %v629
        %2359 = vmatprep.subr.mxu0 %v634
        %2360 = vmatpush1.msra.mxu0 %v633
        %2361 = vmatprep.subr.mxu0 %v638
        %2362 = vmatpush1.msra.mxu0 %v637
        %2363 = vmatprep.subr.mxu0 %v642
        %2364 = vmatpush1.msra.mxu0 %v641
        %2365 = vmatprep.subr.mxu0 %v646
        %2366 = vmatpush1.msra.mxu0 %v645
        %2367 = vmatprep.subr.mxu0 %v650
        %2368 = vmatpush1.msra.mxu0 %v649
        %2369 = vmatprep.subr.mxu0 %v654
        %2370 = vmatpush1.msra.mxu0 %v653
        %2371 = vmatprep.subr.mxu0 %v658
        %2372 = vmatpush1.msra.mxu0 %v657
        %2373 = vmatprep.subr.mxu0 %v662
        %2374 = vmatpush1.msra.mxu0 %v661
        %2375 = vmatprep.mubr.f32.mxu0 %v2121
        %2376 = vmatmul.mubr.f32.gmra.mrb[0].mxu0 %v2310
        %v2377 = vpop.f32.mrb[0].mxu0
        %v2378 = vadd.f32 %v671, %v2377
        %v2379 = vpop.f32.mrb[0].mxu0
        %v2380 = vadd.f32 %v675, %v2379
        %2381 = vdwg.mxu0
        %2382 = vmatprep.subr.mxu0 %v540
        %2383 = vmatpush1.msra.mxu0 %v539
        %2384 = vmatprep.subr.mxu0 %v544
        %2385 = vmatpush1.msra.mxu0 %v543
        %2386 = vmatprep.subr.mxu0 %v548
        %2387 = vmatpush1.msra.mxu0 %v547
        %2388 = vmatprep.subr.mxu0 %v552
        %2389 = vmatpush1.msra.mxu0 %v551
        %2390 = vmatprep.subr.mxu0 %v556
        %2391 = vmatpush1.msra.mxu0 %v555
        %2392 = vmatprep.subr.mxu0 %v560
        %2393 = vmatpush1.msra.mxu0 %v559
        %2394 = vmatprep.subr.mxu0 %v564
        %2395 = vmatpush1.msra.mxu0 %v563
        %2396 = vmatprep.subr.mxu0 %v568
        %2397 = vmatpush1.msra.mxu0 %v567
        %2398 = vmatprep.subr.mxu0 %v572
        %2399 = vmatpush1.msra.mxu0 %v571
        %2400 = vmatprep.subr.mxu0 %v576
        %2401 = vmatpush1.msra.mxu0 %v575
        %2402 = vmatprep.subr.mxu0 %v580
        %2403 = vmatpush1.msra.mxu0 %v579
        %2404 = vmatprep.subr.mxu0 %v584
        %2405 = vmatpush1.msra.mxu0 %v583
        %2406 = vmatprep.subr.mxu0 %v588
        %2407 = vmatpush1.msra.mxu0 %v587
        %2408 = vmatprep.subr.mxu0 %v592
        %2409 = vmatpush1.msra.mxu0 %v591
        %2410 = vmatprep.subr.mxu0 %v596
        %2411 = vmatpush1.msra.mxu0 %v595
        %2412 = vmatprep.subr.mxu0 %v600
        %2413 = vmatpush1.msra.mxu0 %v599
        %2414 = vmatprep.subr.mxu0 %v604
        %2415 = vmatpush1.msra.mxu0 %v603
        %2416 = vmatprep.subr.mxu0 %v608
        %2417 = vmatpush1.msra.mxu0 %v607
        %2418 = vmatprep.subr.mxu0 %v612
        %2419 = vmatpush1.msra.mxu0 %v611
        %2420 = vmatprep.subr.mxu0 %v616
        %2421 = vmatpush1.msra.mxu0 %v615
        %2422 = vmatprep.subr.mxu0 %v620
        %2423 = vmatpush1.msra.mxu0 %v619
        %2424 = vmatprep.subr.mxu0 %v624
        %2425 = vmatpush1.msra.mxu0 %v623
        %2426 = vmatprep.subr.mxu0 %v628
        %2427 = vmatpush1.msra.mxu0 %v627
        %2428 = vmatprep.subr.mxu0 %v632
        %2429 = vmatpush1.msra.mxu0 %v631
        %2430 = vmatprep.subr.mxu0 %v636
        %2431 = vmatpush1.msra.mxu0 %v635
        %2432 = vmatprep.subr.mxu0 %v640
        %2433 = vmatpush1.msra.mxu0 %v639
        %2434 = vmatprep.subr.mxu0 %v644
        %2435 = vmatpush1.msra.mxu0 %v643
        %2436 = vmatprep.subr.mxu0 %v648
        %2437 = vmatpush1.msra.mxu0 %v647
        %2438 = vmatprep.subr.mxu0 %v652
        %2439 = vmatpush1.msra.mxu0 %v651
        %2440 = vmatprep.subr.mxu0 %v656
        %2441 = vmatpush1.msra.mxu0 %v655
        %2442 = vmatprep.subr.mxu0 %v660
        %2443 = vmatpush1.msra.mxu0 %v659
        %2444 = vmatprep.subr.mxu0 %v664
        %2445 = vmatpush1.msra.mxu0 %v663
        %2446 = vmatprep.mubr.f32.mxu0 %v2121
        %2447 = vmatmul.mubr.f32.gmra.mrb[0].mxu0 %v2310
        %v2448 = vpop.f32.mrb[0].mxu0
        %v2449 = vadd.f32 %v679, %v2448
        %v2450 = vpop.f32.mrb[0].mxu0
        %v2451 = vadd.f32 %v683, %v2450
        %2452 = vdwg.mxu0
        %v2453 = vmul.f32 %v2378, %v705
        %v2454 = vmul.f32 %v2380, %v706
        %v2455 = vmul.f32 %v2449, %v707
        %v2456 = vmul.f32 %v2451, %v708
        %v2457 = vtanh.pop %v2453
        %v2458 = vtanh.pop %v2454
        %v2459 = vtanh.pop %v2455
        %v2460 = vtanh.pop %v2456
        %v2461 = vmul.f32 %v2457, %v705
        %v2462 = vmul.f32 %v2458, %v706
        %v2463 = vmul.f32 %v2459, %v707
        %v2464 = vmul.f32 %v2460, %v708
        %v2465 = vadd.f32 %v2461, %v709
        %v2466 = vadd.f32 %v2462, %v710
        %v2467 = vadd.f32 %v2463, %v711
        %v2468 = vadd.f32 %v2464, %v712
        %v2469 = vmul.f32 %v2466, %v2122
        %v2470 = vmul.f32 %v2465, %v2467
        %v2471 = vadd.f32 %v2469, %v2470
        %v2472 = vtanh.pop %v2471
        %v2473 = vmul.f32 %v2468, %v2472
        %v2474 = vsel %vm2133, %v2473, %v2121
        %v2475 = vsel %vm2133, %v2471, %v2122
        %v2476 = vsel %vm2133, %v2473, 0.0
        %s2477 = scalar_lea.vmem %s457, 24 [#allocation19]
        %2478 = vst [vmem:[%s2477] sm:$0xff] %v2476
        %s2479 = sadd.s32 %s665, 4
        %v2480 = vstv %s2479
        %vm2481 = vcmp.lt.s32.totalorder %v2480, %v472
        %v2482 = vsel %vm2481, 1, 0
        %2483 = vset.pattern.permute.xlu0 0
        %2484 = vperm.xlu0 %2483, %v2482
        %v2485 = vpop.permute.xlu0 %2484
        %vm2486 = vcmp.eq.s32.totalorder %v2485, 1
        %s2487 = smul.u32 4, 4
        %s2488 = smul.addr %s2487, 8
        %s2489 = scalar_lea.vmem [#allocation2], %s2488
        %v2490 = vld [vmem:[%s2489] sm:$0xff]
        %v2491 = vld [vmem:[%s2489 + $0x8] sm:$0xff]
        %v2492 = vld [vmem:[%s2489 + $0x10] sm:$0xff]
        %v2493 = vld [vmem:[%s2489 + $0x18] sm:$0xff]
        %2494 = vmatprep.subr.mxu0 %v474
        %2495 = vmatpush1.msra.mxu0 %v473
        %2496 = vmatprep.subr.mxu0 %v478
        %2497 = vmatpush1.msra.mxu0 %v477
        %2498 = vmatprep.subr.mxu0 %v482
        %2499 = vmatpush1.msra.mxu0 %v481
        %2500 = vmatprep.subr.mxu0 %v486
        %2501 = vmatpush1.msra.mxu0 %v485
        %2502 = vmatprep.subr.mxu0 %v490
        %2503 = vmatpush1.msra.mxu0 %v489
        %2504 = vmatprep.subr.mxu0 %v494
        %2505 = vmatpush1.msra.mxu0 %v493
        %2506 = vmatprep.subr.mxu0 %v498
        %2507 = vmatpush1.msra.mxu0 %v497
        %2508 = vmatprep.subr.mxu0 %v502
        %2509 = vmatpush1.msra.mxu0 %v501
        %2510 = vmatprep.subr.mxu0 %v506
        %2511 = vmatpush1.msra.mxu0 %v505
        %2512 = vmatprep.subr.mxu0 %v510
        %2513 = vmatpush1.msra.mxu0 %v509
        %2514 = vmatprep.subr.mxu0 %v514
        %2515 = vmatpush1.msra.mxu0 %v513
        %2516 = vmatprep.subr.mxu0 %v518
        %2517 = vmatpush1.msra.mxu0 %v517
        %2518 = vmatprep.subr.mxu0 %v522
        %2519 = vmatpush1.msra.mxu0 %v521
        %2520 = vmatprep.subr.mxu0 %v526
        %2521 = vmatpush1.msra.mxu0 %v525
        %2522 = vmatprep.subr.mxu0 %v530
        %2523 = vmatpush1.msra.mxu0 %v529
        %2524 = vmatprep.subr.mxu0 %v534
        %2525 = vmatpush1.msra.mxu0 %v533
        %2526 = vmatprep.subr.mxu0 0.0
        %2527 = vmatpush1.msra.mxu0 0.0
        %2528 = vmatprep.subr.mxu0 0.0
        %2529 = vmatpush1.msra.mxu0 0.0
        %2530 = vmatprep.subr.mxu0 0.0
        %2531 = vmatpush1.msra.mxu0 0.0
        %2532 = vmatprep.subr.mxu0 0.0
        %2533 = vmatpush1.msra.mxu0 0.0
        %2534 = vmatprep.subr.mxu0 0.0
        %2535 = vmatpush1.msra.mxu0 0.0
        %2536 = vmatprep.subr.mxu0 0.0
        %2537 = vmatpush1.msra.mxu0 0.0
        %2538 = vmatprep.subr.mxu0 0.0
        %2539 = vmatpush1.msra.mxu0 0.0
        %2540 = vmatprep.subr.mxu0 0.0
        %2541 = vmatpush1.msra.mxu0 0.0
        %2542 = vmatprep.subr.mxu0 0.0
        %2543 = vmatpush1.msra.mxu0 0.0
        %2544 = vmatprep.subr.mxu0 0.0
        %2545 = vmatpush1.msra.mxu0 0.0
        %2546 = vmatprep.subr.mxu0 0.0
        %2547 = vmatpush1.msra.mxu0 0.0
        %2548 = vmatprep.subr.mxu0 0.0
        %2549 = vmatpush1.msra.mxu0 0.0
        %2550 = vmatprep.subr.mxu0 0.0
        %2551 = vmatpush1.msra.mxu0 0.0
        %2552 = vmatprep.subr.mxu0 0.0
        %2553 = vmatpush1.msra.mxu0 0.0
        %2554 = vmatprep.subr.mxu0 0.0
        %2555 = vmatpush1.msra.mxu0 0.0
        %2556 = vmatprep.subr.mxu0 0.0
        %2557 = vmatpush1.msra.mxu0 0.0
        %2558 = vmatprep.mubr.f32.mxu0 0.0
        %2559 = vmatmul.mubr.f32.gmra.mrb[0].mxu0 %v2308
        %v2560 = vpop.f32.mrb[0].mxu0
        %v2561 = vadd.f32 0.0, %v2560
        %v2562 = vpop.f32.mrb[0].mxu0
        %v2563 = vadd.f32 0.0, %v2562
        %2564 = vdwg.mxu0
        %2565 = vmatprep.subr.mxu0 %v476
        %2566 = vmatpush1.msra.mxu0 %v475
        %2567 = vmatprep.subr.mxu0 %v480
        %2568 = vmatpush1.msra.mxu0 %v479
        %2569 = vmatprep.subr.mxu0 %v484
        %2570 = vmatpush1.msra.mxu0 %v483
        %2571 = vmatprep.subr.mxu0 %v488
        %2572 = vmatpush1.msra.mxu0 %v487
        %2573 = vmatprep.subr.mxu0 %v492
        %2574 = vmatpush1.msra.mxu0 %v491
        %2575 = vmatprep.subr.mxu0 %v496
        %2576 = vmatpush1.msra.mxu0 %v495
        %2577 = vmatprep.subr.mxu0 %v500
        %2578 = vmatpush1.msra.mxu0 %v499
        %2579 = vmatprep.subr.mxu0 %v504
        %2580 = vmatpush1.msra.mxu0 %v503
        %2581 = vmatprep.subr.mxu0 %v508
        %2582 = vmatpush1.msra.mxu0 %v507
        %2583 = vmatprep.subr.mxu0 %v512
        %2584 = vmatpush1.msra.mxu0 %v511
        %2585 = vmatprep.subr.mxu0 %v516
        %2586 = vmatpush1.msra.mxu0 %v515
        %2587 = vmatprep.subr.mxu0 %v520
        %2588 = vmatpush1.msra.mxu0 %v519
        %2589 = vmatprep.subr.mxu0 %v524
        %2590 = vmatpush1.msra.mxu0 %v523
        %2591 = vmatprep.subr.mxu0 %v528
        %2592 = vmatpush1.msra.mxu0 %v527
        %2593 = vmatprep.subr.mxu0 %v532
        %2594 = vmatpush1.msra.mxu0 %v531
        %2595 = vmatprep.subr.mxu0 %v536
        %2596 = vmatpush1.msra.mxu0 %v535
        %2597 = vmatprep.subr.mxu0 0.0
        %2598 = vmatpush1.msra.mxu0 0.0
        %2599 = vmatprep.subr.mxu0 0.0
        %2600 = vmatpush1.msra.mxu0 0.0
        %2601 = vmatprep.subr.mxu0 0.0
        %2602 = vmatpush1.msra.mxu0 0.0
        %2603 = vmatprep.subr.mxu0 0.0
        %2604 = vmatpush1.msra.mxu0 0.0
        %2605 = vmatprep.subr.mxu0 0.0
        %2606 = vmatpush1.msra.mxu0 0.0
        %2607 = vmatprep.subr.mxu0 0.0
        %2608 = vmatpush1.msra.mxu0 0.0
        %2609 = vmatprep.subr.mxu0 0.0
        %2610 = vmatpush1.msra.mxu0 0.0
        %2611 = vmatprep.subr.mxu0 0.0
        %2612 = vmatpush1.msra.mxu0 0.0
        %2613 = vmatprep.subr.mxu0 0.0
        %2614 = vmatpush1.msra.mxu0 0.0
        %2615 = vmatprep.subr.mxu0 0.0
        %2616 = vmatpush1.msra.mxu0 0.0
        %2617 = vmatprep.subr.mxu0 0.0
        %2618 = vmatpush1.msra.mxu0 0.0
        %2619 = vmatprep.subr.mxu0 0.0
        %2620 = vmatpush1.msra.mxu0 0.0
        %2621 = vmatprep.subr.mxu0 0.0
        %2622 = vmatpush1.msra.mxu0 0.0
        %2623 = vmatprep.subr.mxu0 0.0
        %2624 = vmatpush1.msra.mxu0 0.0
        %2625 = vmatprep.subr.mxu0 0.0
        %2626 = vmatpush1.msra.mxu0 0.0
        %2627 = vmatprep.subr.mxu0 0.0
        %2628 = vmatpush1.msra.mxu0 0.0
        %2629 = vmatprep.mubr.f32.mxu0 0.0
        %2630 = vmatmul.mubr.f32.gmra.mrb[0].mxu0 %v2308
        %v2631 = vpop.f32.mrb[0].mxu0
        %v2632 = vadd.f32 0.0, %v2631
        %v2633 = vpop.f32.mrb[0].mxu0
        %v2634 = vadd.f32 0.0, %v2633
        %2635 = vdwg.mxu0
        %v2636 = vadd.f32 %v2490, %v2561
        %v2637 = vadd.f32 %v2491, %v2563
        %v2638 = vadd.f32 %v2492, %v2632
        %v2639 = vadd.f32 %v2493, %v2634
        %v2640 = vmul.f32 %v2636, %v705
        %v2641 = vmul.f32 %v2637, %v706
        %v2642 = vmul.f32 %v2638, %v707
        %v2643 = vmul.f32 %v2639, %v708
        %v2644 = vtanh.pop %v2640
        %v2645 = vtanh.pop %v2641
        %v2646 = vtanh.pop %v2642
        %v2647 = vtanh.pop %v2643
        %v2648 = vmul.f32 %v2644, %v705
        %v2649 = vmul.f32 %v2645, %v706
        %v2650 = vmul.f32 %v2646, %v707
        %v2651 = vmul.f32 %v2647, %v708
        %v2652 = vadd.f32 %v2648, %v709
        %v2653 = vadd.f32 %v2649, %v710
        %v2654 = vadd.f32 %v2650, %v711
        %v2655 = vadd.f32 %v2651, %v712
        %v2656 = vmul.f32 %v2653, %v2309
        %v2657 = vmul.f32 %v2652, %v2654
        %v2658 = vadd.f32 %v2656, %v2657
        %v2659 = vtanh.pop %v2658
        %v2660 = vmul.f32 %v2655, %v2659
        %v2661 = vsel %vm2486, %v2660, %v2308
        %v2662 = vsel %vm2486, %v2658, %v2309
        %v2663 = vsel %vm2486, %v2660, 0.0
        %2664 = vmatprep.subr.mxu0 %v538
        %2665 = vmatpush1.msra.mxu0 %v537
        %2666 = vmatprep.subr.mxu0 %v542
        %2667 = vmatpush1.msra.mxu0 %v541
        %2668 = vmatprep.subr.mxu0 %v546
        %2669 = vmatpush1.msra.mxu0 %v545
        %2670 = vmatprep.subr.mxu0 %v550
        %2671 = vmatpush1.msra.mxu0 %v549
        %2672 = vmatprep.subr.mxu0 %v554
        %2673 = vmatpush1.msra.mxu0 %v553
        %2674 = vmatprep.subr.mxu0 %v558
        %2675 = vmatpush1.msra.mxu0 %v557
        %2676 = vmatprep.subr.mxu0 %v562
        %2677 = vmatpush1.msra.mxu0 %v561
        %2678 = vmatprep.subr.mxu0 %v566
        %2679 = vmatpush1.msra.mxu0 %v565
        %2680 = vmatprep.subr.mxu0 %v570
        %2681 = vmatpush1.msra.mxu0 %v569
        %2682 = vmatprep.subr.mxu0 %v574
        %2683 = vmatpush1.msra.mxu0 %v573
        %2684 = vmatprep.subr.mxu0 %v578
        %2685 = vmatpush1.msra.mxu0 %v577
        %2686 = vmatprep.subr.mxu0 %v582
        %2687 = vmatpush1.msra.mxu0 %v581
        %2688 = vmatprep.subr.mxu0 %v586
        %2689 = vmatpush1.msra.mxu0 %v585
        %2690 = vmatprep.subr.mxu0 %v590
        %2691 = vmatpush1.msra.mxu0 %v589
        %2692 = vmatprep.subr.mxu0 %v594
        %2693 = vmatpush1.msra.mxu0 %v593
        %2694 = vmatprep.subr.mxu0 %v598
        %2695 = vmatpush1.msra.mxu0 %v597
        %2696 = vmatprep.subr.mxu0 %v602
        %2697 = vmatpush1.msra.mxu0 %v601
        %2698 = vmatprep.subr.mxu0 %v606
        %2699 = vmatpush1.msra.mxu0 %v605
        %2700 = vmatprep.subr.mxu0 %v610
        %2701 = vmatpush1.msra.mxu0 %v609
        %2702 = vmatprep.subr.mxu0 %v614
        %2703 = vmatpush1.msra.mxu0 %v613
        %2704 = vmatprep.subr.mxu0 %v618
        %2705 = vmatpush1.msra.mxu0 %v617
        %2706 = vmatprep.subr.mxu0 %v622
        %2707 = vmatpush1.msra.mxu0 %v621
        %2708 = vmatprep.subr.mxu0 %v626
        %2709 = vmatpush1.msra.mxu0 %v625
        %2710 = vmatprep.subr.mxu0 %v630
        %2711 = vmatpush1.msra.mxu0 %v629
        %2712 = vmatprep.subr.mxu0 %v634
        %2713 = vmatpush1.msra.mxu0 %v633
        %2714 = vmatprep.subr.mxu0 %v638
        %2715 = vmatpush1.msra.mxu0 %v637
        %2716 = vmatprep.subr.mxu0 %v642
        %2717 = vmatpush1.msra.mxu0 %v641
        %2718 = vmatprep.subr.mxu0 %v646
        %2719 = vmatpush1.msra.mxu0 %v645
        %2720 = vmatprep.subr.mxu0 %v650
        %2721 = vmatpush1.msra.mxu0 %v649
        %2722 = vmatprep.subr.mxu0 %v654
        %2723 = vmatpush1.msra.mxu0 %v653
        %2724 = vmatprep.subr.mxu0 %v658
        %2725 = vmatpush1.msra.mxu0 %v657
        %2726 = vmatprep.subr.mxu0 %v662
        %2727 = vmatpush1.msra.mxu0 %v661
        %2728 = vmatprep.mubr.f32.mxu0 %v2474
        %2729 = vmatmul.mubr.f32.gmra.mrb[0].mxu0 %v2663
        %v2730 = vpop.f32.mrb[0].mxu0
        %v2731 = vadd.f32 %v671, %v2730
        %v2732 = vpop.f32.mrb[0].mxu0
        %v2733 = vadd.f32 %v675, %v2732
        %2734 = vdwg.mxu0
        %2735 = vmatprep.subr.mxu0 %v540
        %2736 = vmatpush1.msra.mxu0 %v539
        %2737 = vmatprep.subr.mxu0 %v544
        %2738 = vmatpush1.msra.mxu0 %v543
        %2739 = vmatprep.subr.mxu0 %v548
        %2740 = vmatpush1.msra.mxu0 %v547
        %2741 = vmatprep.subr.mxu0 %v552
        %2742 = vmatpush1.msra.mxu0 %v551
        %2743 = vmatprep.subr.mxu0 %v556
        %2744 = vmatpush1.msra.mxu0 %v555
        %2745 = vmatprep.subr.mxu0 %v560
        %2746 = vmatpush1.msra.mxu0 %v559
        %2747 = vmatprep.subr.mxu0 %v564
        %2748 = vmatpush1.msra.mxu0 %v563
        %2749 = vmatprep.subr.mxu0 %v568
        %2750 = vmatpush1.msra.mxu0 %v567
        %2751 = vmatprep.subr.mxu0 %v572
        %2752 = vmatpush1.msra.mxu0 %v571
        %2753 = vmatprep.subr.mxu0 %v576
        %2754 = vmatpush1.msra.mxu0 %v575
        %2755 = vmatprep.subr.mxu0 %v580
        %2756 = vmatpush1.msra.mxu0 %v579
        %2757 = vmatprep.subr.mxu0 %v584
        %2758 = vmatpush1.msra.mxu0 %v583
        %2759 = vmatprep.subr.mxu0 %v588
        %2760 = vmatpush1.msra.mxu0 %v587
        %2761 = vmatprep.subr.mxu0 %v592
        %2762 = vmatpush1.msra.mxu0 %v591
        %2763 = vmatprep.subr.mxu0 %v596
        %2764 = vmatpush1.msra.mxu0 %v595
        %2765 = vmatprep.subr.mxu0 %v600
        %2766 = vmatpush1.msra.mxu0 %v599
        %2767 = vmatprep.subr.mxu0 %v604
        %2768 = vmatpush1.msra.mxu0 %v603
        %2769 = vmatprep.subr.mxu0 %v608
        %2770 = vmatpush1.msra.mxu0 %v607
        %2771 = vmatprep.subr.mxu0 %v612
        %2772 = vmatpush1.msra.mxu0 %v611
        %2773 = vmatprep.subr.mxu0 %v616
        %2774 = vmatpush1.msra.mxu0 %v615
        %2775 = vmatprep.subr.mxu0 %v620
        %2776 = vmatpush1.msra.mxu0 %v619
        %2777 = vmatprep.subr.mxu0 %v624
        %2778 = vmatpush1.msra.mxu0 %v623
        %2779 = vmatprep.subr.mxu0 %v628
        %2780 = vmatpush1.msra.mxu0 %v627
        %2781 = vmatprep.subr.mxu0 %v632
        %2782 = vmatpush1.msra.mxu0 %v631
        %2783 = vmatprep.subr.mxu0 %v636
        %2784 = vmatpush1.msra.mxu0 %v635
        %2785 = vmatprep.subr.mxu0 %v640
        %2786 = vmatpush1.msra.mxu0 %v639
        %2787 = vmatprep.subr.mxu0 %v644
        %2788 = vmatpush1.msra.mxu0 %v643
        %2789 = vmatprep.subr.mxu0 %v648
        %2790 = vmatpush1.msra.mxu0 %v647
        %2791 = vmatprep.subr.mxu0 %v652
        %2792 = vmatpush1.msra.mxu0 %v651
        %2793 = vmatprep.subr.mxu0 %v656
        %2794 = vmatpush1.msra.mxu0 %v655
        %2795 = vmatprep.subr.mxu0 %v660
        %2796 = vmatpush1.msra.mxu0 %v659
        %2797 = vmatprep.subr.mxu0 %v664
        %2798 = vmatpush1.msra.mxu0 %v663
        %2799 = vmatprep.mubr.f32.mxu0 %v2474
        %2800 = vmatmul.mubr.f32.gmra.mrb[0].mxu0 %v2663
        %v2801 = vpop.f32.mrb[0].mxu0
        %v2802 = vadd.f32 %v679, %v2801
        %v2803 = vpop.f32.mrb[0].mxu0
        %v2804 = vadd.f32 %v683, %v2803
        %2805 = vdwg.mxu0
        %v2806 = vmul.f32 %v2731, %v705
        %v2807 = vmul.f32 %v2733, %v706
        %v2808 = vmul.f32 %v2802, %v707
        %v2809 = vmul.f32 %v2804, %v708
        %v2810 = vtanh.pop %v2806
        %v2811 = vtanh.pop %v2807
        %v2812 = vtanh.pop %v2808
        %v2813 = vtanh.pop %v2809
        %v2814 = vmul.f32 %v2810, %v705
        %v2815 = vmul.f32 %v2811, %v706
        %v2816 = vmul.f32 %v2812, %v707
        %v2817 = vmul.f32 %v2813, %v708
        %v2818 = vadd.f32 %v2814, %v709
        %v2819 = vadd.f32 %v2815, %v710
        %v2820 = vadd.f32 %v2816, %v711
        %v2821 = vadd.f32 %v2817, %v712
        %v2822 = vmul.f32 %v2819, %v2475
        %v2823 = vmul.f32 %v2818, %v2820
        %v2824 = vadd.f32 %v2822, %v2823
        %v2825 = vtanh.pop %v2824
        %v2826 = vmul.f32 %v2821, %v2825
        %v2827 = vsel %vm2486, %v2826, %v2474
        %v2828 = vsel %vm2486, %v2824, %v2475
        %v2829 = vsel %vm2486, %v2826, 0.0
        %s2830 = scalar_lea.vmem %s457, 32 [#allocation19]
        %2831 = vst [vmem:[%s2830] sm:$0xff] %v2829
        %s2832 = sadd.s32 %s665, 5
        %v2833 = vstv %s2832
        %vm2834 = vcmp.lt.s32.totalorder %v2833, %v472
        %v2835 = vsel %vm2834, 1, 0
        %2836 = vset.pattern.permute.xlu0 0
        %2837 = vperm.xlu0 %2836, %v2835
        %v2838 = vpop.permute.xlu0 %2837
        %vm2839 = vcmp.eq.s32.totalorder %v2838, 1
        %s2840 = smul.u32 5, 4
        %s2841 = smul.addr %s2840, 8
        %s2842 = scalar_lea.vmem [#allocation2], %s2841
        %v2843 = vld [vmem:[%s2842] sm:$0xff]
        %v2844 = vld [vmem:[%s2842 + $0x8] sm:$0xff]
        %v2845 = vld [vmem:[%s2842 + $0x10] sm:$0xff]
        %v2846 = vld [vmem:[%s2842 + $0x18] sm:$0xff]
        %2847 = vmatprep.subr.mxu0 %v474
        %2848 = vmatpush1.msra.mxu0 %v473
        %2849 = vmatprep.subr.mxu0 %v478
        %2850 = vmatpush1.msra.mxu0 %v477
        %2851 = vmatprep.subr.mxu0 %v482
        %2852 = vmatpush1.msra.mxu0 %v481
        %2853 = vmatprep.subr.mxu0 %v486
        %2854 = vmatpush1.msra.mxu0 %v485
        %2855 = vmatprep.subr.mxu0 %v490
        %2856 = vmatpush1.msra.mxu0 %v489
        %2857 = vmatprep.subr.mxu0 %v494
        %2858 = vmatpush1.msra.mxu0 %v493
        %2859 = vmatprep.subr.mxu0 %v498
        %2860 = vmatpush1.msra.mxu0 %v497
        %2861 = vmatprep.subr.mxu0 %v502
        %2862 = vmatpush1.msra.mxu0 %v501
        %2863 = vmatprep.subr.mxu0 %v506
        %2864 = vmatpush1.msra.mxu0 %v505
        %2865 = vmatprep.subr.mxu0 %v510
        %2866 = vmatpush1.msra.mxu0 %v509
        %2867 = vmatprep.subr.mxu0 %v514
        %2868 = vmatpush1.msra.mxu0 %v513
        %2869 = vmatprep.subr.mxu0 %v518
        %2870 = vmatpush1.msra.mxu0 %v517
        %2871 = vmatprep.subr.mxu0 %v522
        %2872 = vmatpush1.msra.mxu0 %v521
        %2873 = vmatprep.subr.mxu0 %v526
        %2874 = vmatpush1.msra.mxu0 %v525
        %2875 = vmatprep.subr.mxu0 %v530
        %2876 = vmatpush1.msra.mxu0 %v529
        %2877 = vmatprep.subr.mxu0 %v534
        %2878 = vmatpush1.msra.mxu0 %v533
        %2879 = vmatprep.subr.mxu0 0.0
        %2880 = vmatpush1.msra.mxu0 0.0
        %2881 = vmatprep.subr.mxu0 0.0
        %2882 = vmatpush1.msra.mxu0 0.0
        %2883 = vmatprep.subr.mxu0 0.0
        %2884 = vmatpush1.msra.mxu0 0.0
        %2885 = vmatprep.subr.mxu0 0.0
        %2886 = vmatpush1.msra.mxu0 0.0
        %2887 = vmatprep.subr.mxu0 0.0
        %2888 = vmatpush1.msra.mxu0 0.0
        %2889 = vmatprep.subr.mxu0 0.0
        %2890 = vmatpush1.msra.mxu0 0.0
        %2891 = vmatprep.subr.mxu0 0.0
        %2892 = vmatpush1.msra.mxu0 0.0
        %2893 = vmatprep.subr.mxu0 0.0
        %2894 = vmatpush1.msra.mxu0 0.0
        %2895 = vmatprep.subr.mxu0 0.0
        %2896 = vmatpush1.msra.mxu0 0.0
        %2897 = vmatprep.subr.mxu0 0.0
        %2898 = vmatpush1.msra.mxu0 0.0
        %2899 = vmatprep.subr.mxu0 0.0
        %2900 = vmatpush1.msra.mxu0 0.0
        %2901 = vmatprep.subr.mxu0 0.0
        %2902 = vmatpush1.msra.mxu0 0.0
        %2903 = vmatprep.subr.mxu0 0.0
        %2904 = vmatpush1.msra.mxu0 0.0
        %2905 = vmatprep.subr.mxu0 0.0
        %2906 = vmatpush1.msra.mxu0 0.0
        %2907 = vmatprep.subr.mxu0 0.0
        %2908 = vmatpush1.msra.mxu0 0.0
        %2909 = vmatprep.subr.mxu0 0.0
        %2910 = vmatpush1.msra.mxu0 0.0
        %2911 = vmatprep.mubr.f32.mxu0 0.0
        %2912 = vmatmul.mubr.f32.gmra.mrb[0].mxu0 %v2661
        %v2913 = vpop.f32.mrb[0].mxu0
        %v2914 = vadd.f32 0.0, %v2913
        %v2915 = vpop.f32.mrb[0].mxu0
        %v2916 = vadd.f32 0.0, %v2915
        %2917 = vdwg.mxu0
        %2918 = vmatprep.subr.mxu0 %v476
        %2919 = vmatpush1.msra.mxu0 %v475
        %2920 = vmatprep.subr.mxu0 %v480
        %2921 = vmatpush1.msra.mxu0 %v479
        %2922 = vmatprep.subr.mxu0 %v484
        %2923 = vmatpush1.msra.mxu0 %v483
        %2924 = vmatprep.subr.mxu0 %v488
        %2925 = vmatpush1.msra.mxu0 %v487
        %2926 = vmatprep.subr.mxu0 %v492
        %2927 = vmatpush1.msra.mxu0 %v491
        %2928 = vmatprep.subr.mxu0 %v496
        %2929 = vmatpush1.msra.mxu0 %v495
        %2930 = vmatprep.subr.mxu0 %v500
        %2931 = vmatpush1.msra.mxu0 %v499
        %2932 = vmatprep.subr.mxu0 %v504
        %2933 = vmatpush1.msra.mxu0 %v503
        %2934 = vmatprep.subr.mxu0 %v508
        %2935 = vmatpush1.msra.mxu0 %v507
        %2936 = vmatprep.subr.mxu0 %v512
        %2937 = vmatpush1.msra.mxu0 %v511
        %2938 = vmatprep.subr.mxu0 %v516
        %2939 = vmatpush1.msra.mxu0 %v515
        %2940 = vmatprep.subr.mxu0 %v520
        %2941 = vmatpush1.msra.mxu0 %v519
        %2942 = vmatprep.subr.mxu0 %v524
        %2943 = vmatpush1.msra.mxu0 %v523
        %2944 = vmatprep.subr.mxu0 %v528
        %2945 = vmatpush1.msra.mxu0 %v527
        %2946 = vmatprep.subr.mxu0 %v532
        %2947 = vmatpush1.msra.mxu0 %v531
        %2948 = vmatprep.subr.mxu0 %v536
        %2949 = vmatpush1.msra.mxu0 %v535
        %2950 = vmatprep.subr.mxu0 0.0
        %2951 = vmatpush1.msra.mxu0 0.0
        %2952 = vmatprep.subr.mxu0 0.0
        %2953 = vmatpush1.msra.mxu0 0.0
        %2954 = vmatprep.subr.mxu0 0.0
        %2955 = vmatpush1.msra.mxu0 0.0
        %2956 = vmatprep.subr.mxu0 0.0
        %2957 = vmatpush1.msra.mxu0 0.0
        %2958 = vmatprep.subr.mxu0 0.0
        %2959 = vmatpush1.msra.mxu0 0.0
        %2960 = vmatprep.subr.mxu0 0.0
        %2961 = vmatpush1.msra.mxu0 0.0
        %2962 = vmatprep.subr.mxu0 0.0
        %2963 = vmatpush1.msra.mxu0 0.0
        %2964 = vmatprep.subr.mxu0 0.0
        %2965 = vmatpush1.msra.mxu0 0.0
        %2966 = vmatprep.subr.mxu0 0.0
        %2967 = vmatpush1.msra.mxu0 0.0
        %2968 = vmatprep.subr.mxu0 0.0
        %2969 = vmatpush1.msra.mxu0 0.0
        %2970 = vmatprep.subr.mxu0 0.0
        %2971 = vmatpush1.msra.mxu0 0.0
        %2972 = vmatprep.subr.mxu0 0.0
        %2973 = vmatpush1.msra.mxu0 0.0
        %2974 = vmatprep.subr.mxu0 0.0
        %2975 = vmatpush1.msra.mxu0 0.0
        %2976 = vmatprep.subr.mxu0 0.0
        %2977 = vmatpush1.msra.mxu0 0.0
        %2978 = vmatprep.subr.mxu0 0.0
        %2979 = vmatpush1.msra.mxu0 0.0
        %2980 = vmatprep.subr.mxu0 0.0
        %2981 = vmatpush1.msra.mxu0 0.0
        %2982 = vmatprep.mubr.f32.mxu0 0.0
        %2983 = vmatmul.mubr.f32.gmra.mrb[0].mxu0 %v2661
        %v2984 = vpop.f32.mrb[0].mxu0
        %v2985 = vadd.f32 0.0, %v2984
        %v2986 = vpop.f32.mrb[0].mxu0
        %v2987 = vadd.f32 0.0, %v2986
        %2988 = vdwg.mxu0
        %v2989 = vadd.f32 %v2843, %v2914
        %v2990 = vadd.f32 %v2844, %v2916
        %v2991 = vadd.f32 %v2845, %v2985
        %v2992 = vadd.f32 %v2846, %v2987
        %v2993 = vmul.f32 %v2989, %v705
        %v2994 = vmul.f32 %v2990, %v706
        %v2995 = vmul.f32 %v2991, %v707
        %v2996 = vmul.f32 %v2992, %v708
        %v2997 = vtanh.pop %v2993
        %v2998 = vtanh.pop %v2994
        %v2999 = vtanh.pop %v2995
        %v3000 = vtanh.pop %v2996
        %v3001 = vmul.f32 %v2997, %v705
        %v3002 = vmul.f32 %v2998, %v706
        %v3003 = vmul.f32 %v2999, %v707
        %v3004 = vmul.f32 %v3000, %v708
        %v3005 = vadd.f32 %v3001, %v709
        %v3006 = vadd.f32 %v3002, %v710
        %v3007 = vadd.f32 %v3003, %v711
        %v3008 = vadd.f32 %v3004, %v712
        %v3009 = vmul.f32 %v3006, %v2662
        %v3010 = vmul.f32 %v3005, %v3007
        %v3011 = vadd.f32 %v3009, %v3010
        %v3012 = vtanh.pop %v3011
        %v3013 = vmul.f32 %v3008, %v3012
        %v3014 = vsel %vm2839, %v3013, %v2661
        %v3015 = vsel %vm2839, %v3011, %v2662
        %v3016 = vsel %vm2839, %v3013, 0.0
        %3017 = vmatprep.subr.mxu0 %v538
        %3018 = vmatpush1.msra.mxu0 %v537
        %3019 = vmatprep.subr.mxu0 %v542
        %3020 = vmatpush1.msra.mxu0 %v541
        %3021 = vmatprep.subr.mxu0 %v546
        %3022 = vmatpush1.msra.mxu0 %v545
        %3023 = vmatprep.subr.mxu0 %v550
        %3024 = vmatpush1.msra.mxu0 %v549
        %3025 = vmatprep.subr.mxu0 %v554
        %3026 = vmatpush1.msra.mxu0 %v553
        %3027 = vmatprep.subr.mxu0 %v558
        %3028 = vmatpush1.msra.mxu0 %v557
        %3029 = vmatprep.subr.mxu0 %v562
        %3030 = vmatpush1.msra.mxu0 %v561
        %3031 = vmatprep.subr.mxu0 %v566
        %3032 = vmatpush1.msra.mxu0 %v565
        %3033 = vmatprep.subr.mxu0 %v570
        %3034 = vmatpush1.msra.mxu0 %v569
        %3035 = vmatprep.subr.mxu0 %v574
        %3036 = vmatpush1.msra.mxu0 %v573
        %3037 = vmatprep.subr.mxu0 %v578
        %3038 = vmatpush1.msra.mxu0 %v577
        %3039 = vmatprep.subr.mxu0 %v582
        %3040 = vmatpush1.msra.mxu0 %v581
        %3041 = vmatprep.subr.mxu0 %v586
        %3042 = vmatpush1.msra.mxu0 %v585
        %3043 = vmatprep.subr.mxu0 %v590
        %3044 = vmatpush1.msra.mxu0 %v589
        %3045 = vmatprep.subr.mxu0 %v594
        %3046 = vmatpush1.msra.mxu0 %v593
        %3047 = vmatprep.subr.mxu0 %v598
        %3048 = vmatpush1.msra.mxu0 %v597
        %3049 = vmatprep.subr.mxu0 %v602
        %3050 = vmatpush1.msra.mxu0 %v601
        %3051 = vmatprep.subr.mxu0 %v606
        %3052 = vmatpush1.msra.mxu0 %v605
        %3053 = vmatprep.subr.mxu0 %v610
        %3054 = vmatpush1.msra.mxu0 %v609
        %3055 = vmatprep.subr.mxu0 %v614
        %3056 = vmatpush1.msra.mxu0 %v613
        %3057 = vmatprep.subr.mxu0 %v618
        %3058 = vmatpush1.msra.mxu0 %v617
        %3059 = vmatprep.subr.mxu0 %v622
        %3060 = vmatpush1.msra.mxu0 %v621
        %3061 = vmatprep.subr.mxu0 %v626
        %3062 = vmatpush1.msra.mxu0 %v625
        %3063 = vmatprep.subr.mxu0 %v630
        %3064 = vmatpush1.msra.mxu0 %v629
        %3065 = vmatprep.subr.mxu0 %v634
        %3066 = vmatpush1.msra.mxu0 %v633
        %3067 = vmatprep.subr.mxu0 %v638
        %3068 = vmatpush1.msra.mxu0 %v637
        %3069 = vmatprep.subr.mxu0 %v642
        %3070 = vmatpush1.msra.mxu0 %v641
        %3071 = vmatprep.subr.mxu0 %v646
        %3072 = vmatpush1.msra.mxu0 %v645
        %3073 = vmatprep.subr.mxu0 %v650
        %3074 = vmatpush1.msra.mxu0 %v649
        %3075 = vmatprep.subr.mxu0 %v654
        %3076 = vmatpush1.msra.mxu0 %v653
        %3077 = vmatprep.subr.mxu0 %v658
        %3078 = vmatpush1.msra.mxu0 %v657
        %3079 = vmatprep.subr.mxu0 %v662
        %3080 = vmatpush1.msra.mxu0 %v661
        %3081 = vmatprep.mubr.f32.mxu0 %v2827
        %3082 = vmatmul.mubr.f32.gmra.mrb[0].mxu0 %v3016
        %v3083 = vpop.f32.mrb[0].mxu0
        %v3084 = vadd.f32 %v671, %v3083
        %v3085 = vpop.f32.mrb[0].mxu0
        %v3086 = vadd.f32 %v675, %v3085
        %3087 = vdwg.mxu0
        %3088 = vmatprep.subr.mxu0 %v540
        %3089 = vmatpush1.msra.mxu0 %v539
        %3090 = vmatprep.subr.mxu0 %v544
        %3091 = vmatpush1.msra.mxu0 %v543
        %3092 = vmatprep.subr.mxu0 %v548
        %3093 = vmatpush1.msra.mxu0 %v547
        %3094 = vmatprep.subr.mxu0 %v552
        %3095 = vmatpush1.msra.mxu0 %v551
        %3096 = vmatprep.subr.mxu0 %v556
        %3097 = vmatpush1.msra.mxu0 %v555
        %3098 = vmatprep.subr.mxu0 %v560
        %3099 = vmatpush1.msra.mxu0 %v559
        %3100 = vmatprep.subr.mxu0 %v564
        %3101 = vmatpush1.msra.mxu0 %v563
        %3102 = vmatprep.subr.mxu0 %v568
        %3103 = vmatpush1.msra.mxu0 %v567
        %3104 = vmatprep.subr.mxu0 %v572
        %3105 = vmatpush1.msra.mxu0 %v571
        %3106 = vmatprep.subr.mxu0 %v576
        %3107 = vmatpush1.msra.mxu0 %v575
        %3108 = vmatprep.subr.mxu0 %v580
        %3109 = vmatpush1.msra.mxu0 %v579
        %3110 = vmatprep.subr.mxu0 %v584
        %3111 = vmatpush1.msra.mxu0 %v583
        %3112 = vmatprep.subr.mxu0 %v588
        %3113 = vmatpush1.msra.mxu0 %v587
        %3114 = vmatprep.subr.mxu0 %v592
        %3115 = vmatpush1.msra.mxu0 %v591
        %3116 = vmatprep.subr.mxu0 %v596
        %3117 = vmatpush1.msra.mxu0 %v595
        %3118 = vmatprep.subr.mxu0 %v600
        %3119 = vmatpush1.msra.mxu0 %v599
        %3120 = vmatprep.subr.mxu0 %v604
        %3121 = vmatpush1.msra.mxu0 %v603
        %3122 = vmatprep.subr.mxu0 %v608
        %3123 = vmatpush1.msra.mxu0 %v607
        %3124 = vmatprep.subr.mxu0 %v612
        %3125 = vmatpush1.msra.mxu0 %v611
        %3126 = vmatprep.subr.mxu0 %v616
        %3127 = vmatpush1.msra.mxu0 %v615
        %3128 = vmatprep.subr.mxu0 %v620
        %3129 = vmatpush1.msra.mxu0 %v619
        %3130 = vmatprep.subr.mxu0 %v624
        %3131 = vmatpush1.msra.mxu0 %v623
        %3132 = vmatprep.subr.mxu0 %v628
        %3133 = vmatpush1.msra.mxu0 %v627
        %3134 = vmatprep.subr.mxu0 %v632
        %3135 = vmatpush1.msra.mxu0 %v631
        %3136 = vmatprep.subr.mxu0 %v636
        %3137 = vmatpush1.msra.mxu0 %v635
        %3138 = vmatprep.subr.mxu0 %v640
        %3139 = vmatpush1.msra.mxu0 %v639
        %3140 = vmatprep.subr.mxu0 %v644
        %3141 = vmatpush1.msra.mxu0 %v643
        %3142 = vmatprep.subr.mxu0 %v648
        %3143 = vmatpush1.msra.mxu0 %v647
        %3144 = vmatprep.subr.mxu0 %v652
        %3145 = vmatpush1.msra.mxu0 %v651
        %3146 = vmatprep.subr.mxu0 %v656
        %3147 = vmatpush1.msra.mxu0 %v655
        %3148 = vmatprep.subr.mxu0 %v660
        %3149 = vmatpush1.msra.mxu0 %v659
        %3150 = vmatprep.subr.mxu0 %v664
        %3151 = vmatpush1.msra.mxu0 %v663
        %3152 = vmatprep.mubr.f32.mxu0 %v2827
        %3153 = vmatmul.mubr.f32.gmra.mrb[0].mxu0 %v3016
        %v3154 = vpop.f32.mrb[0].mxu0
        %v3155 = vadd.f32 %v679, %v3154
        %v3156 = vpop.f32.mrb[0].mxu0
        %v3157 = vadd.f32 %v683, %v3156
        %3158 = vdwg.mxu0
        %v3159 = vmul.f32 %v3084, %v705
        %v3160 = vmul.f32 %v3086, %v706
        %v3161 = vmul.f32 %v3155, %v707
        %v3162 = vmul.f32 %v3157, %v708
        %v3163 = vtanh.pop %v3159
        %v3164 = vtanh.pop %v3160
        %v3165 = vtanh.pop %v3161
        %v3166 = vtanh.pop %v3162
        %v3167 = vmul.f32 %v3163, %v705
        %v3168 = vmul.f32 %v3164, %v706
        %v3169 = vmul.f32 %v3165, %v707
        %v3170 = vmul.f32 %v3166, %v708
        %v3171 = vadd.f32 %v3167, %v709
        %v3172 = vadd.f32 %v3168, %v710
        %v3173 = vadd.f32 %v3169, %v711
        %v3174 = vadd.f32 %v3170, %v712
        %v3175 = vmul.f32 %v3172, %v2828
        %v3176 = vmul.f32 %v3171, %v3173
        %v3177 = vadd.f32 %v3175, %v3176
        %v3178 = vtanh.pop %v3177
        %v3179 = vmul.f32 %v3174, %v3178
        %v3180 = vsel %vm2839, %v3179, %v2827
        %v3181 = vsel %vm2839, %v3177, %v2828
        %v3182 = vsel %vm2839, %v3179, 0.0
        %s3183 = scalar_lea.vmem %s457, 40 [#allocation19]
        %3184 = vst [vmem:[%s3183] sm:$0xff] %v3182
        %s3185 = sadd.s32 %s665, 6
        %v3186 = vstv %s3185
        %vm3187 = vcmp.lt.s32.totalorder %v3186, %v472
        %v3188 = vsel %vm3187, 1, 0
        %3189 = vset.pattern.permute.xlu0 0
        %3190 = vperm.xlu0 %3189, %v3188
        %v3191 = vpop.permute.xlu0 %3190
        %vm3192 = vcmp.eq.s32.totalorder %v3191, 1
        %s3193 = smul.u32 6, 4
        %s3194 = smul.addr %s3193, 8
        %s3195 = scalar_lea.vmem [#allocation2], %s3194
        %v3196 = vld [vmem:[%s3195] sm:$0xff]
        %v3197 = vld [vmem:[%s3195 + $0x8] sm:$0xff]
        %v3198 = vld [vmem:[%s3195 + $0x10] sm:$0xff]
        %v3199 = vld [vmem:[%s3195 + $0x18] sm:$0xff]
        %3200 = vmatprep.subr.mxu0 %v474
        %3201 = vmatpush1.msra.mxu0 %v473
        %3202 = vmatprep.subr.mxu0 %v478
        %3203 = vmatpush1.msra.mxu0 %v477
        %3204 = vmatprep.subr.mxu0 %v482
        %3205 = vmatpush1.msra.mxu0 %v481
        %3206 = vmatprep.subr.mxu0 %v486
        %3207 = vmatpush1.msra.mxu0 %v485
        %3208 = vmatprep.subr.mxu0 %v490
        %3209 = vmatpush1.msra.mxu0 %v489
        %3210 = vmatprep.subr.mxu0 %v494
        %3211 = vmatpush1.msra.mxu0 %v493
        %3212 = vmatprep.subr.mxu0 %v498
        %3213 = vmatpush1.msra.mxu0 %v497
        %3214 = vmatprep.subr.mxu0 %v502
        %3215 = vmatpush1.msra.mxu0 %v501
        %3216 = vmatprep.subr.mxu0 %v506
        %3217 = vmatpush1.msra.mxu0 %v505
        %3218 = vmatprep.subr.mxu0 %v510
        %3219 = vmatpush1.msra.mxu0 %v509
        %3220 = vmatprep.subr.mxu0 %v514
        %3221 = vmatpush1.msra.mxu0 %v513
        %3222 = vmatprep.subr.mxu0 %v518
        %3223 = vmatpush1.msra.mxu0 %v517
        %3224 = vmatprep.subr.mxu0 %v522
        %3225 = vmatpush1.msra.mxu0 %v521
        %3226 = vmatprep.subr.mxu0 %v526
        %3227 = vmatpush1.msra.mxu0 %v525
        %3228 = vmatprep.subr.mxu0 %v530
        %3229 = vmatpush1.msra.mxu0 %v529
        %3230 = vmatprep.subr.mxu0 %v534
        %3231 = vmatpush1.msra.mxu0 %v533
        %3232 = vmatprep.subr.mxu0 0.0
        %3233 = vmatpush1.msra.mxu0 0.0
        %3234 = vmatprep.subr.mxu0 0.0
        %3235 = vmatpush1.msra.mxu0 0.0
        %3236 = vmatprep.subr.mxu0 0.0
        %3237 = vmatpush1.msra.mxu0 0.0
        %3238 = vmatprep.subr.mxu0 0.0
        %3239 = vmatpush1.msra.mxu0 0.0
        %3240 = vmatprep.subr.mxu0 0.0
        %3241 = vmatpush1.msra.mxu0 0.0
        %3242 = vmatprep.subr.mxu0 0.0
        %3243 = vmatpush1.msra.mxu0 0.0
        %3244 = vmatprep.subr.mxu0 0.0
        %3245 = vmatpush1.msra.mxu0 0.0
        %3246 = vmatprep.subr.mxu0 0.0
        %3247 = vmatpush1.msra.mxu0 0.0
        %3248 = vmatprep.subr.mxu0 0.0
        %3249 = vmatpush1.msra.mxu0 0.0
        %3250 = vmatprep.subr.mxu0 0.0
        %3251 = vmatpush1.msra.mxu0 0.0
        %3252 = vmatprep.subr.mxu0 0.0
        %3253 = vmatpush1.msra.mxu0 0.0
        %3254 = vmatprep.subr.mxu0 0.0
        %3255 = vmatpush1.msra.mxu0 0.0
        %3256 = vmatprep.subr.mxu0 0.0
        %3257 = vmatpush1.msra.mxu0 0.0
        %3258 = vmatprep.subr.mxu0 0.0
        %3259 = vmatpush1.msra.mxu0 0.0
        %3260 = vmatprep.subr.mxu0 0.0
        %3261 = vmatpush1.msra.mxu0 0.0
        %3262 = vmatprep.subr.mxu0 0.0
        %3263 = vmatpush1.msra.mxu0 0.0
        %3264 = vmatprep.mubr.f32.mxu0 0.0
        %3265 = vmatmul.mubr.f32.gmra.mrb[0].mxu0 %v3014
        %v3266 = vpop.f32.mrb[0].mxu0
        %v3267 = vadd.f32 0.0, %v3266
        %v3268 = vpop.f32.mrb[0].mxu0
        %v3269 = vadd.f32 0.0, %v3268
        %3270 = vdwg.mxu0
        %3271 = vmatprep.subr.mxu0 %v476
        %3272 = vmatpush1.msra.mxu0 %v475
        %3273 = vmatprep.subr.mxu0 %v480
        %3274 = vmatpush1.msra.mxu0 %v479
        %3275 = vmatprep.subr.mxu0 %v484
        %3276 = vmatpush1.msra.mxu0 %v483
        %3277 = vmatprep.subr.mxu0 %v488
        %3278 = vmatpush1.msra.mxu0 %v487
        %3279 = vmatprep.subr.mxu0 %v492
        %3280 = vmatpush1.msra.mxu0 %v491
        %3281 = vmatprep.subr.mxu0 %v496
        %3282 = vmatpush1.msra.mxu0 %v495
        %3283 = vmatprep.subr.mxu0 %v500
        %3284 = vmatpush1.msra.mxu0 %v499
        %3285 = vmatprep.subr.mxu0 %v504
        %3286 = vmatpush1.msra.mxu0 %v503
        %3287 = vmatprep.subr.mxu0 %v508
        %3288 = vmatpush1.msra.mxu0 %v507
        %3289 = vmatprep.subr.mxu0 %v512
        %3290 = vmatpush1.msra.mxu0 %v511
        %3291 = vmatprep.subr.mxu0 %v516
        %3292 = vmatpush1.msra.mxu0 %v515
        %3293 = vmatprep.subr.mxu0 %v520
        %3294 = vmatpush1.msra.mxu0 %v519
        %3295 = vmatprep.subr.mxu0 %v524
        %3296 = vmatpush1.msra.mxu0 %v523
        %3297 = vmatprep.subr.mxu0 %v528
        %3298 = vmatpush1.msra.mxu0 %v527
        %3299 = vmatprep.subr.mxu0 %v532
        %3300 = vmatpush1.msra.mxu0 %v531
        %3301 = vmatprep.subr.mxu0 %v536
        %3302 = vmatpush1.msra.mxu0 %v535
        %3303 = vmatprep.subr.mxu0 0.0
        %3304 = vmatpush1.msra.mxu0 0.0
        %3305 = vmatprep.subr.mxu0 0.0
        %3306 = vmatpush1.msra.mxu0 0.0
        %3307 = vmatprep.subr.mxu0 0.0
        %3308 = vmatpush1.msra.mxu0 0.0
        %3309 = vmatprep.subr.mxu0 0.0
        %3310 = vmatpush1.msra.mxu0 0.0
        %3311 = vmatprep.subr.mxu0 0.0
        %3312 = vmatpush1.msra.mxu0 0.0
        %3313 = vmatprep.subr.mxu0 0.0
        %3314 = vmatpush1.msra.mxu0 0.0
        %3315 = vmatprep.subr.mxu0 0.0
        %3316 = vmatpush1.msra.mxu0 0.0
        %3317 = vmatprep.subr.mxu0 0.0
        %3318 = vmatpush1.msra.mxu0 0.0
        %3319 = vmatprep.subr.mxu0 0.0
        %3320 = vmatpush1.msra.mxu0 0.0
        %3321 = vmatprep.subr.mxu0 0.0
        %3322 = vmatpush1.msra.mxu0 0.0
        %3323 = vmatprep.subr.mxu0 0.0
        %3324 = vmatpush1.msra.mxu0 0.0
        %3325 = vmatprep.subr.mxu0 0.0
        %3326 = vmatpush1.msra.mxu0 0.0
        %3327 = vmatprep.subr.mxu0 0.0
        %3328 = vmatpush1.msra.mxu0 0.0
        %3329 = vmatprep.subr.mxu0 0.0
        %3330 = vmatpush1.msra.mxu0 0.0
        %3331 = vmatprep.subr.mxu0 0.0
        %3332 = vmatpush1.msra.mxu0 0.0
        %3333 = vmatprep.subr.mxu0 0.0
        %3334 = vmatpush1.msra.mxu0 0.0
        %3335 = vmatprep.mubr.f32.mxu0 0.0
        %3336 = vmatmul.mubr.f32.gmra.mrb[0].mxu0 %v3014
        %v3337 = vpop.f32.mrb[0].mxu0
        %v3338 = vadd.f32 0.0, %v3337
        %v3339 = vpop.f32.mrb[0].mxu0
        %v3340 = vadd.f32 0.0, %v3339
        %3341 = vdwg.mxu0
        %v3342 = vadd.f32 %v3196, %v3267
        %v3343 = vadd.f32 %v3197, %v3269
        %v3344 = vadd.f32 %v3198, %v3338
        %v3345 = vadd.f32 %v3199, %v3340
        %v3346 = vmul.f32 %v3342, %v705
        %v3347 = vmul.f32 %v3343, %v706
        %v3348 = vmul.f32 %v3344, %v707
        %v3349 = vmul.f32 %v3345, %v708
        %v3350 = vtanh.pop %v3346
        %v3351 = vtanh.pop %v3347
        %v3352 = vtanh.pop %v3348
        %v3353 = vtanh.pop %v3349
        %v3354 = vmul.f32 %v3350, %v705
        %v3355 = vmul.f32 %v3351, %v706
        %v3356 = vmul.f32 %v3352, %v707
        %v3357 = vmul.f32 %v3353, %v708
        %v3358 = vadd.f32 %v3354, %v709
        %v3359 = vadd.f32 %v3355, %v710
        %v3360 = vadd.f32 %v3356, %v711
        %v3361 = vadd.f32 %v3357, %v712
        %v3362 = vmul.f32 %v3359, %v3015
        %v3363 = vmul.f32 %v3358, %v3360
        %v3364 = vadd.f32 %v3362, %v3363
        %v3365 = vtanh.pop %v3364
        %v3366 = vmul.f32 %v3361, %v3365
        %v3367 = vsel %vm3192, %v3366, %v3014
        %v3368 = vsel %vm3192, %v3364, %v3015
        %v3369 = vsel %vm3192, %v3366, 0.0
        %3370 = vmatprep.subr.mxu0 %v538
        %3371 = vmatpush1.msra.mxu0 %v537
        %3372 = vmatprep.subr.mxu0 %v542
        %3373 = vmatpush1.msra.mxu0 %v541
        %3374 = vmatprep.subr.mxu0 %v546
        %3375 = vmatpush1.msra.mxu0 %v545
        %3376 = vmatprep.subr.mxu0 %v550
        %3377 = vmatpush1.msra.mxu0 %v549
        %3378 = vmatprep.subr.mxu0 %v554
        %3379 = vmatpush1.msra.mxu0 %v553
        %3380 = vmatprep.subr.mxu0 %v558
        %3381 = vmatpush1.msra.mxu0 %v557
        %3382 = vmatprep.subr.mxu0 %v562
        %3383 = vmatpush1.msra.mxu0 %v561
        %3384 = vmatprep.subr.mxu0 %v566
        %3385 = vmatpush1.msra.mxu0 %v565
        %3386 = vmatprep.subr.mxu0 %v570
        %3387 = vmatpush1.msra.mxu0 %v569
        %3388 = vmatprep.subr.mxu0 %v574
        %3389 = vmatpush1.msra.mxu0 %v573
        %3390 = vmatprep.subr.mxu0 %v578
        %3391 = vmatpush1.msra.mxu0 %v577
        %3392 = vmatprep.subr.mxu0 %v582
        %3393 = vmatpush1.msra.mxu0 %v581
        %3394 = vmatprep.subr.mxu0 %v586
        %3395 = vmatpush1.msra.mxu0 %v585
        %3396 = vmatprep.subr.mxu0 %v590
        %3397 = vmatpush1.msra.mxu0 %v589
        %3398 = vmatprep.subr.mxu0 %v594
        %3399 = vmatpush1.msra.mxu0 %v593
        %3400 = vmatprep.subr.mxu0 %v598
        %3401 = vmatpush1.msra.mxu0 %v597
        %3402 = vmatprep.subr.mxu0 %v602
        %3403 = vmatpush1.msra.mxu0 %v601
        %3404 = vmatprep.subr.mxu0 %v606
        %3405 = vmatpush1.msra.mxu0 %v605
        %3406 = vmatprep.subr.mxu0 %v610
        %3407 = vmatpush1.msra.mxu0 %v609
        %3408 = vmatprep.subr.mxu0 %v614
        %3409 = vmatpush1.msra.mxu0 %v613
        %3410 = vmatprep.subr.mxu0 %v618
        %3411 = vmatpush1.msra.mxu0 %v617
        %3412 = vmatprep.subr.mxu0 %v622
        %3413 = vmatpush1.msra.mxu0 %v621
        %3414 = vmatprep.subr.mxu0 %v626
        %3415 = vmatpush1.msra.mxu0 %v625
        %3416 = vmatprep.subr.mxu0 %v630
        %3417 = vmatpush1.msra.mxu0 %v629
        %3418 = vmatprep.subr.mxu0 %v634
        %3419 = vmatpush1.msra.mxu0 %v633
        %3420 = vmatprep.subr.mxu0 %v638
        %3421 = vmatpush1.msra.mxu0 %v637
        %3422 = vmatprep.subr.mxu0 %v642
        %3423 = vmatpush1.msra.mxu0 %v641
        %3424 = vmatprep.subr.mxu0 %v646
        %3425 = vmatpush1.msra.mxu0 %v645
        %3426 = vmatprep.subr.mxu0 %v650
        %3427 = vmatpush1.msra.mxu0 %v649
        %3428 = vmatprep.subr.mxu0 %v654
        %3429 = vmatpush1.msra.mxu0 %v653
        %3430 = vmatprep.subr.mxu0 %v658
        %3431 = vmatpush1.msra.mxu0 %v657
        %3432 = vmatprep.subr.mxu0 %v662
        %3433 = vmatpush1.msra.mxu0 %v661
        %3434 = vmatprep.mubr.f32.mxu0 %v3180
        %3435 = vmatmul.mubr.f32.gmra.mrb[0].mxu0 %v3369
        %v3436 = vpop.f32.mrb[0].mxu0
        %v3437 = vadd.f32 %v671, %v3436
        %v3438 = vpop.f32.mrb[0].mxu0
        %v3439 = vadd.f32 %v675, %v3438
        %3440 = vdwg.mxu0
        %3441 = vmatprep.subr.mxu0 %v540
        %3442 = vmatpush1.msra.mxu0 %v539
        %3443 = vmatprep.subr.mxu0 %v544
        %3444 = vmatpush1.msra.mxu0 %v543
        %3445 = vmatprep.subr.mxu0 %v548
        %3446 = vmatpush1.msra.mxu0 %v547
        %3447 = vmatprep.subr.mxu0 %v552
        %3448 = vmatpush1.msra.mxu0 %v551
        %3449 = vmatprep.subr.mxu0 %v556
        %3450 = vmatpush1.msra.mxu0 %v555
        %3451 = vmatprep.subr.mxu0 %v560
        %3452 = vmatpush1.msra.mxu0 %v559
        %3453 = vmatprep.subr.mxu0 %v564
        %3454 = vmatpush1.msra.mxu0 %v563
        %3455 = vmatprep.subr.mxu0 %v568
        %3456 = vmatpush1.msra.mxu0 %v567
        %3457 = vmatprep.subr.mxu0 %v572
        %3458 = vmatpush1.msra.mxu0 %v571
        %3459 = vmatprep.subr.mxu0 %v576
        %3460 = vmatpush1.msra.mxu0 %v575
        %3461 = vmatprep.subr.mxu0 %v580
        %3462 = vmatpush1.msra.mxu0 %v579
        %3463 = vmatprep.subr.mxu0 %v584
        %3464 = vmatpush1.msra.mxu0 %v583
        %3465 = vmatprep.subr.mxu0 %v588
        %3466 = vmatpush1.msra.mxu0 %v587
        %3467 = vmatprep.subr.mxu0 %v592
        %3468 = vmatpush1.msra.mxu0 %v591
        %3469 = vmatprep.subr.mxu0 %v596
        %3470 = vmatpush1.msra.mxu0 %v595
        %3471 = vmatprep.subr.mxu0 %v600
        %3472 = vmatpush1.msra.mxu0 %v599
        %3473 = vmatprep.subr.mxu0 %v604
        %3474 = vmatpush1.msra.mxu0 %v603
        %3475 = vmatprep.subr.mxu0 %v608
        %3476 = vmatpush1.msra.mxu0 %v607
        %3477 = vmatprep.subr.mxu0 %v612
        %3478 = vmatpush1.msra.mxu0 %v611
        %3479 = vmatprep.subr.mxu0 %v616
        %3480 = vmatpush1.msra.mxu0 %v615
        %3481 = vmatprep.subr.mxu0 %v620
        %3482 = vmatpush1.msra.mxu0 %v619
        %3483 = vmatprep.subr.mxu0 %v624
        %3484 = vmatpush1.msra.mxu0 %v623
        %3485 = vmatprep.subr.mxu0 %v628
        %3486 = vmatpush1.msra.mxu0 %v627
        %3487 = vmatprep.subr.mxu0 %v632
        %3488 = vmatpush1.msra.mxu0 %v631
        %3489 = vmatprep.subr.mxu0 %v636
        %3490 = vmatpush1.msra.mxu0 %v635
        %3491 = vmatprep.subr.mxu0 %v640
        %3492 = vmatpush1.msra.mxu0 %v639
        %3493 = vmatprep.subr.mxu0 %v644
        %3494 = vmatpush1.msra.mxu0 %v643
        %3495 = vmatprep.subr.mxu0 %v648
        %3496 = vmatpush1.msra.mxu0 %v647
        %3497 = vmatprep.subr.mxu0 %v652
        %3498 = vmatpush1.msra.mxu0 %v651
        %3499 = vmatprep.subr.mxu0 %v656
        %3500 = vmatpush1.msra.mxu0 %v655
        %3501 = vmatprep.subr.mxu0 %v660
        %3502 = vmatpush1.msra.mxu0 %v659
        %3503 = vmatprep.subr.mxu0 %v664
        %3504 = vmatpush1.msra.mxu0 %v663
        %3505 = vmatprep.mubr.f32.mxu0 %v3180
        %3506 = vmatmul.mubr.f32.gmra.mrb[0].mxu0 %v3369
        %v3507 = vpop.f32.mrb[0].mxu0
        %v3508 = vadd.f32 %v679, %v3507
        %v3509 = vpop.f32.mrb[0].mxu0
        %v3510 = vadd.f32 %v683, %v3509
        %3511 = vdwg.mxu0
        %v3512 = vmul.f32 %v3437, %v705
        %v3513 = vmul.f32 %v3439, %v706
        %v3514 = vmul.f32 %v3508, %v707
        %v3515 = vmul.f32 %v3510, %v708
        %v3516 = vtanh.pop %v3512
        %v3517 = vtanh.pop %v3513
        %v3518 = vtanh.pop %v3514
        %v3519 = vtanh.pop %v3515
        %v3520 = vmul.f32 %v3516, %v705
        %v3521 = vmul.f32 %v3517, %v706
        %v3522 = vmul.f32 %v3518, %v707
        %v3523 = vmul.f32 %v3519, %v708
        %v3524 = vadd.f32 %v3520, %v709
        %v3525 = vadd.f32 %v3521, %v710
        %v3526 = vadd.f32 %v3522, %v711
        %v3527 = vadd.f32 %v3523, %v712
        %v3528 = vmul.f32 %v3525, %v3181
        %v3529 = vmul.f32 %v3524, %v3526
        %v3530 = vadd.f32 %v3528, %v3529
        %v3531 = vtanh.pop %v3530
        %v3532 = vmul.f32 %v3527, %v3531
        %v3533 = vsel %vm3192, %v3532, %v3180
        %v3534 = vsel %vm3192, %v3530, %v3181
        %v3535 = vsel %vm3192, %v3532, 0.0
        %s3536 = scalar_lea.vmem %s457, 48 [#allocation19]
        %3537 = vst [vmem:[%s3536] sm:$0xff] %v3535
        %s3538 = sadd.s32 %s665, 7
        %v3539 = vstv %s3538
        %vm3540 = vcmp.lt.s32.totalorder %v3539, %v472
        %v3541 = vsel %vm3540, 1, 0
        %3542 = vset.pattern.permute.xlu0 0
        %3543 = vperm.xlu0 %3542, %v3541
        %v3544 = vpop.permute.xlu0 %3543
        %vm3545 = vcmp.eq.s32.totalorder %v3544, 1
        %s3546 = smul.u32 7, 4
        %s3547 = smul.addr %s3546, 8
        %s3548 = scalar_lea.vmem [#allocation2], %s3547
        %v3549 = vld [vmem:[%s3548] sm:$0xff]
        %v3550 = vld [vmem:[%s3548 + $0x8] sm:$0xff]
        %v3551 = vld [vmem:[%s3548 + $0x10] sm:$0xff]
        %v3552 = vld [vmem:[%s3548 + $0x18] sm:$0xff]
        %3553 = vmatprep.subr.mxu0 %v474
        %3554 = vmatpush1.msra.mxu0 %v473
        %3555 = vmatprep.subr.mxu0 %v478
        %3556 = vmatpush1.msra.mxu0 %v477
        %3557 = vmatprep.subr.mxu0 %v482
        %3558 = vmatpush1.msra.mxu0 %v481
        %3559 = vmatprep.subr.mxu0 %v486
        %3560 = vmatpush1.msra.mxu0 %v485
        %3561 = vmatprep.subr.mxu0 %v490
        %3562 = vmatpush1.msra.mxu0 %v489
        %3563 = vmatprep.subr.mxu0 %v494
        %3564 = vmatpush1.msra.mxu0 %v493
        %3565 = vmatprep.subr.mxu0 %v498
        %3566 = vmatpush1.msra.mxu0 %v497
        %3567 = vmatprep.subr.mxu0 %v502
        %3568 = vmatpush1.msra.mxu0 %v501
        %3569 = vmatprep.subr.mxu0 %v506
        %3570 = vmatpush1.msra.mxu0 %v505
        %3571 = vmatprep.subr.mxu0 %v510
        %3572 = vmatpush1.msra.mxu0 %v509
        %3573 = vmatprep.subr.mxu0 %v514
        %3574 = vmatpush1.msra.mxu0 %v513
        %3575 = vmatprep.subr.mxu0 %v518
        %3576 = vmatpush1.msra.mxu0 %v517
        %3577 = vmatprep.subr.mxu0 %v522
        %3578 = vmatpush1.msra.mxu0 %v521
        %3579 = vmatprep.subr.mxu0 %v526
        %3580 = vmatpush1.msra.mxu0 %v525
        %3581 = vmatprep.subr.mxu0 %v530
        %3582 = vmatpush1.msra.mxu0 %v529
        %3583 = vmatprep.subr.mxu0 %v534
        %3584 = vmatpush1.msra.mxu0 %v533
        %3585 = vmatprep.subr.mxu0 0.0
        %3586 = vmatpush1.msra.mxu0 0.0
        %3587 = vmatprep.subr.mxu0 0.0
        %3588 = vmatpush1.msra.mxu0 0.0
        %3589 = vmatprep.subr.mxu0 0.0
        %3590 = vmatpush1.msra.mxu0 0.0
        %3591 = vmatprep.subr.mxu0 0.0
        %3592 = vmatpush1.msra.mxu0 0.0
        %3593 = vmatprep.subr.mxu0 0.0
        %3594 = vmatpush1.msra.mxu0 0.0
        %3595 = vmatprep.subr.mxu0 0.0
        %3596 = vmatpush1.msra.mxu0 0.0
        %3597 = vmatprep.subr.mxu0 0.0
        %3598 = vmatpush1.msra.mxu0 0.0
        %3599 = vmatprep.subr.mxu0 0.0
        %3600 = vmatpush1.msra.mxu0 0.0
        %3601 = vmatprep.subr.mxu0 0.0
        %3602 = vmatpush1.msra.mxu0 0.0
        %3603 = vmatprep.subr.mxu0 0.0
        %3604 = vmatpush1.msra.mxu0 0.0
        %3605 = vmatprep.subr.mxu0 0.0
        %3606 = vmatpush1.msra.mxu0 0.0
        %3607 = vmatprep.subr.mxu0 0.0
        %3608 = vmatpush1.msra.mxu0 0.0
        %3609 = vmatprep.subr.mxu0 0.0
        %3610 = vmatpush1.msra.mxu0 0.0
        %3611 = vmatprep.subr.mxu0 0.0
        %3612 = vmatpush1.msra.mxu0 0.0
        %3613 = vmatprep.subr.mxu0 0.0
        %3614 = vmatpush1.msra.mxu0 0.0
        %3615 = vmatprep.subr.mxu0 0.0
        %3616 = vmatpush1.msra.mxu0 0.0
        %3617 = vmatprep.mubr.f32.mxu0 0.0
        %3618 = vmatmul.mubr.f32.gmra.mrb[0].mxu0 %v3367
        %v3619 = vpop.f32.mrb[0].mxu0
        %v3620 = vadd.f32 0.0, %v3619
        %v3621 = vpop.f32.mrb[0].mxu0
        %v3622 = vadd.f32 0.0, %v3621
        %3623 = vdwg.mxu0
        %3624 = vmatprep.subr.mxu0 %v476
        %3625 = vmatpush1.msra.mxu0 %v475
        %3626 = vmatprep.subr.mxu0 %v480
        %3627 = vmatpush1.msra.mxu0 %v479
        %3628 = vmatprep.subr.mxu0 %v484
        %3629 = vmatpush1.msra.mxu0 %v483
        %3630 = vmatprep.subr.mxu0 %v488
        %3631 = vmatpush1.msra.mxu0 %v487
        %3632 = vmatprep.subr.mxu0 %v492
        %3633 = vmatpush1.msra.mxu0 %v491
        %3634 = vmatprep.subr.mxu0 %v496
        %3635 = vmatpush1.msra.mxu0 %v495
        %3636 = vmatprep.subr.mxu0 %v500
        %3637 = vmatpush1.msra.mxu0 %v499
        %3638 = vmatprep.subr.mxu0 %v504
        %3639 = vmatpush1.msra.mxu0 %v503
        %3640 = vmatprep.subr.mxu0 %v508
        %3641 = vmatpush1.msra.mxu0 %v507
        %3642 = vmatprep.subr.mxu0 %v512
        %3643 = vmatpush1.msra.mxu0 %v511
        %3644 = vmatprep.subr.mxu0 %v516
        %3645 = vmatpush1.msra.mxu0 %v515
        %3646 = vmatprep.subr.mxu0 %v520
        %3647 = vmatpush1.msra.mxu0 %v519
        %3648 = vmatprep.subr.mxu0 %v524
        %3649 = vmatpush1.msra.mxu0 %v523
        %3650 = vmatprep.subr.mxu0 %v528
        %3651 = vmatpush1.msra.mxu0 %v527
        %3652 = vmatprep.subr.mxu0 %v532
        %3653 = vmatpush1.msra.mxu0 %v531
        %3654 = vmatprep.subr.mxu0 %v536
        %3655 = vmatpush1.msra.mxu0 %v535
        %3656 = vmatprep.subr.mxu0 0.0
        %3657 = vmatpush1.msra.mxu0 0.0
        %3658 = vmatprep.subr.mxu0 0.0
        %3659 = vmatpush1.msra.mxu0 0.0
        %3660 = vmatprep.subr.mxu0 0.0
        %3661 = vmatpush1.msra.mxu0 0.0
        %3662 = vmatprep.subr.mxu0 0.0
        %3663 = vmatpush1.msra.mxu0 0.0
        %3664 = vmatprep.subr.mxu0 0.0
        %3665 = vmatpush1.msra.mxu0 0.0
        %3666 = vmatprep.subr.mxu0 0.0
        %3667 = vmatpush1.msra.mxu0 0.0
        %3668 = vmatprep.subr.mxu0 0.0
        %3669 = vmatpush1.msra.mxu0 0.0
        %3670 = vmatprep.subr.mxu0 0.0
        %3671 = vmatpush1.msra.mxu0 0.0
        %3672 = vmatprep.subr.mxu0 0.0
        %3673 = vmatpush1.msra.mxu0 0.0
        %3674 = vmatprep.subr.mxu0 0.0
        %3675 = vmatpush1.msra.mxu0 0.0
        %3676 = vmatprep.subr.mxu0 0.0
        %3677 = vmatpush1.msra.mxu0 0.0
        %3678 = vmatprep.subr.mxu0 0.0
        %3679 = vmatpush1.msra.mxu0 0.0
        %3680 = vmatprep.subr.mxu0 0.0
        %3681 = vmatpush1.msra.mxu0 0.0
        %3682 = vmatprep.subr.mxu0 0.0
        %3683 = vmatpush1.msra.mxu0 0.0
        %3684 = vmatprep.subr.mxu0 0.0
        %3685 = vmatpush1.msra.mxu0 0.0
        %3686 = vmatprep.subr.mxu0 0.0
        %3687 = vmatpush1.msra.mxu0 0.0
        %3688 = vmatprep.mubr.f32.mxu0 0.0
        %3689 = vmatmul.mubr.f32.gmra.mrb[0].mxu0 %v3367
        %v3690 = vpop.f32.mrb[0].mxu0
        %v3691 = vadd.f32 0.0, %v3690
        %v3692 = vpop.f32.mrb[0].mxu0
        %v3693 = vadd.f32 0.0, %v3692
        %3694 = vdwg.mxu0
        %v3695 = vadd.f32 %v3549, %v3620
        %v3696 = vadd.f32 %v3550, %v3622
        %v3697 = vadd.f32 %v3551, %v3691
        %v3698 = vadd.f32 %v3552, %v3693
        %v3699 = vmul.f32 %v3695, %v705
        %v3700 = vmul.f32 %v3696, %v706
        %v3701 = vmul.f32 %v3697, %v707
        %v3702 = vmul.f32 %v3698, %v708
        %v3703 = vtanh.pop %v3699
        %v3704 = vtanh.pop %v3700
        %v3705 = vtanh.pop %v3701
        %v3706 = vtanh.pop %v3702
        %v3707 = vmul.f32 %v3703, %v705
        %v3708 = vmul.f32 %v3704, %v706
        %v3709 = vmul.f32 %v3705, %v707
        %v3710 = vmul.f32 %v3706, %v708
        %v3711 = vadd.f32 %v3707, %v709
        %v3712 = vadd.f32 %v3708, %v710
        %v3713 = vadd.f32 %v3709, %v711
        %v3714 = vadd.f32 %v3710, %v712
        %v3715 = vmul.f32 %v3712, %v3368
        %v3716 = vmul.f32 %v3711, %v3713
        %v3717 = vadd.f32 %v3715, %v3716
        %v3718 = vtanh.pop %v3717
        %v3719 = vmul.f32 %v3714, %v3718
        %v3720 = vsel %vm3545, %v3719, %v3367
        %v3721 = vsel %vm3545, %v3717, %v3368
        %v3722 = vsel %vm3545, %v3719, 0.0
        %3723 = vmatprep.subr.mxu0 %v538
        %3724 = vmatpush1.msra.mxu0 %v537
        %3725 = vmatprep.subr.mxu0 %v542
        %3726 = vmatpush1.msra.mxu0 %v541
        %3727 = vmatprep.subr.mxu0 %v546
        %3728 = vmatpush1.msra.mxu0 %v545
        %3729 = vmatprep.subr.mxu0 %v550
        %3730 = vmatpush1.msra.mxu0 %v549
        %3731 = vmatprep.subr.mxu0 %v554
        %3732 = vmatpush1.msra.mxu0 %v553
        %3733 = vmatprep.subr.mxu0 %v558
        %3734 = vmatpush1.msra.mxu0 %v557
        %3735 = vmatprep.subr.mxu0 %v562
        %3736 = vmatpush1.msra.mxu0 %v561
        %3737 = vmatprep.subr.mxu0 %v566
        %3738 = vmatpush1.msra.mxu0 %v565
        %3739 = vmatprep.subr.mxu0 %v570
        %3740 = vmatpush1.msra.mxu0 %v569
        %3741 = vmatprep.subr.mxu0 %v574
        %3742 = vmatpush1.msra.mxu0 %v573
        %3743 = vmatprep.subr.mxu0 %v578
        %3744 = vmatpush1.msra.mxu0 %v577
        %3745 = vmatprep.subr.mxu0 %v582
        %3746 = vmatpush1.msra.mxu0 %v581
        %3747 = vmatprep.subr.mxu0 %v586
        %3748 = vmatpush1.msra.mxu0 %v585
        %3749 = vmatprep.subr.mxu0 %v590
        %3750 = vmatpush1.msra.mxu0 %v589
        %3751 = vmatprep.subr.mxu0 %v594
        %3752 = vmatpush1.msra.mxu0 %v593
        %3753 = vmatprep.subr.mxu0 %v598
        %3754 = vmatpush1.msra.mxu0 %v597
        %3755 = vmatprep.subr.mxu0 %v602
        %3756 = vmatpush1.msra.mxu0 %v601
        %3757 = vmatprep.subr.mxu0 %v606
        %3758 = vmatpush1.msra.mxu0 %v605
        %3759 = vmatprep.subr.mxu0 %v610
        %3760 = vmatpush1.msra.mxu0 %v609
        %3761 = vmatprep.subr.mxu0 %v614
        %3762 = vmatpush1.msra.mxu0 %v613
        %3763 = vmatprep.subr.mxu0 %v618
        %3764 = vmatpush1.msra.mxu0 %v617
        %3765 = vmatprep.subr.mxu0 %v622
        %3766 = vmatpush1.msra.mxu0 %v621
        %3767 = vmatprep.subr.mxu0 %v626
        %3768 = vmatpush1.msra.mxu0 %v625
        %3769 = vmatprep.subr.mxu0 %v630
        %3770 = vmatpush1.msra.mxu0 %v629
        %3771 = vmatprep.subr.mxu0 %v634
        %3772 = vmatpush1.msra.mxu0 %v633
        %3773 = vmatprep.subr.mxu0 %v638
        %3774 = vmatpush1.msra.mxu0 %v637
        %3775 = vmatprep.subr.mxu0 %v642
        %3776 = vmatpush1.msra.mxu0 %v641
        %3777 = vmatprep.subr.mxu0 %v646
        %3778 = vmatpush1.msra.mxu0 %v645
        %3779 = vmatprep.subr.mxu0 %v650
        %3780 = vmatpush1.msra.mxu0 %v649
        %3781 = vmatprep.subr.mxu0 %v654
        %3782 = vmatpush1.msra.mxu0 %v653
        %3783 = vmatprep.subr.mxu0 %v658
        %3784 = vmatpush1.msra.mxu0 %v657
        %3785 = vmatprep.subr.mxu0 %v662
        %3786 = vmatpush1.msra.mxu0 %v661
        %3787 = vmatprep.mubr.f32.mxu0 %v3533
        %3788 = vmatmul.mubr.f32.gmra.mrb[0].mxu0 %v3722
        %v3789 = vpop.f32.mrb[0].mxu0
        %v3790 = vadd.f32 %v671, %v3789
        %v3791 = vpop.f32.mrb[0].mxu0
        %v3792 = vadd.f32 %v675, %v3791
        %3793 = vdwg.mxu0
        %3794 = vmatprep.subr.mxu0 %v540
        %3795 = vmatpush1.msra.mxu0 %v539
        %3796 = vmatprep.subr.mxu0 %v544
        %3797 = vmatpush1.msra.mxu0 %v543
        %3798 = vmatprep.subr.mxu0 %v548
        %3799 = vmatpush1.msra.mxu0 %v547
        %3800 = vmatprep.subr.mxu0 %v552
        %3801 = vmatpush1.msra.mxu0 %v551
        %3802 = vmatprep.subr.mxu0 %v556
        %3803 = vmatpush1.msra.mxu0 %v555
        %3804 = vmatprep.subr.mxu0 %v560
        %3805 = vmatpush1.msra.mxu0 %v559
        %3806 = vmatprep.subr.mxu0 %v564
        %3807 = vmatpush1.msra.mxu0 %v563
        %3808 = vmatprep.subr.mxu0 %v568
        %3809 = vmatpush1.msra.mxu0 %v567
        %3810 = vmatprep.subr.mxu0 %v572
        %3811 = vmatpush1.msra.mxu0 %v571
        %3812 = vmatprep.subr.mxu0 %v576
        %3813 = vmatpush1.msra.mxu0 %v575
        %3814 = vmatprep.subr.mxu0 %v580
        %3815 = vmatpush1.msra.mxu0 %v579
        %3816 = vmatprep.subr.mxu0 %v584
        %3817 = vmatpush1.msra.mxu0 %v583
        %3818 = vmatprep.subr.mxu0 %v588
        %3819 = vmatpush1.msra.mxu0 %v587
        %3820 = vmatprep.subr.mxu0 %v592
        %3821 = vmatpush1.msra.mxu0 %v591
        %3822 = vmatprep.subr.mxu0 %v596
        %3823 = vmatpush1.msra.mxu0 %v595
        %3824 = vmatprep.subr.mxu0 %v600
        %3825 = vmatpush1.msra.mxu0 %v599
        %3826 = vmatprep.subr.mxu0 %v604
        %3827 = vmatpush1.msra.mxu0 %v603
        %3828 = vmatprep.subr.mxu0 %v608
        %3829 = vmatpush1.msra.mxu0 %v607
        %3830 = vmatprep.subr.mxu0 %v612
        %3831 = vmatpush1.msra.mxu0 %v611
        %3832 = vmatprep.subr.mxu0 %v616
        %3833 = vmatpush1.msra.mxu0 %v615
        %3834 = vmatprep.subr.mxu0 %v620
        %3835 = vmatpush1.msra.mxu0 %v619
        %3836 = vmatprep.subr.mxu0 %v624
        %3837 = vmatpush1.msra.mxu0 %v623
        %3838 = vmatprep.subr.mxu0 %v628
        %3839 = vmatpush1.msra.mxu0 %v627
        %3840 = vmatprep.subr.mxu0 %v632
        %3841 = vmatpush1.msra.mxu0 %v631
        %3842 = vmatprep.subr.mxu0 %v636
        %3843 = vmatpush1.msra.mxu0 %v635
        %3844 = vmatprep.subr.mxu0 %v640
        %3845 = vmatpush1.msra.mxu0 %v639
        %3846 = vmatprep.subr.mxu0 %v644
        %3847 = vmatpush1.msra.mxu0 %v643
        %3848 = vmatprep.subr.mxu0 %v648
        %3849 = vmatpush1.msra.mxu0 %v647
        %3850 = vmatprep.subr.mxu0 %v652
        %3851 = vmatpush1.msra.mxu0 %v651
        %3852 = vmatprep.subr.mxu0 %v656
        %3853 = vmatpush1.msra.mxu0 %v655
        %3854 = vmatprep.subr.mxu0 %v660
        %3855 = vmatpush1.msra.mxu0 %v659
        %3856 = vmatprep.subr.mxu0 %v664
        %3857 = vmatpush1.msra.mxu0 %v663
        %3858 = vmatprep.mubr.f32.mxu0 %v3533
        %3859 = vmatmul.mubr.f32.gmra.mrb[0].mxu0 %v3722
        %v3860 = vpop.f32.mrb[0].mxu0
        %v3861 = vadd.f32 %v679, %v3860
        %v3862 = vpop.f32.mrb[0].mxu0
        %v3863 = vadd.f32 %v683, %v3862
        %3864 = vdwg.mxu0
        %v3865 = vmul.f32 %v3790, %v705
        %v3866 = vmul.f32 %v3792, %v706
        %v3867 = vmul.f32 %v3861, %v707
        %v3868 = vmul.f32 %v3863, %v708
        %v3869 = vtanh.pop %v3865
        %v3870 = vtanh.pop %v3866
        %v3871 = vtanh.pop %v3867
        %v3872 = vtanh.pop %v3868
        %v3873 = vmul.f32 %v3869, %v705
        %v3874 = vmul.f32 %v3870, %v706
        %v3875 = vmul.f32 %v3871, %v707
        %v3876 = vmul.f32 %v3872, %v708
        %v3877 = vadd.f32 %v3873, %v709
        %v3878 = vadd.f32 %v3874, %v710
        %v3879 = vadd.f32 %v3875, %v711
        %v3880 = vadd.f32 %v3876, %v712
        %v3881 = vmul.f32 %v3878, %v3534
        %v3882 = vmul.f32 %v3877, %v3879
        %v3883 = vadd.f32 %v3881, %v3882
        %v3884 = vtanh.pop %v3883
        %v3885 = vmul.f32 %v3880, %v3884
        %v3886 = vsel %vm3545, %v3885, %v3533
        %v3887 = vsel %vm3545, %v3883, %v3534
        %v3888 = vsel %vm3545, %v3885, 0.0
        %s3889 = scalar_lea.vmem %s457, 56 [#allocation19]
        %3890 = vst [vmem:[%s3889] sm:$0xff] %v3888
        %3891 = vst [vmem:[#allocation3] sm:$0xff] %v3720
        %3892 = vst [vmem:[#allocation4] sm:$0xff] %v3721
        %3893 = vst [vmem:[#allocation5] sm:$0xff] %v3886
        %3894 = vst [vmem:[#allocation6] sm:$0xff] %v3887
        %p3895 = scmp.eq.s32.totalorder %s36, 1
        // Predicated region
        $region81: #{tpu_custom_call.1} parent=47 // pred_check
          %p3896 = pneg %p3895
        $region82: #{tpu_custom_call.1} parent=47 // pred_check_branch
          %3898 = sbr.rel (%p3896) target = $region84
        $region83: #{tpu_custom_call.1} parent=47 // pred_region
          %3899 = vst [vmem:[#allocation20] sm:$0xff] %v3720
          %s3900 = scalar_lea.vmem [#allocation20], 8
          %3901 = vst [vmem:[%s3900] sm:$0xff] %v3886
          %3902 = vst [vmem:[#allocation22] sm:$0xff] %v3721
          %s3903 = scalar_lea.vmem [#allocation22], 8
          %3904 = vst [vmem:[%s3903] sm:$0xff] %v3887
        $region84: #{tpu_custom_call.1} parent=47 // pred_fallthru
          _
        %s3905 = sand.u32 %s212, 1
        %s3906 = scalar_lea.sflag [#allocation9], %s3905
        %s3907 = sand.u32 %s212, 1
        %s3908 = smul.addr %s3907, 64
        %s3909 = scalar_lea.vmem [#allocation19], %s3908
        // Predicated region
        $region85: #{tpu_custom_call.1} parent=47 // pred_check
          %p3910 = pneg %p222
        $region86: #{tpu_custom_call.1} parent=47 // pred_check_branch
          %3912 = sbr.rel (%p3910) target = $region88
        $region87: #{tpu_custom_call.1} parent=47 // pred_region
          %s3913 = smul.u32 8, %s36
          %s3915 = ssub.s32 1024, 1024
          %3916 = vsyncadd %s3906, %s3915
          %s3917 = sadd.s32 %s35, %s3913
          %s3918 = smul.addr %s3917, 128
          %s3919 = scalar_lea.hbm %s7, %s3918
          %s3920 = sshll.u32 %s3909, 4
          %s3921 = int_to_ptr.vmem [resolvable:$true] %s3920
          %3926 = dma.vmem_to_hbm [thread:$0]  %s3921, 1024, %s3919, %s3906, 128, 128, 8
        $region88: #{tpu_custom_call.1} parent=47 // pred_fallthru
          _
        // Predicated region
        $region89: #{tpu_custom_call.1} parent=47 // pred_check
          %p3927 = pneg %p248
        $region90: #{tpu_custom_call.1} parent=47 // pred_check_branch
          %3929 = sbr.rel (%p3927) target = $region92
        $region91: #{tpu_custom_call.1} parent=47 // pred_region
          %s3931 = ssub.s32 256, 256
          %3932 = vsyncadd [#allocation21], %s3931
          %s3933 = smul.addr %s35, 128
          %s3934 = scalar_lea.hbm %s8, %s3933
          %s3935 = sshll.u32 [#allocation20], 4
          %s3936 = int_to_ptr.vmem [resolvable:$true] %s3935
          %3941 = dma.vmem_to_hbm [thread:$0]  %s3936, 256, %s3934, [#allocation21], 128, 128, 8
        $region92: #{tpu_custom_call.1} parent=47 // pred_fallthru
          _
        // Predicated region
        $region93: #{tpu_custom_call.1} parent=47 // pred_check
          %p3942 = pneg %p274
        $region94: #{tpu_custom_call.1} parent=47 // pred_check_branch
          %3944 = sbr.rel (%p3942) target = $region96
        $region95: #{tpu_custom_call.1} parent=47 // pred_region
          %s3946 = ssub.s32 256, 256
          %3947 = vsyncadd [#allocation21], %s3946
          %s3948 = smul.addr %s35, 128
          %s3949 = scalar_lea.hbm %s9, %s3948
          %s3950 = sshll.u32 [#allocation22], 4
          %s3951 = int_to_ptr.vmem [resolvable:$true] %s3950
          %3956 = dma.vmem_to_hbm [thread:$0]  %s3951, 256, %s3949, [#allocation21], 128, 128, 8
        $region96: #{tpu_custom_call.1} parent=47 // pred_fallthru
          _
        // Predicated region
        $region97: #{tpu_custom_call.1} parent=47 // pred_check
          %p3957 = pneg %p248
        $region98: #{tpu_custom_call.1} parent=47 // pred_check_branch
          %3959 = sbr.rel (%p3957) target = $region100
        $region99: #{tpu_custom_call.1} parent=47 // pred_region
          %3960 = dma.done [#allocation21], 256
        $region100: #{tpu_custom_call.1} parent=47 // pred_fallthru
          _
        // Predicated region
        $region101: #{tpu_custom_call.1} parent=47 // pred_check
          %p3961 = pneg %p274
        $region102: #{tpu_custom_call.1} parent=47 // pred_check_branch
          %3963 = sbr.rel (%p3961) target = $region104
        $region103: #{tpu_custom_call.1} parent=47 // pred_region
          %3964 = dma.done [#allocation21], 256
        $region104: #{tpu_custom_call.1} parent=47 // pred_fallthru
          _
      $region48: #{tpu_custom_call.1} parent=5 // pred_fallthru
        _
      %p3965 = scmp.le.s32.totalorder 2, %s26
      // Predicated region
      $region105: #{tpu_custom_call.1} parent=5 // pred_check
        %p3966 = pneg %p3965
      $region106: #{tpu_custom_call.1} parent=5 // pred_check_branch
        %3968 = sbr.rel (%p3966) target = $region108
      $region107: #{tpu_custom_call.1} parent=5 // pred_region
        %s3969 = ssub.s32 %s26, 2
        // Predicated region
        $region109: #{tpu_custom_call.1} parent=107 // pred_check
          %p3970 = pneg %p228
        $region110: #{tpu_custom_call.1} parent=107 // pred_check_branch
          %3972 = sbr.rel (%p3970) target = $region112
        $region111: #{tpu_custom_call.1} parent=107 // pred_region
          %s3973 = sand.u32 %s213, 1
          %s3974 = scalar_lea.sflag [#allocation9], %s3973
          %s3975 = sand.u32 %s213, 1
          %s3976 = smul.addr %s3975, 64
          %s3977 = scalar_lea.vmem [#allocation19], %s3976
          %3978 = dma.done %s3974, 1024
        $region112: #{tpu_custom_call.1} parent=107 // pred_fallthru
          _
      $region108: #{tpu_custom_call.1} parent=5 // pred_fallthru
        _
    $region6: #{tpu_custom_call.1} parent=1 // loop_footer
      %s30 = sadd.s32 1, %s26
    $region7: #{tpu_custom_call.1} parent=1 // loop_footer_branch
      %25 = sbr.rel target = $region3
    $region8: #{tpu_custom_call.1} parent=1 // loop_exit
      _
    %3979 = vsyncpa [#allocation8], 1
    %s3980 = scalar_lea.sflag [#allocation8], 1
    %3981 = vsyncpa %s3980, 1
    %3982 = vsyncpa [#allocation11], 1
    %s3983 = scalar_lea.sflag [#allocation11], 1
    %3984 = vsyncpa %s3983, 1
    %3985 = vsyncpa [#allocation14], 1
    %3986 = vsyncpa [#allocation17], 1
    %3987 = vsyncpa [#allocation9], 1
    %s3988 = scalar_lea.sflag [#allocation9], 1
    %3989 = vsyncpa %s3988, 1
    %3990 = vsyncpa [#allocation21], 1

</llo_original>
